<compile_context>
chip_gen: v6e
topology: v6e:2x2x1
jax: 0.10.0
libtpu: 0.0.40
codegen_flags: <defaults>
</compile_context>

<pallas_src>
import math
import numpy as np
import jax
import jax.numpy as jnp
from jax import lax
from jax.experimental import pallas as pl
from jax.experimental.pallas import tpu as pltpu

# ---------------------- module hyper-parameters ------------------------------
DIM = 32                       # dim
NUM_HEADS = 2                  # num_heads
HEAD_DIM = DIM // NUM_HEADS    # 16
SR_RATIO = 4                   # sr_ratio > 1 branch
H = W = 16
N_TOK = H * W                  # 256
N_KV = (H // SR_RATIO) * (W // SR_RATIO)   # 16
B = 2
SR_LN_EPS = 1e-6               # nn.LayerNorm(dim, eps=1e-6)
UP_LN_EPS = 1e-5               # nn.LayerNorm(dim) default eps
SCALE = HEAD_DIM ** (-0.5)


# ----------------------------- Pallas kernels --------------------------------
def _attn_core_kernel(x_ref, xs_ref, srnw_ref, srnb_ref,
                      wq_ref, bq_ref, wk_ref, bk_ref, wv_ref, bv_ref,
                      xo_ref, v_ref):
    """sr_norm + q/kv Linear + multi-head softmax attention for one batch."""
    x = x_ref[0].astype(jnp.float32)            # (N, C)
    xs = xs_ref[0].astype(jnp.float32)          # (Nkv, C)  raw sr-conv output
    C = x.shape[-1]
    hd = C // NUM_HEADS

    # sr_norm: one-pass LayerNorm stats (var = E[x^2] - mu^2), eps = 1e-6
    mu = jnp.mean(xs, axis=-1, keepdims=True)
    var = jnp.mean(xs * xs, axis=-1, keepdims=True) - mu * mu
    xsn = (xs - mu) * lax.rsqrt(var + SR_LN_EPS)
    xsn = xsn * srnw_ref[...] + srnb_ref[...]

    # q / k / v projections.  The kv Linear is split into two matmuls so no
    # lane-axis split/concat of the (Nkv, 2C) result is needed in-kernel.
    q = jnp.dot(x, wq_ref[...], preferred_element_type=jnp.float32) + bq_ref[...]
    k = jnp.dot(xsn, wk_ref[...], preferred_element_type=jnp.float32) + bk_ref[...]
    v = jnp.dot(xsn, wv_ref[...], preferred_element_type=jnp.float32) + bv_ref[...]
    v_ref[0] = v.astype(v_ref.dtype)            # feeds the `up` branch

    scale = jnp.float32(SCALE)
    for h in range(NUM_HEADS):                  # static tiny head loop
        sl = slice(h * hd, (h + 1) * hd)
        qh, kh, vh = q[:, sl], k[:, sl], v[:, sl]
        # contract last dims directly (no materialized k transpose)
        s = lax.dot_general(qh, kh, (((1,), (1,)), ((), ())),
                            preferred_element_type=jnp.float32) * scale   # (N, Nkv)
        s = s - jnp.max(s, axis=-1, keepdims=True)
        e = jnp.exp(s)
        p = e / jnp.sum(e, axis=-1, keepdims=True)
        oh = jnp.dot(p, vh, preferred_element_type=jnp.float32)           # (N, hd)
        xo_ref[:, sl] = oh.astype(xo_ref.dtype)  # direct per-head store, no concat


def _up_norm_proj_kernel(xo_ref, up_ref, upnw_ref, upnb_ref, wp_ref, bp_ref,
                         out_ref):
    """up_norm + residual add + proj Linear; purely token-wise, batch folded."""
    xo = xo_ref[...].astype(jnp.float32)        # (B*N, C)
    u = up_ref[...].astype(jnp.float32)         # (B*N, C)
    mu = jnp.mean(u, axis=-1, keepdims=True)
    var = jnp.mean(u * u, axis=-1, keepdims=True) - mu * mu
    un = (u - mu) * lax.rsqrt(var + UP_LN_EPS)
    un = un * upnw_ref[...] + upnb_ref[...]
    y = xo + un
    out = jnp.dot(y, wp_ref[...], preferred_element_type=jnp.float32) + bp_ref[...]
    out_ref[...] = out.astype(out_ref.dtype)


# ------------------------------ kernel wrappers -------------------------------
def attn_core(x, xs, params):
    Bsz, N, C = x.shape
    Nkv = xs.shape[1]
    return pl.pallas_call(
        _attn_core_kernel,
        out_shape=(jax.ShapeDtypeStruct((Bsz * N, C), x.dtype),   # attention out (folded)
                   jax.ShapeDtypeStruct((Bsz, Nkv, C), x.dtype)), # v (for up branch)
        grid=(Bsz,),
        in_specs=[
            pl.BlockSpec((1, N, C), lambda b: (b, 0, 0)),     # x
            pl.BlockSpec((1, Nkv, C), lambda b: (b, 0, 0)),   # sr-conv output (raw)
            pl.BlockSpec((1, C), lambda b: (0, 0)),           # sr_norm weight
            pl.BlockSpec((1, C), lambda b: (0, 0)),           # sr_norm bias
            pl.BlockSpec((C, C), lambda b: (0, 0)),           # Wq
            pl.BlockSpec((1, C), lambda b: (0, 0)),           # bq
            pl.BlockSpec((C, C), lambda b: (0, 0)),           # Wk
            pl.BlockSpec((1, C), lambda b: (0, 0)),           # bk
            pl.BlockSpec((C, C), lambda b: (0, 0)),           # Wv
            pl.BlockSpec((1, C), lambda b: (0, 0)),           # bv
        ],
        out_specs=(pl.BlockSpec((N, C), lambda b: (b, 0)),
                   pl.BlockSpec((1, Nkv, C), lambda b: (b, 0, 0))),
        compiler_params=pltpu.CompilerParams(dimension_semantics=("parallel",)),
    )(x, xs,
      params['srn_w'], params['srn_b'],
      params['wq'], params['bq'],
      params['wk'], params['bk'],
      params['wv'], params['bv'])


def up_norm_proj(xo2, up2, params):
    BN, C = xo2.shape
    return pl.pallas_call(
        _up_norm_proj_kernel,
        out_shape=jax.ShapeDtypeStruct((BN, C), xo2.dtype),
        grid=(1,),
        in_specs=[
            pl.BlockSpec((BN, C), lambda i: (0, 0)),
            pl.BlockSpec((BN, C), lambda i: (0, 0)),
            pl.BlockSpec((1, C), lambda i: (0, 0)),
            pl.BlockSpec((1, C), lambda i: (0, 0)),
            pl.BlockSpec((C, C), lambda i: (0, 0)),
            pl.BlockSpec((1, C), lambda i: (0, 0)),
        ],
        out_specs=pl.BlockSpec((BN, C), lambda i: (0, 0)),
        compiler_params=pltpu.CompilerParams(dimension_semantics=("arbitrary",)),
    )(xo2, up2, params['upn_w'], params['upn_b'], params['wproj'], params['bproj'])


# ------------------------------- XLA conv glue ---------------------------------
def _depthwise_conv_nhwc(x_nhwc, w_hwio, b, stride, pad):
    C_in = x_nhwc.shape[-1]
    y = lax.conv_general_dilated(
        x_nhwc, w_hwio, (stride, stride), ((pad, pad), (pad, pad)),
        dimension_numbers=('NHWC', 'HWIO', 'NHWC'),
        feature_group_count=C_in)
    return y + b


def attention_forward(params, x, Hh, Ww):
    Bsz, N, C = x.shape
    r = SR_RATIO
    # spatial-reduction conv in NHWC ((B,N,C)->(B,H,W,C) is a free reshape)
    x_img = x.reshape(Bsz, Hh, Ww, C)
    xs = _depthwise_conv_nhwc(x_img, params['sr_w_hwio'], params['sr_b'],
                              stride=r, pad=r // 2)                  # (B,Hp,Wp,C)
    Hp, Wp = xs.shape[1], xs.shape[2]
    xs = xs.reshape(Bsz, Hp * Wp, C)

    # fused kernel A: sr_norm + q/k/v + softmax attention (emits v as well)
    xo2, v = attn_core(x, xs, params)                                # (B*N,C), (B,Nkv,C)

    # up branch: depthwise 3x3 conv (channel multiplier r^2) + PixelShuffle(r)
    v_img = v.reshape(Bsz, Hp, Wp, C)
    up = _depthwise_conv_nhwc(v_img, params['up_w_hwio'], params['up_b'],
                              stride=1, pad=1)                       # (B,Hp,Wp,C*r*r)
    up = (up.reshape(Bsz, Hp, Wp, C, r, r)
            .transpose(0, 1, 4, 2, 5, 3)                             # (B,Hp,r,Wp,r,C)
            .reshape(Bsz * Hh * Ww, C))                              # pixel-shuffled, folded

    # fused kernel B: up_norm + residual + proj
    out = up_norm_proj(xo2, up, params)
    return out.reshape(Bsz, N, C)


# ----------------------------- pure-JAX reference ------------------------------
def _layernorm(x, w, b, eps):
    mu = jnp.mean(x, axis=-1, keepdims=True)
    var = jnp.mean((x - mu) ** 2, axis=-1, keepdims=True)
    return (x - mu) / jnp.sqrt(var + eps) * w + b


def _ref_depthwise_conv_nchw(x_nchw, w_oihw, b, stride, pad):
    C_in = x_nchw.shape[1]
    y = lax.conv_general_dilated(
        x_nchw, w_oihw, (stride, stride), ((pad, pad), (pad, pad)),
        dimension_numbers=('NCHW', 'OIHW', 'NCHW'),
        feature_group_count=C_in)
    return y + b.reshape(1, -1, 1, 1)


def reference_forward(params, x, Hh, Ww):
    """Literal JAX transcription of the PyTorch Attention.forward (sr_ratio>1)."""
    Bsz, N, C = x.shape
    heads, hd, r = NUM_HEADS, HEAD_DIM, SR_RATIO

    q = x @ params['wq'] + params['bq']
    q = q.reshape(Bsz, N, heads, hd).transpose(0, 2, 1, 3)           # (B,h,N,hd)

    x_ = x.transpose(0, 2, 1).reshape(Bsz, C, Hh, Ww)                # NCHW
    xs = _ref_depthwise_conv_nchw(x_, params['sr_w_oihw'], params['sr_b'], r, r // 2)
    xs = xs.reshape(Bsz, C, -1).transpose(0, 2, 1)                   # (B,Nkv,C)
    xs = _layernorm(xs, params['srn_w'], params['srn_b'], SR_LN_EPS)

    k = xs @ params['wk'] + params['bk']
    v = xs @ params['wv'] + params['bv']
    Nkv = k.shape[1]
    k = k.reshape(Bsz, Nkv, heads, hd).transpose(0, 2, 1, 3)
    v = v.reshape(Bsz, Nkv, heads, hd).transpose(0, 2, 1, 3)

    attn = jnp.einsum('bhnd,bhmd->bhnm', q, k) * SCALE
    attn = jax.nn.softmax(attn, axis=-1)
    xo = jnp.einsum('bhnm,bhmd->bhnd', attn, v).transpose(0, 2, 1, 3).reshape(Bsz, N, C)

    Hp, Wp = Hh // r, Ww // r
    identity = v.transpose(0, 1, 3, 2).reshape(Bsz, C, Hp, Wp)       # (B,C,Hp,Wp)
    up = _ref_depthwise_conv_nchw(identity, params['up_w_oihw'], params['up_b'], 1, 1)
    # PixelShuffle(r): (B, C*r*r, Hp, Wp) -> (B, C, Hp*r, Wp*r)
    up = (up.reshape(Bsz, C, r, r, Hp, Wp)
            .transpose(0, 1, 4, 2, 5, 3)
            .reshape(Bsz, C, Hh, Ww))
    identity = up.reshape(Bsz, C, N).transpose(0, 2, 1)              # (B,N,C)
    identity = _layernorm(identity, params['upn_w'], params['upn_b'], UP_LN_EPS)

    return (xo + identity) @ params['wproj'] + params['bproj']


# ------------------------------------ params -----------------------------------
def make_params(key):
    C, r = DIM, SR_RATIO
    ks = jax.random.split(key, 16)
    s_lin = 1.0 / math.sqrt(C)
    sr_w_oihw = (1.0 / (r + 1)) * jax.random.normal(ks[0], (C, 1, r + 1, r + 1), jnp.float32)
    up_w_oihw = (1.0 / 3.0) * jax.random.normal(ks[1], (C * r * r, 1, 3, 3), jnp.float32)
    return {
        # dense weights (JAX convention: y = x @ W + b); kv Linear stored split (k/v)
        'wq': s_lin * jax.random.normal(ks[2], (C, C), jnp.float32),
        'bq': 0.02 * jax.random.normal(ks[3], (1, C), jnp.float32),
        'wk': s_lin * jax.random.normal(ks[4], (C, C), jnp.float32),
        'bk': 0.02 * jax.random.normal(ks[5], (1, C), jnp.float32),
        'wv': s_lin * jax.random.normal(ks[6], (C, C), jnp.float32),
        'bv': 0.02 * jax.random.normal(ks[7], (1, C), jnp.float32),
        'wproj': s_lin * jax.random.normal(ks[8], (C, C), jnp.float32),
        'bproj': 0.02 * jax.random.normal(ks[9], (1, C), jnp.float32),
        # depthwise convs: OIHW for the reference, pre-transposed HWIO for NHWC path
        'sr_w_oihw': sr_w_oihw,
        'sr_w_hwio': sr_w_oihw.transpose(2, 3, 1, 0),
        'sr_b': 0.02 * jax.random.normal(ks[10], (C,), jnp.float32),
        'up_w_oihw': up_w_oihw,
        'up_w_hwio': up_w_oihw.transpose(2, 3, 1, 0),
        'up_b': 0.02 * jax.random.normal(ks[11], (C * r * r,), jnp.float32),
        # LayerNorms
        'srn_w': 1.0 + 0.02 * jax.random.normal(ks[12], (1, C), jnp.float32),
        'srn_b': 0.02 * jax.random.normal(ks[13], (1, C), jnp.float32),
        'upn_w': 1.0 + 0.02 * jax.random.normal(ks[14], (1, C), jnp.float32),
        'upn_b': 0.02 * jax.random.normal(ks[15], (1, C), jnp.float32),
    }


# ------------------------------------- main -------------------------------------
if __name__ == "__main__":
    key = jax.random.PRNGKey(0)
    kx, kp = jax.random.split(key)
    x = jax.random.normal(kx, (B, N_TOK, DIM), jnp.float32)     # (B, N=H*W, C)
    params = make_params(kp)

    fwd = jax.jit(lambda p, xx: attention_forward(p, xx, H, W))
    out = jax.block_until_ready(fwd(params, x))

    ref = jax.block_until_ready(reference_forward(params, x, H, W))
    np.testing.assert_allclose(np.asarray(out), np.asarray(ref), rtol=2e-4, atol=1e-5)
    print("KERNEL_OK")
</pallas_src>

<mosaic_0001>
module attributes {stable_mosaic.version = 11 : i64} {
  func.func @_attn_core_kernel(%arg0: i32, %arg1: memref<1x256x32xf32, #tpu.memory_space<vmem>>, %arg2: memref<1x16x32xf32, #tpu.memory_space<vmem>>, %arg3: memref<1x32xf32, #tpu.memory_space<vmem>>, %arg4: memref<1x32xf32, #tpu.memory_space<vmem>>, %arg5: memref<32x32xf32, #tpu.memory_space<vmem>>, %arg6: memref<1x32xf32, #tpu.memory_space<vmem>>, %arg7: memref<32x32xf32, #tpu.memory_space<vmem>>, %arg8: memref<1x32xf32, #tpu.memory_space<vmem>>, %arg9: memref<32x32xf32, #tpu.memory_space<vmem>>, %arg10: memref<1x32xf32, #tpu.memory_space<vmem>>, %arg11: memref<256x32xf32, #tpu.memory_space<vmem>>, %arg12: memref<1x16x32xf32, #tpu.memory_space<vmem>>) attributes {dimension_semantics = [#tpu.dimension_semantics<parallel>], iteration_bounds = array<i64: 2>, scalar_prefetch = 0 : i64, scratch_operands = 0 : i64, tpu.core_type = #tpu.core_type<tc>, window_params = [{transform_indices = @transform_0, window_bounds = array<i64: 1, 256, 32>}, {transform_indices = @transform_1, window_bounds = array<i64: 1, 16, 32>}, {pipeline_mode = #tpu.pipeline_mode<synchronous>, transform_indices = @transform_2, window_bounds = array<i64: 1, 32>}, {pipeline_mode = #tpu.pipeline_mode<synchronous>, transform_indices = @transform_3, window_bounds = array<i64: 1, 32>}, {pipeline_mode = #tpu.pipeline_mode<synchronous>, transform_indices = @transform_4, window_bounds = array<i64: 32, 32>}, {pipeline_mode = #tpu.pipeline_mode<synchronous>, transform_indices = @transform_5, window_bounds = array<i64: 1, 32>}, {pipeline_mode = #tpu.pipeline_mode<synchronous>, transform_indices = @transform_6, window_bounds = array<i64: 32, 32>}, {pipeline_mode = #tpu.pipeline_mode<synchronous>, transform_indices = @transform_7, window_bounds = array<i64: 1, 32>}, {pipeline_mode = #tpu.pipeline_mode<synchronous>, transform_indices = @transform_8, window_bounds = array<i64: 32, 32>}, {pipeline_mode = #tpu.pipeline_mode<synchronous>, transform_indices = @transform_9, window_bounds = array<i64: 1, 32>}, {transform_indices = @transform_10, window_bounds = array<i64: 256, 32>}, {transform_indices = @transform_11, window_bounds = array<i64: 1, 16, 32>}]} {
    %c0 = arith.constant 0 : index
    %c0_0 = arith.constant 0 : index
    %c0_1 = arith.constant 0 : index
    %0 = vector.load %arg1[%c0, %c0_0, %c0_1] : memref<1x256x32xf32, #tpu.memory_space<vmem>>, vector<1x256x32xf32>
    %1 = vector.shape_cast %0 : vector<1x256x32xf32> to vector<256x32xf32>
    %c0_2 = arith.constant 0 : index
    %c0_3 = arith.constant 0 : index
    %c0_4 = arith.constant 0 : index
    %2 = vector.load %arg2[%c0_2, %c0_3, %c0_4] : memref<1x16x32xf32, #tpu.memory_space<vmem>>, vector<1x16x32xf32>
    %3 = vector.shape_cast %2 : vector<1x16x32xf32> to vector<16x32xf32>
    %cst = arith.constant dense<0.000000e+00> : vector<16xf32>
    %4 = vector.multi_reduction <add>, %3, %cst [1] : vector<16x32xf32> to vector<16xf32>
    %5 = vector.shape_cast %4 : vector<16xf32> to vector<16x1xf32>
    %cst_5 = arith.constant 3.200000e+01 : f32
    %6 = vector.broadcast %cst_5 : f32 to vector<16x1xf32>
    %7 = arith.divf %5, %6 : vector<16x1xf32>
    %8 = arith.mulf %3, %3 : vector<16x32xf32>
    %cst_6 = arith.constant dense<0.000000e+00> : vector<16xf32>
    %9 = vector.multi_reduction <add>, %8, %cst_6 [1] : vector<16x32xf32> to vector<16xf32>
    %10 = vector.shape_cast %9 : vector<16xf32> to vector<16x1xf32>
    %cst_7 = arith.constant 3.200000e+01 : f32
    %11 = vector.broadcast %cst_7 : f32 to vector<16x1xf32>
    %12 = arith.divf %10, %11 : vector<16x1xf32>
    %13 = arith.mulf %7, %7 : vector<16x1xf32>
    %14 = arith.subf %12, %13 : vector<16x1xf32>
    %15 = vector.broadcast %7 : vector<16x1xf32> to vector<16x32xf32>
    %16 = arith.subf %3, %15 : vector<16x32xf32>
    %cst_8 = arith.constant 9.99999997E-7 : f32
    %17 = vector.broadcast %cst_8 : f32 to vector<16x1xf32>
    %18 = arith.addf %14, %17 : vector<16x1xf32>
    %19 = math.rsqrt %18 : vector<16x1xf32>
    %20 = vector.broadcast %19 : vector<16x1xf32> to vector<16x32xf32>
    %21 = arith.mulf %16, %20 : vector<16x32xf32>
    %c0_9 = arith.constant 0 : index
    %c0_10 = arith.constant 0 : index
    %22 = vector.load %arg3[%c0_9, %c0_10] : memref<1x32xf32, #tpu.memory_space<vmem>>, vector<1x32xf32>
    %23 = vector.broadcast %22 : vector<1x32xf32> to vector<16x32xf32>
    %24 = arith.mulf %21, %23 : vector<16x32xf32>
    %c0_11 = arith.constant 0 : index
    %c0_12 = arith.constant 0 : index
    %25 = vector.load %arg4[%c0_11, %c0_12] : memref<1x32xf32, #tpu.memory_space<vmem>>, vector<1x32xf32>
    %26 = vector.broadcast %25 : vector<1x32xf32> to vector<16x32xf32>
    %27 = arith.addf %24, %26 : vector<16x32xf32>
    %c0_13 = arith.constant 0 : index
    %c0_14 = arith.constant 0 : index
    %28 = vector.load %arg5[%c0_13, %c0_14] : memref<32x32xf32, #tpu.memory_space<vmem>>, vector<32x32xf32>
    %cst_15 = arith.constant dense<0.000000e+00> : vector<256x32xf32>
    %29 = tpu.matmul %1, %28, %cst_15 {dimension_numbers = #tpu.dot_dimension_numbers<[1], [0], [0], [1], [0, 0, 1, 1], [], []>} : vector<256x32xf32>, vector<32x32xf32>, vector<256x32xf32> -> vector<256x32xf32>
    %c0_16 = arith.constant 0 : index
    %c0_17 = arith.constant 0 : index
    %30 = vector.load %arg6[%c0_16, %c0_17] : memref<1x32xf32, #tpu.memory_space<vmem>>, vector<1x32xf32>
    %31 = vector.broadcast %30 : vector<1x32xf32> to vector<256x32xf32>
    %32 = arith.addf %29, %31 : vector<256x32xf32>
    %c0_18 = arith.constant 0 : index
    %c0_19 = arith.constant 0 : index
    %33 = vector.load %arg7[%c0_18, %c0_19] : memref<32x32xf32, #tpu.memory_space<vmem>>, vector<32x32xf32>
    %cst_20 = arith.constant dense<0.000000e+00> : vector<16x32xf32>
    %34 = tpu.matmul %27, %33, %cst_20 {dimension_numbers = #tpu.dot_dimension_numbers<[1], [0], [0], [1], [0, 0, 1, 1], [], []>} : vector<16x32xf32>, vector<32x32xf32>, vector<16x32xf32> -> vector<16x32xf32>
    %c0_21 = arith.constant 0 : index
    %c0_22 = arith.constant 0 : index
    %35 = vector.load %arg8[%c0_21, %c0_22] : memref<1x32xf32, #tpu.memory_space<vmem>>, vector<1x32xf32>
    %36 = vector.broadcast %35 : vector<1x32xf32> to vector<16x32xf32>
    %37 = arith.addf %34, %36 : vector<16x32xf32>
    %c0_23 = arith.constant 0 : index
    %c0_24 = arith.constant 0 : index
    %38 = vector.load %arg9[%c0_23, %c0_24] : memref<32x32xf32, #tpu.memory_space<vmem>>, vector<32x32xf32>
    %cst_25 = arith.constant dense<0.000000e+00> : vector<16x32xf32>
    %39 = tpu.matmul %27, %38, %cst_25 {dimension_numbers = #tpu.dot_dimension_numbers<[1], [0], [0], [1], [0, 0, 1, 1], [], []>} : vector<16x32xf32>, vector<32x32xf32>, vector<16x32xf32> -> vector<16x32xf32>
    %c0_26 = arith.constant 0 : index
    %c0_27 = arith.constant 0 : index
    %40 = vector.load %arg10[%c0_26, %c0_27] : memref<1x32xf32, #tpu.memory_space<vmem>>, vector<1x32xf32>
    %41 = vector.broadcast %40 : vector<1x32xf32> to vector<16x32xf32>
    %42 = arith.addf %39, %41 : vector<16x32xf32>
    %c0_28 = arith.constant 0 : index
    %c0_29 = arith.constant 0 : index
    %c0_30 = arith.constant 0 : index
    %43 = vector.load %arg12[%c0_28, %c0_29, %c0_30] : memref<1x16x32xf32, #tpu.memory_space<vmem>>, vector<1x16x32xf32>
    %44 = vector.shape_cast %43 : vector<1x16x32xf32> to vector<16x32xf32>
    %45 = vector.shape_cast %42 : vector<16x32xf32> to vector<1x16x32xf32>
    tpu.vector_store %arg12[%c0_28, %c0_29, %c0_30], %45 {strides = array<i32>} : memref<1x16x32xf32, #tpu.memory_space<vmem>>, vector<1x16x32xf32>,
    %46 = vector.extract_strided_slice %32 {offsets = [0, 0], sizes = [256, 16], strides = [1, 1]} : vector<256x32xf32> to vector<256x16xf32>
    %47 = vector.extract_strided_slice %37 {offsets = [0, 0], sizes = [16, 16], strides = [1, 1]} : vector<16x32xf32> to vector<16x16xf32>
    %48 = vector.extract_strided_slice %42 {offsets = [0, 0], sizes = [16, 16], strides = [1, 1]} : vector<16x32xf32> to vector<16x16xf32>
    %cst_31 = arith.constant dense<0.000000e+00> : vector<256x16xf32>
    %49 = tpu.matmul %46, %47, %cst_31 {dimension_numbers = #tpu.dot_dimension_numbers<[1], [1], [0], [0], [0, 0, 1, 0], [], []>} : vector<256x16xf32>, vector<16x16xf32>, vector<256x16xf32> -> vector<256x16xf32>
    %cst_32 = arith.constant 2.500000e-01 : f32
    %50 = vector.broadcast %cst_32 : f32 to vector<256x16xf32>
    %51 = arith.mulf %49, %50 : vector<256x16xf32>
    %cst_33 = arith.constant dense<0xFF800000> : vector<256xf32>
    %52 = vector.multi_reduction <maximumf>, %51, %cst_33 [1] : vector<256x16xf32> to vector<256xf32>
    %53 = vector.shape_cast %52 : vector<256xf32> to vector<256x1xf32>
    %54 = vector.broadcast %53 : vector<256x1xf32> to vector<256x16xf32>
    %55 = arith.subf %51, %54 : vector<256x16xf32>
    %56 = math.exp %55 : vector<256x16xf32>
    %cst_34 = arith.constant dense<0.000000e+00> : vector<256xf32>
    %57 = vector.multi_reduction <add>, %56, %cst_34 [1] : vector<256x16xf32> to vector<256xf32>
    %58 = vector.shape_cast %57 : vector<256xf32> to vector<256x1xf32>
    %59 = vector.broadcast %58 : vector<256x1xf32> to vector<256x16xf32>
    %60 = arith.divf %56, %59 : vector<256x16xf32>
    %cst_35 = arith.constant dense<0.000000e+00> : vector<256x16xf32>
    %61 = tpu.matmul %60, %48, %cst_35 {dimension_numbers = #tpu.dot_dimension_numbers<[1], [0], [0], [1], [0, 0, 1, 1], [], []>} : vector<256x16xf32>, vector<16x16xf32>, vector<256x16xf32> -> vector<256x16xf32>
    %c0_36 = arith.constant 0 : index
    %c0_37 = arith.constant 0 : index
    %62 = vector.load %arg11[%c0_36, %c0_37] : memref<256x32xf32, #tpu.memory_space<vmem>>, vector<256x16xf32>
    tpu.vector_store %arg11[%c0_36, %c0_37], %61 {strides = array<i32>} : memref<256x32xf32, #tpu.memory_space<vmem>>, vector<256x16xf32>,
    %63 = vector.extract_strided_slice %32 {offsets = [0, 16], sizes = [256, 16], strides = [1, 1]} : vector<256x32xf32> to vector<256x16xf32>
    %64 = vector.extract_strided_slice %37 {offsets = [0, 16], sizes = [16, 16], strides = [1, 1]} : vector<16x32xf32> to vector<16x16xf32>
    %65 = vector.extract_strided_slice %42 {offsets = [0, 16], sizes = [16, 16], strides = [1, 1]} : vector<16x32xf32> to vector<16x16xf32>
    %cst_38 = arith.constant dense<0.000000e+00> : vector<256x16xf32>
    %66 = tpu.matmul %63, %64, %cst_38 {dimension_numbers = #tpu.dot_dimension_numbers<[1], [1], [0], [0], [0, 0, 1, 0], [], []>} : vector<256x16xf32>, vector<16x16xf32>, vector<256x16xf32> -> vector<256x16xf32>
    %cst_39 = arith.constant 2.500000e-01 : f32
    %67 = vector.broadcast %cst_39 : f32 to vector<256x16xf32>
    %68 = arith.mulf %66, %67 : vector<256x16xf32>
    %cst_40 = arith.constant dense<0xFF800000> : vector<256xf32>
    %69 = vector.multi_reduction <maximumf>, %68, %cst_40 [1] : vector<256x16xf32> to vector<256xf32>
    %70 = vector.shape_cast %69 : vector<256xf32> to vector<256x1xf32>
    %71 = vector.broadcast %70 : vector<256x1xf32> to vector<256x16xf32>
    %72 = arith.subf %68, %71 : vector<256x16xf32>
    %73 = math.exp %72 : vector<256x16xf32>
    %cst_41 = arith.constant dense<0.000000e+00> : vector<256xf32>
    %74 = vector.multi_reduction <add>, %73, %cst_41 [1] : vector<256x16xf32> to vector<256xf32>
    %75 = vector.shape_cast %74 : vector<256xf32> to vector<256x1xf32>
    %76 = vector.broadcast %75 : vector<256x1xf32> to vector<256x16xf32>
    %77 = arith.divf %73, %76 : vector<256x16xf32>
    %cst_42 = arith.constant dense<0.000000e+00> : vector<256x16xf32>
    %78 = tpu.matmul %77, %65, %cst_42 {dimension_numbers = #tpu.dot_dimension_numbers<[1], [0], [0], [1], [0, 0, 1, 1], [], []>} : vector<256x16xf32>, vector<16x16xf32>, vector<256x16xf32> -> vector<256x16xf32>
    %c0_43 = arith.constant 0 : index
    %c16 = arith.constant 16 : index
    %79 = vector.load %arg11[%c0_43, %c16] : memref<256x32xf32, #tpu.memory_space<vmem>>, vector<256x16xf32>
    tpu.vector_store %arg11[%c0_43, %c16], %78 {strides = array<i32>} : memref<256x32xf32, #tpu.memory_space<vmem>>, vector<256x16xf32>,
    return
  }
  func.func @transform_0(%arg0: i32) -> (i32, i32, i32) {
    %c0_i32 = arith.constant 0 : i32
    %c0_i32_0 = arith.constant 0 : i32
    %c0_i32_1 = arith.constant 0 : i32
    return %arg0, %c0_i32, %c0_i32_0 : i32, i32, i32
  }
  func.func @transform_1(%arg0: i32) -> (i32, i32, i32) {
    %c0_i32 = arith.constant 0 : i32
    %c0_i32_0 = arith.constant 0 : i32
    %c0_i32_1 = arith.constant 0 : i32
    return %arg0, %c0_i32, %c0_i32_0 : i32, i32, i32
  }
  func.func @transform_2(%arg0: i32) -> (i32, i32) {
    %c0_i32 = arith.constant 0 : i32
    %c0_i32_0 = arith.constant 0 : i32
    %c0_i32_1 = arith.constant 0 : i32
    return %c0_i32, %c0_i32_0 : i32, i32
  }
  func.func @transform_3(%arg0: i32) -> (i32, i32) {
    %c0_i32 = arith.constant 0 : i32
    %c0_i32_0 = arith.constant 0 : i32
    %c0_i32_1 = arith.constant 0 : i32
    return %c0_i32, %c0_i32_0 : i32, i32
  }
  func.func @transform_4(%arg0: i32) -> (i32, i32) {
    %c0_i32 = arith.constant 0 : i32
    %c0_i32_0 = arith.constant 0 : i32
    %c0_i32_1 = arith.constant 0 : i32
    return %c0_i32, %c0_i32_0 : i32, i32
  }
  func.func @transform_5(%arg0: i32) -> (i32, i32) {
    %c0_i32 = arith.constant 0 : i32
    %c0_i32_0 = arith.constant 0 : i32
    %c0_i32_1 = arith.constant 0 : i32
    return %c0_i32, %c0_i32_0 : i32, i32
  }
  func.func @transform_6(%arg0: i32) -> (i32, i32) {
    %c0_i32 = arith.constant 0 : i32
    %c0_i32_0 = arith.constant 0 : i32
    %c0_i32_1 = arith.constant 0 : i32
    return %c0_i32, %c0_i32_0 : i32, i32
  }
  func.func @transform_7(%arg0: i32) -> (i32, i32) {
    %c0_i32 = arith.constant 0 : i32
    %c0_i32_0 = arith.constant 0 : i32
    %c0_i32_1 = arith.constant 0 : i32
    return %c0_i32, %c0_i32_0 : i32, i32
  }
  func.func @transform_8(%arg0: i32) -> (i32, i32) {
    %c0_i32 = arith.constant 0 : i32
    %c0_i32_0 = arith.constant 0 : i32
    %c0_i32_1 = arith.constant 0 : i32
    return %c0_i32, %c0_i32_0 : i32, i32
  }
  func.func @transform_9(%arg0: i32) -> (i32, i32) {
    %c0_i32 = arith.constant 0 : i32
    %c0_i32_0 = arith.constant 0 : i32
    %c0_i32_1 = arith.constant 0 : i32
    return %c0_i32, %c0_i32_0 : i32, i32
  }
  func.func @transform_10(%arg0: i32) -> (i32, i32) {
    %c0_i32 = arith.constant 0 : i32
    %c0_i32_0 = arith.constant 0 : i32
    return %arg0, %c0_i32 : i32, i32
  }
  func.func @transform_11(%arg0: i32) -> (i32, i32, i32) {
    %c0_i32 = arith.constant 0 : i32
    %c0_i32_0 = arith.constant 0 : i32
    %c0_i32_1 = arith.constant 0 : i32
    return %arg0, %c0_i32, %c0_i32_0 : i32, i32, i32
  }
}

module attributes {stable_mosaic.version = 11 : i64} {
  func.func @_up_norm_proj_kernel(%arg0: i32, %arg1: memref<512x32xf32, #tpu.memory_space<vmem>>, %arg2: memref<512x32xf32, #tpu.memory_space<vmem>>, %arg3: memref<1x32xf32, #tpu.memory_space<vmem>>, %arg4: memref<1x32xf32, #tpu.memory_space<vmem>>, %arg5: memref<32x32xf32, #tpu.memory_space<vmem>>, %arg6: memref<1x32xf32, #tpu.memory_space<vmem>>, %arg7: memref<512x32xf32, #tpu.memory_space<vmem>>) attributes {dimension_semantics = [#tpu.dimension_semantics<arbitrary>], iteration_bounds = array<i64: 1>, scalar_prefetch = 0 : i64, scratch_operands = 0 : i64, tpu.core_type = #tpu.core_type<tc>, window_params = [{pipeline_mode = #tpu.pipeline_mode<synchronous>, transform_indices = @transform_0, window_bounds = array<i64: 512, 32>}, {pipeline_mode = #tpu.pipeline_mode<synchronous>, transform_indices = @transform_1, window_bounds = array<i64: 512, 32>}, {pipeline_mode = #tpu.pipeline_mode<synchronous>, transform_indices = @transform_2, window_bounds = array<i64: 1, 32>}, {pipeline_mode = #tpu.pipeline_mode<synchronous>, transform_indices = @transform_3, window_bounds = array<i64: 1, 32>}, {pipeline_mode = #tpu.pipeline_mode<synchronous>, transform_indices = @transform_4, window_bounds = array<i64: 32, 32>}, {pipeline_mode = #tpu.pipeline_mode<synchronous>, transform_indices = @transform_5, window_bounds = array<i64: 1, 32>}, {pipeline_mode = #tpu.pipeline_mode<synchronous>, transform_indices = @transform_6, window_bounds = array<i64: 512, 32>}]} {
    %c0 = arith.constant 0 : index
    %c0_0 = arith.constant 0 : index
    %0 = vector.load %arg1[%c0, %c0_0] : memref<512x32xf32, #tpu.memory_space<vmem>>, vector<512x32xf32>
    %c0_1 = arith.constant 0 : index
    %c0_2 = arith.constant 0 : index
    %1 = vector.load %arg2[%c0_1, %c0_2] : memref<512x32xf32, #tpu.memory_space<vmem>>, vector<512x32xf32>
    %cst = arith.constant dense<0.000000e+00> : vector<512xf32>
    %2 = vector.multi_reduction <add>, %1, %cst [1] : vector<512x32xf32> to vector<512xf32>
    %3 = vector.shape_cast %2 : vector<512xf32> to vector<512x1xf32>
    %cst_3 = arith.constant 3.200000e+01 : f32
    %4 = vector.broadcast %cst_3 : f32 to vector<512x1xf32>
    %5 = arith.divf %3, %4 : vector<512x1xf32>
    %6 = arith.mulf %1, %1 : vector<512x32xf32>
    %cst_4 = arith.constant dense<0.000000e+00> : vector<512xf32>
    %7 = vector.multi_reduction <add>, %6, %cst_4 [1] : vector<512x32xf32> to vector<512xf32>
    %8 = vector.shape_cast %7 : vector<512xf32> to vector<512x1xf32>
    %cst_5 = arith.constant 3.200000e+01 : f32
    %9 = vector.broadcast %cst_5 : f32 to vector<512x1xf32>
    %10 = arith.divf %8, %9 : vector<512x1xf32>
    %11 = arith.mulf %5, %5 : vector<512x1xf32>
    %12 = arith.subf %10, %11 : vector<512x1xf32>
    %13 = vector.broadcast %5 : vector<512x1xf32> to vector<512x32xf32>
    %14 = arith.subf %1, %13 : vector<512x32xf32>
    %cst_6 = arith.constant 9.99999974E-6 : f32
    %15 = vector.broadcast %cst_6 : f32 to vector<512x1xf32>
    %16 = arith.addf %12, %15 : vector<512x1xf32>
    %17 = math.rsqrt %16 : vector<512x1xf32>
    %18 = vector.broadcast %17 : vector<512x1xf32> to vector<512x32xf32>
    %19 = arith.mulf %14, %18 : vector<512x32xf32>
    %c0_7 = arith.constant 0 : index
    %c0_8 = arith.constant 0 : index
    %20 = vector.load %arg3[%c0_7, %c0_8] : memref<1x32xf32, #tpu.memory_space<vmem>>, vector<1x32xf32>
    %21 = vector.broadcast %20 : vector<1x32xf32> to vector<512x32xf32>
    %22 = arith.mulf %19, %21 : vector<512x32xf32>
    %c0_9 = arith.constant 0 : index
    %c0_10 = arith.constant 0 : index
    %23 = vector.load %arg4[%c0_9, %c0_10] : memref<1x32xf32, #tpu.memory_space<vmem>>, vector<1x32xf32>
    %24 = vector.broadcast %23 : vector<1x32xf32> to vector<512x32xf32>
    %25 = arith.addf %22, %24 : vector<512x32xf32>
    %26 = arith.addf %0, %25 : vector<512x32xf32>
    %c0_11 = arith.constant 0 : index
    %c0_12 = arith.constant 0 : index
    %27 = vector.load %arg5[%c0_11, %c0_12] : memref<32x32xf32, #tpu.memory_space<vmem>>, vector<32x32xf32>
    %cst_13 = arith.constant dense<0.000000e+00> : vector<512x32xf32>
    %28 = tpu.matmul %26, %27, %cst_13 {dimension_numbers = #tpu.dot_dimension_numbers<[1], [0], [0], [1], [0, 0, 1, 1], [], []>} : vector<512x32xf32>, vector<32x32xf32>, vector<512x32xf32> -> vector<512x32xf32>
    %c0_14 = arith.constant 0 : index
    %c0_15 = arith.constant 0 : index
    %29 = vector.load %arg6[%c0_14, %c0_15] : memref<1x32xf32, #tpu.memory_space<vmem>>, vector<1x32xf32>
    %30 = vector.broadcast %29 : vector<1x32xf32> to vector<512x32xf32>
    %31 = arith.addf %28, %30 : vector<512x32xf32>
    %c0_16 = arith.constant 0 : index
    %c0_17 = arith.constant 0 : index
    %32 = vector.load %arg7[%c0_16, %c0_17] : memref<512x32xf32, #tpu.memory_space<vmem>>, vector<512x32xf32>
    tpu.vector_store %arg7[%c0_16, %c0_17], %31 {strides = array<i32>} : memref<512x32xf32, #tpu.memory_space<vmem>>, vector<512x32xf32>,
    return
  }
  func.func @transform_0(%arg0: i32) -> (i32, i32) {
    %c0_i32 = arith.constant 0 : i32
    %c0_i32_0 = arith.constant 0 : i32
    %c0_i32_1 = arith.constant 0 : i32
    return %c0_i32, %c0_i32_0 : i32, i32
  }
  func.func @transform_1(%arg0: i32) -> (i32, i32) {
    %c0_i32 = arith.constant 0 : i32
    %c0_i32_0 = arith.constant 0 : i32
    %c0_i32_1 = arith.constant 0 : i32
    return %c0_i32, %c0_i32_0 : i32, i32
  }
  func.func @transform_2(%arg0: i32) -> (i32, i32) {
    %c0_i32 = arith.constant 0 : i32
    %c0_i32_0 = arith.constant 0 : i32
    %c0_i32_1 = arith.constant 0 : i32
    return %c0_i32, %c0_i32_0 : i32, i32
  }
  func.func @transform_3(%arg0: i32) -> (i32, i32) {
    %c0_i32 = arith.constant 0 : i32
    %c0_i32_0 = arith.constant 0 : i32
    %c0_i32_1 = arith.constant 0 : i32
    return %c0_i32, %c0_i32_0 : i32, i32
  }
  func.func @transform_4(%arg0: i32) -> (i32, i32) {
    %c0_i32 = arith.constant 0 : i32
    %c0_i32_0 = arith.constant 0 : i32
    %c0_i32_1 = arith.constant 0 : i32
    return %c0_i32, %c0_i32_0 : i32, i32
  }
  func.func @transform_5(%arg0: i32) -> (i32, i32) {
    %c0_i32 = arith.constant 0 : i32
    %c0_i32_0 = arith.constant 0 : i32
    %c0_i32_1 = arith.constant 0 : i32
    return %c0_i32, %c0_i32_0 : i32, i32
  }
  func.func @transform_6(%arg0: i32) -> (i32, i32) {
    %c0_i32 = arith.constant 0 : i32
    %c0_i32_0 = arith.constant 0 : i32
    %c0_i32_1 = arith.constant 0 : i32
    return %c0_i32, %c0_i32_0 : i32, i32
  }
}

</mosaic_0001>

<llo_original>
// kernel: _lambda_.2
$region0: #{_lambda_.2}
  #allocation0 [shape = 'u32[]', space=smem, size = 0x4, offset = 0x4, fixed_abs, tag = 'smem constant byte address 0x4 - core index']
  #allocation1 [shape = 'u32[144,128]{1,0:T(1,128)}', space=vmem, size = 0x12000, scoped, tag = 'internal scratch']
  %s0 = inlined_call_operand.vmem [shape: f32[2,256,32], index: 0, kind: input, shape index: {}]
  %s1 = inlined_call_operand.vmem [shape: f32[2,16,32], index: 1, kind: input, shape index: {}]
  %s2 = inlined_call_operand.hbm [shape: f32[1,32], index: 2, kind: input, shape index: {}]
  %s3 = inlined_call_operand.hbm [shape: f32[1,32], index: 3, kind: input, shape index: {}]
  %s4 = inlined_call_operand.hbm [shape: f32[32,32], index: 4, kind: input, shape index: {}]
  %s5 = inlined_call_operand.hbm [shape: f32[1,32], index: 5, kind: input, shape index: {}]
  %s6 = inlined_call_operand.hbm [shape: f32[32,32], index: 6, kind: input, shape index: {}]
  %s7 = inlined_call_operand.hbm [shape: f32[1,32], index: 7, kind: input, shape index: {}]
  %s8 = inlined_call_operand.hbm [shape: f32[32,32], index: 8, kind: input, shape index: {}]
  %s9 = inlined_call_operand.hbm [shape: f32[1,32], index: 9, kind: input, shape index: {}]
  %s10 = inlined_call_operand.vmem [shape: f32[512,32], index: 10, kind: output, shape index: {0}]
  %s11 = inlined_call_operand.vmem [shape: f32[2,16,32], index: 11, kind: output, shape index: {1}]
  %12 = xla_tuple %s10, %s11
  %s13 = sld [smem:[#allocation0]]
  $region113: #{_lambda_.2} parent=0
    _
  %s15 = ssub.s32 1, %s13
  %s16 = scalar_select 0, %s15, %s13
  $region1: #{_lambda_.2} parent=0
    #allocation2 [shape = 'u8[512]{0}', space=vmem, size = 0x400, scoped, tag = 'input window, operand 2, single buffered']
    #allocation3 [shape = 's32[2]{0}', space=sflag, size = 0x8, scoped, tag = 'scoped memory for _lambda_.2']
    #allocation4 [shape = 'u8[512]{0}', space=vmem, size = 0x400, scoped, tag = 'input window, operand 3, single buffered']
    #allocation5 [shape = 's32[1]{0}', space=sflag, size = 0x4, scoped, tag = 'scoped memory for _lambda_.2']
    #allocation6 [shape = 'u8[16384]{0}', space=vmem, size = 0x4000, scoped, tag = 'input window, operand 4, single buffered']
    #allocation7 [shape = 'u8[512]{0}', space=vmem, size = 0x400, scoped, tag = 'input window, operand 5, single buffered']
    #allocation8 [shape = 's32[1]{0}', space=sflag, size = 0x4, scoped, tag = 'scoped memory for _lambda_.2']
    #allocation9 [shape = 'u8[16384]{0}', space=vmem, size = 0x4000, scoped, tag = 'input window, operand 6, single buffered']
    #allocation10 [shape = 'u8[512]{0}', space=vmem, size = 0x400, scoped, tag = 'input window, operand 7, single buffered']
    #allocation11 [shape = 's32[1]{0}', space=sflag, size = 0x4, scoped, tag = 'scoped memory for _lambda_.2']
    #allocation12 [shape = 'u8[16384]{0}', space=vmem, size = 0x4000, scoped, tag = 'input window, operand 8, single buffered']
    #allocation13 [shape = 'u8[512]{0}', space=vmem, size = 0x400, scoped, tag = 'input window, operand 9, single buffered']
    #allocation14 [shape = 's32[1]{0}', space=sflag, size = 0x4, scoped, tag = 'scoped memory for _lambda_.2']
    %17 = vsyncpa [#allocation3], 0
    %18 = vsyncpa [#allocation5], 0
    %19 = vsyncpa [#allocation8], 0
    %20 = vsyncpa [#allocation11], 0
    %21 = vsyncpa [#allocation14], 0
    loop: start=0, step=1, limit=4
    $region2: #{_lambda_.2} parent=1 // loop_pre_header
      _
    $region3: #{_lambda_.2} parent=1 // loop_header
      %s23 = sphi 0, %s27
      %p24 = scmp.ge.s32.totalorder %s23, 4
      %s33 = sphi 0, %s35
      %s36 = sphi 0, %s33
      %s37 = sphi 0, %s36
      %s53 = sphi 0, %s37
      %s59 = sphi 0, %s61
      %s62 = sphi 0, %s59
      %s63 = sphi 0, %s62
      %s79 = sphi 0, %s63
      %s83 = sphi 0, %s83
      %s85 = sphi 0, %s83
      %s86 = sphi 0, %s85
      %s100 = sphi 0, %s86
      %s104 = sphi 0, %s104
      %s106 = sphi 0, %s104
      %s107 = sphi 0, %s106
      %s121 = sphi 0, %s107
      %s125 = sphi 0, %s125
      %s127 = sphi 0, %s125
      %s128 = sphi 0, %s127
      %s142 = sphi 0, %s128
      %s146 = sphi 0, %s146
      %s148 = sphi 0, %s146
      %s149 = sphi 0, %s148
      %s163 = sphi 0, %s149
      %s167 = sphi 0, %s167
      %s169 = sphi 0, %s167
      %s170 = sphi 0, %s169
      %s184 = sphi 0, %s170
      %s188 = sphi 0, %s188
      %s190 = sphi 0, %s188
      %s191 = sphi 0, %s190
      %s205 = sphi 0, %s191
      %s209 = sphi 0, %s209
      %s211 = sphi 0, %s209
      %s212 = sphi 0, %s211
      %s226 = sphi 0, %s212
      %s230 = sphi 0, %s230
      %s232 = sphi 0, %s230
      %s233 = sphi 0, %s232
      %s247 = sphi 0, %s233
      %s253 = sphi 0, %s255
      %s256 = sphi 0, %s253
      %s257 = sphi 0, %s256
      %s273 = sphi 0, %s257
      %s279 = sphi 0, %s281
      %s282 = sphi 0, %s279
      %s283 = sphi 0, %s282
      %s299 = sphi 0, %s283
    $region4: #{_lambda_.2} parent=1 // loop_header_branch
      %26 = sbr.rel (%p24) target = $region8
    $region5: #{_lambda_.2} parent=1 // loop_body
      %s28 = ssub.s32 %s23, 1
      %s29 = ssub.s32 %s23, 2
      %s30 = sadd.s32 %s23, 1
      %s31 = ssub.s32 %s23, %s30
      %p32 = scmp.eq.s32.totalorder %s31, 0
      %s34 = sadd.s32 %s33, 1
      %s35 = scalar_select %p32, %s33, %s34
      %p38 = pneg %p32
      %p39 = scmp.eq.s32.totalorder %s23, 1
      %p40 = por %p38, %p39
      %p41 = scmp.ne.s32.totalorder %s33, %s36
      %p42 = scmp.eq.s32.totalorder %s23, 0
      %p43 = por %p41, %p42
      %p44 = scmp.ne.s32.totalorder %s33, %s36
      %p45 = scmp.eq.s32.totalorder %s28, 1
      %p46 = por %p44, %p45
      %p47 = scmp.ne.s32.totalorder %s36, %s37
      %p48 = scmp.eq.s32.totalorder %s28, 0
      %p49 = por %p47, %p48
      %p50 = scmp.ne.s32.totalorder %s36, %s37
      %p51 = scmp.eq.s32.totalorder %s29, 1
      %p52 = por %p50, %p51
      %p54 = scmp.ne.s32.totalorder %s37, %s53
      %p55 = scmp.eq.s32.totalorder %s29, 0
      %p56 = por %p54, %p55
      %s57 = ssub.s32 %s23, %s30
      %p58 = scmp.eq.s32.totalorder %s57, 0
      %s60 = sadd.s32 %s59, 1
      %s61 = scalar_select %p58, %s59, %s60
      %p64 = pneg %p58
      %p65 = scmp.eq.s32.totalorder %s23, 1
      %p66 = por %p64, %p65
      %p67 = scmp.ne.s32.totalorder %s59, %s62
      %p68 = scmp.eq.s32.totalorder %s23, 0
      %p69 = por %p67, %p68
      %p70 = scmp.ne.s32.totalorder %s59, %s62
      %p71 = scmp.eq.s32.totalorder %s28, 1
      %p72 = por %p70, %p71
      %p73 = scmp.ne.s32.totalorder %s62, %s63
      %p74 = scmp.eq.s32.totalorder %s28, 0
      %p75 = por %p73, %p74
      %p76 = scmp.ne.s32.totalorder %s62, %s63
      %p77 = scmp.eq.s32.totalorder %s29, 1
      %p78 = por %p76, %p77
      %p80 = scmp.ne.s32.totalorder %s63, %s79
      %p81 = scmp.eq.s32.totalorder %s29, 0
      %p82 = por %p80, %p81
      %s84 = sadd.s32 %s83, 1
      %p87 = scmp.eq.s32.totalorder %s23, 1
      %p88 = scmp.ne.s32.totalorder %s83, %s85
      %p89 = scmp.eq.s32.totalorder %s23, 0
      %p90 = por %p88, %p89
      %p91 = scmp.ne.s32.totalorder %s83, %s85
      %p92 = scmp.eq.s32.totalorder %s28, 1
      %p93 = por %p91, %p92
      %p94 = scmp.ne.s32.totalorder %s85, %s86
      %p95 = scmp.eq.s32.totalorder %s28, 0
      %p96 = por %p94, %p95
      %p97 = scmp.ne.s32.totalorder %s85, %s86
      %p98 = scmp.eq.s32.totalorder %s29, 1
      %p99 = por %p97, %p98
      %p101 = scmp.ne.s32.totalorder %s86, %s100
      %p102 = scmp.eq.s32.totalorder %s29, 0
      %p103 = por %p101, %p102
      %s105 = sadd.s32 %s104, 1
      %p108 = scmp.eq.s32.totalorder %s23, 1
      %p109 = scmp.ne.s32.totalorder %s104, %s106
      %p110 = scmp.eq.s32.totalorder %s23, 0
      %p111 = por %p109, %p110
      %p112 = scmp.ne.s32.totalorder %s104, %s106
      %p113 = scmp.eq.s32.totalorder %s28, 1
      %p114 = por %p112, %p113
      %p115 = scmp.ne.s32.totalorder %s106, %s107
      %p116 = scmp.eq.s32.totalorder %s28, 0
      %p117 = por %p115, %p116
      %p118 = scmp.ne.s32.totalorder %s106, %s107
      %p119 = scmp.eq.s32.totalorder %s29, 1
      %p120 = por %p118, %p119
      %p122 = scmp.ne.s32.totalorder %s107, %s121
      %p123 = scmp.eq.s32.totalorder %s29, 0
      %p124 = por %p122, %p123
      %s126 = sadd.s32 %s125, 1
      %p129 = scmp.eq.s32.totalorder %s23, 1
      %p130 = scmp.ne.s32.totalorder %s125, %s127
      %p131 = scmp.eq.s32.totalorder %s23, 0
      %p132 = por %p130, %p131
      %p133 = scmp.ne.s32.totalorder %s125, %s127
      %p134 = scmp.eq.s32.totalorder %s28, 1
      %p135 = por %p133, %p134
      %p136 = scmp.ne.s32.totalorder %s127, %s128
      %p137 = scmp.eq.s32.totalorder %s28, 0
      %p138 = por %p136, %p137
      %p139 = scmp.ne.s32.totalorder %s127, %s128
      %p140 = scmp.eq.s32.totalorder %s29, 1
      %p141 = por %p139, %p140
      %p143 = scmp.ne.s32.totalorder %s128, %s142
      %p144 = scmp.eq.s32.totalorder %s29, 0
      %p145 = por %p143, %p144
      %s147 = sadd.s32 %s146, 1
      %p150 = scmp.eq.s32.totalorder %s23, 1
      %p151 = scmp.ne.s32.totalorder %s146, %s148
      %p152 = scmp.eq.s32.totalorder %s23, 0
      %p153 = por %p151, %p152
      %p154 = scmp.ne.s32.totalorder %s146, %s148
      %p155 = scmp.eq.s32.totalorder %s28, 1
      %p156 = por %p154, %p155
      %p157 = scmp.ne.s32.totalorder %s148, %s149
      %p158 = scmp.eq.s32.totalorder %s28, 0
      %p159 = por %p157, %p158
      %p160 = scmp.ne.s32.totalorder %s148, %s149
      %p161 = scmp.eq.s32.totalorder %s29, 1
      %p162 = por %p160, %p161
      %p164 = scmp.ne.s32.totalorder %s149, %s163
      %p165 = scmp.eq.s32.totalorder %s29, 0
      %p166 = por %p164, %p165
      %s168 = sadd.s32 %s167, 1
      %p171 = scmp.eq.s32.totalorder %s23, 1
      %p172 = scmp.ne.s32.totalorder %s167, %s169
      %p173 = scmp.eq.s32.totalorder %s23, 0
      %p174 = por %p172, %p173
      %p175 = scmp.ne.s32.totalorder %s167, %s169
      %p176 = scmp.eq.s32.totalorder %s28, 1
      %p177 = por %p175, %p176
      %p178 = scmp.ne.s32.totalorder %s169, %s170
      %p179 = scmp.eq.s32.totalorder %s28, 0
      %p180 = por %p178, %p179
      %p181 = scmp.ne.s32.totalorder %s169, %s170
      %p182 = scmp.eq.s32.totalorder %s29, 1
      %p183 = por %p181, %p182
      %p185 = scmp.ne.s32.totalorder %s170, %s184
      %p186 = scmp.eq.s32.totalorder %s29, 0
      %p187 = por %p185, %p186
      %s189 = sadd.s32 %s188, 1
      %p192 = scmp.eq.s32.totalorder %s23, 1
      %p193 = scmp.ne.s32.totalorder %s188, %s190
      %p194 = scmp.eq.s32.totalorder %s23, 0
      %p195 = por %p193, %p194
      %p196 = scmp.ne.s32.totalorder %s188, %s190
      %p197 = scmp.eq.s32.totalorder %s28, 1
      %p198 = por %p196, %p197
      %p199 = scmp.ne.s32.totalorder %s190, %s191
      %p200 = scmp.eq.s32.totalorder %s28, 0
      %p201 = por %p199, %p200
      %p202 = scmp.ne.s32.totalorder %s190, %s191
      %p203 = scmp.eq.s32.totalorder %s29, 1
      %p204 = por %p202, %p203
      %p206 = scmp.ne.s32.totalorder %s191, %s205
      %p207 = scmp.eq.s32.totalorder %s29, 0
      %p208 = por %p206, %p207
      %s210 = sadd.s32 %s209, 1
      %p213 = scmp.eq.s32.totalorder %s23, 1
      %p214 = scmp.ne.s32.totalorder %s209, %s211
      %p215 = scmp.eq.s32.totalorder %s23, 0
      %p216 = por %p214, %p215
      %p217 = scmp.ne.s32.totalorder %s209, %s211
      %p218 = scmp.eq.s32.totalorder %s28, 1
      %p219 = por %p217, %p218
      %p220 = scmp.ne.s32.totalorder %s211, %s212
      %p221 = scmp.eq.s32.totalorder %s28, 0
      %p222 = por %p220, %p221
      %p223 = scmp.ne.s32.totalorder %s211, %s212
      %p224 = scmp.eq.s32.totalorder %s29, 1
      %p225 = por %p223, %p224
      %p227 = scmp.ne.s32.totalorder %s212, %s226
      %p228 = scmp.eq.s32.totalorder %s29, 0
      %p229 = por %p227, %p228
      %s231 = sadd.s32 %s230, 1
      %p234 = scmp.eq.s32.totalorder %s23, 1
      %p235 = scmp.ne.s32.totalorder %s230, %s232
      %p236 = scmp.eq.s32.totalorder %s23, 0
      %p237 = por %p235, %p236
      %p238 = scmp.ne.s32.totalorder %s230, %s232
      %p239 = scmp.eq.s32.totalorder %s28, 1
      %p240 = por %p238, %p239
      %p241 = scmp.ne.s32.totalorder %s232, %s233
      %p242 = scmp.eq.s32.totalorder %s28, 0
      %p243 = por %p241, %p242
      %p244 = scmp.ne.s32.totalorder %s232, %s233
      %p245 = scmp.eq.s32.totalorder %s29, 1
      %p246 = por %p244, %p245
      %p248 = scmp.ne.s32.totalorder %s233, %s247
      %p249 = scmp.eq.s32.totalorder %s29, 0
      %p250 = por %p248, %p249
      %s251 = ssub.s32 %s23, %s30
      %p252 = scmp.eq.s32.totalorder %s251, 0
      %s254 = sadd.s32 %s253, 1
      %s255 = scalar_select %p252, %s253, %s254
      %p258 = pneg %p252
      %p259 = scmp.eq.s32.totalorder %s23, 1
      %p260 = por %p258, %p259
      %p261 = scmp.ne.s32.totalorder %s253, %s256
      %p262 = scmp.eq.s32.totalorder %s23, 0
      %p263 = por %p261, %p262
      %p264 = scmp.ne.s32.totalorder %s253, %s256
      %p265 = scmp.eq.s32.totalorder %s28, 1
      %p266 = por %p264, %p265
      %p267 = scmp.ne.s32.totalorder %s256, %s257
      %p268 = scmp.eq.s32.totalorder %s28, 0
      %p269 = por %p267, %p268
      %p270 = scmp.ne.s32.totalorder %s256, %s257
      %p271 = scmp.eq.s32.totalorder %s29, 1
      %p272 = por %p270, %p271
      %p274 = scmp.ne.s32.totalorder %s257, %s273
      %p275 = scmp.eq.s32.totalorder %s29, 0
      %p276 = por %p274, %p275
      %s277 = ssub.s32 %s23, %s30
      %p278 = scmp.eq.s32.totalorder %s277, 0
      %s280 = sadd.s32 %s279, 1
      %s281 = scalar_select %p278, %s279, %s280
      %p284 = pneg %p278
      %p285 = scmp.eq.s32.totalorder %s23, 1
      %p286 = por %p284, %p285
      %p287 = scmp.ne.s32.totalorder %s279, %s282
      %p288 = scmp.eq.s32.totalorder %s23, 0
      %p289 = por %p287, %p288
      %p290 = scmp.ne.s32.totalorder %s279, %s282
      %p291 = scmp.eq.s32.totalorder %s28, 1
      %p292 = por %p290, %p291
      %p293 = scmp.ne.s32.totalorder %s282, %s283
      %p294 = scmp.eq.s32.totalorder %s28, 0
      %p295 = por %p293, %p294
      %p296 = scmp.ne.s32.totalorder %s282, %s283
      %p297 = scmp.eq.s32.totalorder %s29, 1
      %p298 = por %p296, %p297
      %p300 = scmp.ne.s32.totalorder %s283, %s299
      %p301 = scmp.eq.s32.totalorder %s29, 0
      %p302 = por %p300, %p301
      %p303 = scmp.le.s32.totalorder 1, %s23
      %p304 = scmp.lt.s32.totalorder %s23, 3
      %p305 = pnand %p303, %p304
      %p306 = pneg %p305
      // Predicated region
      $region9: #{_lambda_.2} parent=5 // pred_check
        _
      $region10: #{_lambda_.2} parent=5 // pred_check_branch
        %308 = sbr.rel (%p305) target = $region12
      $region11: #{_lambda_.2} parent=5 // pred_region
        %s309 = ssub.s32 %s23, 1
        // Predicated region
        $region13: #{_lambda_.2} parent=11 // pred_check
          %p310 = pneg %p96
        $region14: #{_lambda_.2} parent=11 // pred_check_branch
          %312 = sbr.rel (%p310) target = $region16
        $region15: #{_lambda_.2} parent=11 // pred_region
          %s314 = ssub.s32 16, 16
          %315 = vsyncadd [#allocation3], %s314
          %s317 = sshll.u32 [#allocation2], 4
          %s318 = int_to_ptr.vmem [resolvable:$true] %s317
          %320 = dma.hbm_to_vmem [thread:$0]  %s2, 16, %s318, [#allocation3]
        $region16: #{_lambda_.2} parent=11 // pred_fallthru
          _
        // Predicated region
        $region17: #{_lambda_.2} parent=11 // pred_check
          %p321 = pneg %p117
        $region18: #{_lambda_.2} parent=11 // pred_check_branch
          %323 = sbr.rel (%p321) target = $region20
        $region19: #{_lambda_.2} parent=11 // pred_region
          %s325 = ssub.s32 16, 16
          %326 = vsyncadd [#allocation5], %s325
          %s328 = sshll.u32 [#allocation4], 4
          %s329 = int_to_ptr.vmem [resolvable:$true] %s328
          %331 = dma.hbm_to_vmem [thread:$0]  %s3, 16, %s329, [#allocation5]
        $region20: #{_lambda_.2} parent=11 // pred_fallthru
          _
        // Predicated region
        $region21: #{_lambda_.2} parent=11 // pred_check
          %p332 = pneg %p138
        $region22: #{_lambda_.2} parent=11 // pred_check_branch
          %334 = sbr.rel (%p332) target = $region24
        $region23: #{_lambda_.2} parent=11 // pred_region
          %s336 = ssub.s32 512, 512
          %337 = vsyncadd [#allocation5], %s336
          %s338 = sshll.u32 [#allocation6], 4
          %s339 = int_to_ptr.vmem [resolvable:$true] %s338
          %344 = dma.hbm_to_vmem [thread:$0]  %s4, 512, %s339, [#allocation5], 128, 128, 8
        $region24: #{_lambda_.2} parent=11 // pred_fallthru
          _
        // Predicated region
        $region25: #{_lambda_.2} parent=11 // pred_check
          %p345 = pneg %p159
        $region26: #{_lambda_.2} parent=11 // pred_check_branch
          %347 = sbr.rel (%p345) target = $region28
        $region27: #{_lambda_.2} parent=11 // pred_region
          %s349 = ssub.s32 16, 16
          %350 = vsyncadd [#allocation8], %s349
          %s352 = sshll.u32 [#allocation7], 4
          %s353 = int_to_ptr.vmem [resolvable:$true] %s352
          %355 = dma.hbm_to_vmem [thread:$0]  %s5, 16, %s353, [#allocation8]
        $region28: #{_lambda_.2} parent=11 // pred_fallthru
          _
        // Predicated region
        $region29: #{_lambda_.2} parent=11 // pred_check
          %p356 = pneg %p180
        $region30: #{_lambda_.2} parent=11 // pred_check_branch
          %358 = sbr.rel (%p356) target = $region32
        $region31: #{_lambda_.2} parent=11 // pred_region
          %s360 = ssub.s32 512, 512
          %361 = vsyncadd [#allocation8], %s360
          %s362 = sshll.u32 [#allocation9], 4
          %s363 = int_to_ptr.vmem [resolvable:$true] %s362
          %368 = dma.hbm_to_vmem [thread:$0]  %s6, 512, %s363, [#allocation8], 128, 128, 8
        $region32: #{_lambda_.2} parent=11 // pred_fallthru
          _
        // Predicated region
        $region33: #{_lambda_.2} parent=11 // pred_check
          %p369 = pneg %p201
        $region34: #{_lambda_.2} parent=11 // pred_check_branch
          %371 = sbr.rel (%p369) target = $region36
        $region35: #{_lambda_.2} parent=11 // pred_region
          %s373 = ssub.s32 16, 16
          %374 = vsyncadd [#allocation11], %s373
          %s376 = sshll.u32 [#allocation10], 4
          %s377 = int_to_ptr.vmem [resolvable:$true] %s376
          %379 = dma.hbm_to_vmem [thread:$0]  %s7, 16, %s377, [#allocation11]
        $region36: #{_lambda_.2} parent=11 // pred_fallthru
          _
        // Predicated region
        $region37: #{_lambda_.2} parent=11 // pred_check
          %p380 = pneg %p222
        $region38: #{_lambda_.2} parent=11 // pred_check_branch
          %382 = sbr.rel (%p380) target = $region40
        $region39: #{_lambda_.2} parent=11 // pred_region
          %s384 = ssub.s32 512, 512
          %385 = vsyncadd [#allocation11], %s384
          %s386 = sshll.u32 [#allocation12], 4
          %s387 = int_to_ptr.vmem [resolvable:$true] %s386
          %392 = dma.hbm_to_vmem [thread:$0]  %s8, 512, %s387, [#allocation11], 128, 128, 8
        $region40: #{_lambda_.2} parent=11 // pred_fallthru
          _
        // Predicated region
        $region41: #{_lambda_.2} parent=11 // pred_check
          %p393 = pneg %p243
        $region42: #{_lambda_.2} parent=11 // pred_check_branch
          %395 = sbr.rel (%p393) target = $region44
        $region43: #{_lambda_.2} parent=11 // pred_region
          %s397 = ssub.s32 16, 16
          %398 = vsyncadd [#allocation14], %s397
          %s400 = sshll.u32 [#allocation13], 4
          %s401 = int_to_ptr.vmem [resolvable:$true] %s400
          %403 = dma.hbm_to_vmem [thread:$0]  %s9, 16, %s401, [#allocation14]
        $region44: #{_lambda_.2} parent=11 // pred_fallthru
          _
      $region12: #{_lambda_.2} parent=5 // pred_fallthru
        _
      %p404 = scmp.lt.s32.totalorder %s23, 2
      // Predicated region
      $region45: #{_lambda_.2} parent=5 // pred_check
        %p405 = pneg %p404
      $region46: #{_lambda_.2} parent=5 // pred_check_branch
        %407 = sbr.rel (%p405) target = $region48
      $region47: #{_lambda_.2} parent=5 // pred_region
        // Predicated region
        $region49: #{_lambda_.2} parent=47 // pred_check
          %p408 = pneg %p43
        $region50: #{_lambda_.2} parent=47 // pred_check_branch
          %410 = sbr.rel (%p408) target = $region52
        $region51: #{_lambda_.2} parent=47 // pred_region
          %p411 = scmp.lt.s32.totalorder %s23, 1
          %s412 = scalar_select %p411, %s23, 1
          %s413 = smul.addr %s412, 32
          %s414 = smul.addr %s413, 8
          %s415 = scalar_lea.vmem %s0, %s414
        $region52: #{_lambda_.2} parent=47 // pred_fallthru
          _
        // Predicated region
        $region53: #{_lambda_.2} parent=47 // pred_check
          %p416 = pneg %p69
        $region54: #{_lambda_.2} parent=47 // pred_check_branch
          %418 = sbr.rel (%p416) target = $region56
        $region55: #{_lambda_.2} parent=47 // pred_region
          %p419 = scmp.lt.s32.totalorder %s23, 1
          %s420 = scalar_select %p419, %s23, 1
          %s421 = smul.addr %s420, 2
          %s422 = smul.addr %s421, 8
          %s423 = scalar_lea.vmem %s1, %s422
        $region56: #{_lambda_.2} parent=47 // pred_fallthru
          _
      $region48: #{_lambda_.2} parent=5 // pred_fallthru
        _
      %p424 = scmp.le.s32.totalorder 1, %s23
      %p425 = scmp.lt.s32.totalorder %s23, 3
      %p426 = pnand %p424, %p425
      %p427 = pneg %p426
      // Predicated region
      $region57: #{_lambda_.2} parent=5 // pred_check
        _
      $region58: #{_lambda_.2} parent=5 // pred_check_branch
        %429 = sbr.rel (%p426) target = $region60
      $region59: #{_lambda_.2} parent=5 // pred_region
        %s430 = ssub.s32 %s23, 1
        // Predicated region
        $region61: #{_lambda_.2} parent=59 // pred_check
          %p431 = pneg %p96
        $region62: #{_lambda_.2} parent=59 // pred_check_branch
          %433 = sbr.rel (%p431) target = $region64
        $region63: #{_lambda_.2} parent=59 // pred_region
          %434 = dma.done [#allocation3], 16
        $region64: #{_lambda_.2} parent=59 // pred_fallthru
          _
        // Predicated region
        $region65: #{_lambda_.2} parent=59 // pred_check
          %p435 = pneg %p117
        $region66: #{_lambda_.2} parent=59 // pred_check_branch
          %437 = sbr.rel (%p435) target = $region68
        $region67: #{_lambda_.2} parent=59 // pred_region
          %438 = dma.done [#allocation5], 16
        $region68: #{_lambda_.2} parent=59 // pred_fallthru
          _
        // Predicated region
        $region69: #{_lambda_.2} parent=59 // pred_check
          %p439 = pneg %p138
        $region70: #{_lambda_.2} parent=59 // pred_check_branch
          %441 = sbr.rel (%p439) target = $region72
        $region71: #{_lambda_.2} parent=59 // pred_region
          %442 = dma.done [#allocation5], 512
        $region72: #{_lambda_.2} parent=59 // pred_fallthru
          _
        // Predicated region
        $region73: #{_lambda_.2} parent=59 // pred_check
          %p443 = pneg %p159
        $region74: #{_lambda_.2} parent=59 // pred_check_branch
          %445 = sbr.rel (%p443) target = $region76
        $region75: #{_lambda_.2} parent=59 // pred_region
          %446 = dma.done [#allocation8], 16
        $region76: #{_lambda_.2} parent=59 // pred_fallthru
          _
        // Predicated region
        $region77: #{_lambda_.2} parent=59 // pred_check
          %p447 = pneg %p180
        $region78: #{_lambda_.2} parent=59 // pred_check_branch
          %449 = sbr.rel (%p447) target = $region80
        $region79: #{_lambda_.2} parent=59 // pred_region
          %450 = dma.done [#allocation8], 512
        $region80: #{_lambda_.2} parent=59 // pred_fallthru
          _
        // Predicated region
        $region81: #{_lambda_.2} parent=59 // pred_check
          %p451 = pneg %p201
        $region82: #{_lambda_.2} parent=59 // pred_check_branch
          %453 = sbr.rel (%p451) target = $region84
        $region83: #{_lambda_.2} parent=59 // pred_region
          %454 = dma.done [#allocation11], 16
        $region84: #{_lambda_.2} parent=59 // pred_fallthru
          _
        // Predicated region
        $region85: #{_lambda_.2} parent=59 // pred_check
          %p455 = pneg %p222
        $region86: #{_lambda_.2} parent=59 // pred_check_branch
          %457 = sbr.rel (%p455) target = $region88
        $region87: #{_lambda_.2} parent=59 // pred_region
          %458 = dma.done [#allocation11], 512
        $region88: #{_lambda_.2} parent=59 // pred_fallthru
          _
        // Predicated region
        $region89: #{_lambda_.2} parent=59 // pred_check
          %p459 = pneg %p243
        $region90: #{_lambda_.2} parent=59 // pred_check_branch
          %461 = sbr.rel (%p459) target = $region92
        $region91: #{_lambda_.2} parent=59 // pred_region
          %462 = dma.done [#allocation14], 16
        $region92: #{_lambda_.2} parent=59 // pred_fallthru
          _
        %p463 = scmp.lt.s32.totalorder %s28, 1
        %s464 = scalar_select %p463, %s28, 1
        %s465 = smul.addr %s464, 32
        %s466 = smul.addr %s465, 8
        %s467 = scalar_lea.vmem %s0, %s466
        %p468 = pneg %p49
        %p469 = pneg %p46
        %p470 = scmp.lt.s32.totalorder %s28, 1
        %s471 = scalar_select %p470, %s28, 1
        %s472 = smul.addr %s471, 2
        %s473 = smul.addr %s472, 8
        %s474 = scalar_lea.vmem %s1, %s473
        %p475 = pneg %p75
        %p476 = pneg %p72
        %p477 = pneg %p96
        %p478 = pneg %p93
        %p479 = pneg %p117
        %p480 = pneg %p114
        %p481 = pneg %p138
        %p482 = pneg %p135
        %p483 = pneg %p159
        %p484 = pneg %p156
        %p485 = pneg %p180
        %p486 = pneg %p177
        %p487 = pneg %p201
        %p488 = pneg %p198
        %p489 = pneg %p222
        %p490 = pneg %p219
        %p491 = pneg %p243
        %p492 = pneg %p240
        %p493 = pneg %p269
        %p494 = pneg %p266
        %s495 = smul.u32 32, %s28
        %p496 = scmp.lt.s32.totalorder %s495, 63
        %s497 = scalar_select %p496, %s495, 63
        %s498 = smul.addr %s497, 8
        %s499 = scalar_lea.vmem %s10, %s498
        %p500 = pneg %p295
        %p501 = pneg %p292
        %p502 = scmp.lt.s32.totalorder %s28, 1
        %s503 = scalar_select %p502, %s28, 1
        %s504 = smul.addr %s503, 2
        %s505 = smul.addr %s504, 8
        %s506 = scalar_lea.vmem %s11, %s505
        %p507 = scmp.lt.s32.totalorder %s28, 1
        %s508 = scalar_select %p507, %s28, 1
        %s509 = smul.addr %s508, 32
        %s510 = smul.addr %s509, 8
        %s511 = scalar_lea.vmem %s0, %s510
        %p512 = scmp.lt.s32.totalorder %s28, 1
        %s513 = scalar_select %p512, %s28, 1
        %s514 = smul.addr %s513, 2
        %s515 = smul.addr %s514, 8
        %s516 = scalar_lea.vmem %s1, %s515
        %s517 = smul.u32 32, %s28
        %p518 = scmp.lt.s32.totalorder %s517, 63
        %s519 = scalar_select %p518, %s517, 63
        %s520 = smul.addr %s519, 8
        %s521 = scalar_lea.vmem %s10, %s520
        %s522 = smul.u32 32, %s28
        %p523 = scmp.lt.s32.totalorder %s28, 1
        %s524 = scalar_select %p523, %s28, 1
        %s525 = smul.addr %s524, 2
        %s526 = smul.addr %s525, 8
        %s527 = scalar_lea.vmem %s11, %s526
        %v528 = vld [vmem:[%s511] sm:$0xff]
        %v529 = vld [vmem:[%s511 + $0x8] sm:$0xff]
        %v530 = vld [vmem:[%s511 + $0x10] sm:$0xff]
        %v531 = vld [vmem:[%s511 + $0x18] sm:$0xff]
        %v532 = vld [vmem:[%s511 + $0x20] sm:$0xff]
        %v533 = vld [vmem:[%s511 + $0x28] sm:$0xff]
        %v534 = vld [vmem:[%s511 + $0x30] sm:$0xff]
        %v535 = vld [vmem:[%s511 + $0x38] sm:$0xff]
        %v536 = vld [vmem:[%s511 + $0x40] sm:$0xff]
        %v537 = vld [vmem:[%s511 + $0x48] sm:$0xff]
        %v538 = vld [vmem:[%s511 + $0x50] sm:$0xff]
        %v539 = vld [vmem:[%s511 + $0x58] sm:$0xff]
        %v540 = vld [vmem:[%s511 + $0x60] sm:$0xff]
        %v541 = vld [vmem:[%s511 + $0x68] sm:$0xff]
        %v542 = vld [vmem:[%s511 + $0x70] sm:$0xff]
        %v543 = vld [vmem:[%s511 + $0x78] sm:$0xff]
        %v544 = vld [vmem:[%s511 + $0x80] sm:$0xff]
        %v545 = vld [vmem:[%s511 + $0x88] sm:$0xff]
        %v546 = vld [vmem:[%s511 + $0x90] sm:$0xff]
        %v547 = vld [vmem:[%s511 + $0x98] sm:$0xff]
        %v548 = vld [vmem:[%s511 + $0xa0] sm:$0xff]
        %v549 = vld [vmem:[%s511 + $0xa8] sm:$0xff]
        %v550 = vld [vmem:[%s511 + $0xb0] sm:$0xff]
        %v551 = vld [vmem:[%s511 + $0xb8] sm:$0xff]
        %v552 = vld [vmem:[%s511 + $0xc0] sm:$0xff]
        %v553 = vld [vmem:[%s511 + $0xc8] sm:$0xff]
        %v554 = vld [vmem:[%s511 + $0xd0] sm:$0xff]
        %v555 = vld [vmem:[%s511 + $0xd8] sm:$0xff]
        %v556 = vld [vmem:[%s511 + $0xe0] sm:$0xff]
        %v557 = vld [vmem:[%s511 + $0xe8] sm:$0xff]
        %v558 = vld [vmem:[%s511 + $0xf0] sm:$0xff]
        %v559 = vld [vmem:[%s511 + $0xf8] sm:$0xff]
        %v560 = vld [vmem:[%s516] sm:$0xff]
        %v561 = vld [vmem:[%s516 + $0x8] sm:$0xff]
        %vm562 = vcmask 261120
        %v563 = vsel %vm562, %v560, 0.0
        %564 = vadd.xlane.f32.xlu0 %v563
        %v565 = vpop.xlane.xlu0 %564
        %v566 = vsel %vm562, %v561, 0.0
        %567 = vadd.xlane.f32.xlu0 %v566
        %v568 = vpop.xlane.xlu0 %567
        %v569 = vrcp.pop 32.0
        %v570 = vmul.f32 %v565, %v569
        %v571 = vmul.f32 %v568, %v569
        %v572 = vmul.f32 %v560, %v560
        %v573 = vmul.f32 %v561, %v561
        %v574 = vsel %vm562, %v572, 0.0
        %575 = vadd.xlane.f32.xlu0 %v574
        %v576 = vpop.xlane.xlu0 %575
        %v577 = vsel %vm562, %v573, 0.0
        %578 = vadd.xlane.f32.xlu0 %v577
        %v579 = vpop.xlane.xlu0 %578
        %v580 = vmul.f32 %v576, %v569
        %v581 = vmul.f32 %v579, %v569
        %v582 = vmul.f32 %v570, %v570
        %v583 = vmul.f32 %v571, %v571
        %v584 = vsub.f32 %v580, %v582
        %v585 = vsub.f32 %v581, %v583
        %v586 = vsub.f32 %v560, %v570
        %v587 = vsub.f32 %v561, %v571
        %v588 = vadd.f32 %v584, 1e-06
        %v589 = vadd.f32 %v585, 1e-06
        %v590 = vrsqrt.pop %v588
        %v591 = vrsqrt.pop %v589
        %v592 = vmul.f32 %v586, %v590
        %v593 = vmul.f32 %v587, %v591
        %v594 = vld [vmem:[#allocation2] sm:$0x1]
        %v596 = vlaneseq
        %v597 = vshrl.u32 %v596, 7
        %v598 = vsub.s32 0, %v597
        %v599 = vrot.slane %v594, %v598
        %v601 = vmul.f32 %v592, %v599
        %v602 = vmul.f32 %v593, %v599
        %v603 = vld [vmem:[#allocation4] sm:$0x1]
        %v605 = vlaneseq
        %v606 = vshrl.u32 %v605, 7
        %v607 = vsub.s32 0, %v606
        %v608 = vrot.slane %v603, %v607
        %v610 = vadd.f32 %v601, %v608
        %v611 = vadd.f32 %v602, %v608
        %v612 = vld [vmem:[#allocation6] sm:$0xff]
        %v613 = vld [vmem:[#allocation6 + $0x8] sm:$0xff]
        %v614 = vld [vmem:[#allocation6 + $0x10] sm:$0xff]
        %v615 = vld [vmem:[#allocation6 + $0x18] sm:$0xff]
        %v616 = vld [vmem:[#allocation7] sm:$0x1]
        %v618 = vlaneseq
        %v619 = vshrl.u32 %v618, 7
        %v620 = vsub.s32 0, %v619
        %v621 = vrot.slane %v616, %v620
        %v624 = vsel %vm562, %v528, 0
        %v627 = vsel %vm562, %v529, 0
        %v630 = vsel %vm562, %v530, 0
        %v633 = vsel %vm562, %v531, 0
        %v636 = vsel %vm562, %v532, 0
        %v639 = vsel %vm562, %v533, 0
        %v642 = vsel %vm562, %v534, 0
        %v645 = vsel %vm562, %v535, 0
        %v648 = vsel %vm562, %v536, 0
        %v651 = vsel %vm562, %v537, 0
        %v654 = vsel %vm562, %v538, 0
        %v657 = vsel %vm562, %v539, 0
        %v660 = vsel %vm562, %v540, 0
        %v663 = vsel %vm562, %v541, 0
        %v666 = vsel %vm562, %v542, 0
        %v669 = vsel %vm562, %v543, 0
        %v672 = vsel %vm562, %v544, 0
        %v675 = vsel %vm562, %v545, 0
        %v678 = vsel %vm562, %v546, 0
        %v681 = vsel %vm562, %v547, 0
        %v684 = vsel %vm562, %v548, 0
        %v687 = vsel %vm562, %v549, 0
        %v690 = vsel %vm562, %v550, 0
        %v693 = vsel %vm562, %v551, 0
        %v696 = vsel %vm562, %v552, 0
        %v699 = vsel %vm562, %v553, 0
        %v702 = vsel %vm562, %v554, 0
        %v705 = vsel %vm562, %v555, 0
        %v708 = vsel %vm562, %v556, 0
        %v711 = vsel %vm562, %v557, 0
        %v714 = vsel %vm562, %v558, 0
        %v717 = vsel %vm562, %v559, 0
        %719 = vmatprep.subr.mxu0 0.0
        %720 = vmatpush1.msra.mxu0 0.0
        %721 = vmatprep.subr.mxu0 0.0
        %722 = vmatpush1.msra.mxu0 0.0
        %723 = vmatprep.subr.mxu0 0.0
        %724 = vmatpush1.msra.mxu0 0.0
        %725 = vmatprep.subr.mxu0 0.0
        %726 = vmatpush1.msra.mxu0 0.0
        %727 = vmatprep.subr.mxu0 0.0
        %728 = vmatpush1.msra.mxu0 0.0
        %729 = vmatprep.subr.mxu0 0.0
        %730 = vmatpush1.msra.mxu0 0.0
        %731 = vmatprep.subr.mxu0 0.0
        %732 = vmatpush1.msra.mxu0 0.0
        %733 = vmatprep.subr.mxu0 0.0
        %734 = vmatpush1.msra.mxu0 0.0
        %735 = vmatprep.subr.mxu0 0.0
        %736 = vmatpush1.msra.mxu0 0.0
        %737 = vmatprep.subr.mxu0 0.0
        %738 = vmatpush1.msra.mxu0 0.0
        %739 = vmatprep.subr.mxu0 0.0
        %740 = vmatpush1.msra.mxu0 0.0
        %741 = vmatprep.subr.mxu0 0.0
        %742 = vmatpush1.msra.mxu0 0.0
        %743 = vmatprep.subr.mxu0 0.0
        %744 = vmatpush1.msra.mxu0 %v615
        %745 = vmatprep.subr.mxu0 0.0
        %746 = vmatpush1.msra.mxu0 %v614
        %747 = vmatprep.subr.mxu0 0.0
        %748 = vmatpush1.msra.mxu0 %v613
        %749 = vmatprep.subr.mxu0 0.0
        %750 = vmatpush1.msra.mxu0 %v612
        %751 = vmatprep.subr.mxu0 0.0
        %752 = vmatpush2.msra.mxu0 0.0
        %753 = vmatprep.subr.mxu0 0.0
        %754 = vmatpush2.msra.mxu0 0.0
        %755 = vmatprep.subr.mxu0 0.0
        %756 = vmatpush2.msra.mxu0 0.0
        %757 = vmatprep.subr.mxu0 0.0
        %758 = vmatpush2.msra.mxu0 0.0
        %759 = vmatprep.subr.mxu0 0.0
        %760 = vmatpush2.msra.mxu0 0.0
        %761 = vmatprep.subr.mxu0 0.0
        %762 = vmatpush2.msra.mxu0 0.0
        %763 = vmatprep.subr.mxu0 0.0
        %764 = vmatpush2.msra.mxu0 0.0
        %765 = vmatprep.subr.mxu0 0.0
        %766 = vmatpush2.msra.mxu0 0.0
        %767 = vmatprep.subr.mxu0 0.0
        %768 = vmatpush2.msra.mxu0 0.0
        %769 = vmatprep.subr.mxu0 0.0
        %770 = vmatpush2.msra.mxu0 0.0
        %771 = vmatprep.subr.mxu0 0.0
        %772 = vmatpush2.msra.mxu0 0.0
        %773 = vmatprep.subr.mxu0 0.0
        %774 = vmatpush2.msra.mxu0 0.0
        %775 = vmatprep.subr.mxu0 0.0
        %776 = vmatpush2.msra.mxu0 0.0
        %777 = vmatprep.subr.mxu0 0.0
        %778 = vmatpush2.msra.mxu0 0.0
        %779 = vmatprep.subr.mxu0 0.0
        %780 = vmatpush2.msra.mxu0 0.0
        %781 = vmatprep.subr.mxu0 0.0
        %782 = vmatpush2.msra.mxu0 0.0
        %783 = vmatprep.mubr.f32.mxu0 0.0
        %784 = vmatmul.mubr.f32.gmra.mxu0 %v624
        %v785 = vpop.f32.mrf.mxu0
        %v786 = vadd.f32 %v621, %v785
        %v787 = vpop.f32.mrf.mxu0
        %788 = vmatprep.mubr.f32.mxu0 0.0
        %789 = vmatmul.mubr.f32.gmra.mxu0 %v627
        %v790 = vpop.f32.mrf.mxu0
        %v791 = vadd.f32 %v621, %v790
        %v792 = vpop.f32.mrf.mxu0
        %793 = vmatprep.mubr.f32.mxu0 0.0
        %794 = vmatmul.mubr.f32.gmra.mxu0 %v630
        %v795 = vpop.f32.mrf.mxu0
        %v796 = vadd.f32 %v621, %v795
        %v797 = vpop.f32.mrf.mxu0
        %798 = vmatprep.mubr.f32.mxu0 0.0
        %799 = vmatmul.mubr.f32.gmra.mxu0 %v633
        %v800 = vpop.f32.mrf.mxu0
        %v801 = vadd.f32 %v621, %v800
        %v802 = vpop.f32.mrf.mxu0
        %803 = vmatprep.mubr.f32.mxu0 0.0
        %804 = vmatmul.mubr.f32.gmra.mxu0 %v636
        %v805 = vpop.f32.mrf.mxu0
        %v806 = vadd.f32 %v621, %v805
        %v807 = vpop.f32.mrf.mxu0
        %808 = vmatprep.mubr.f32.mxu0 0.0
        %809 = vmatmul.mubr.f32.gmra.mxu0 %v639
        %v810 = vpop.f32.mrf.mxu0
        %v811 = vadd.f32 %v621, %v810
        %v812 = vpop.f32.mrf.mxu0
        %813 = vmatprep.mubr.f32.mxu0 0.0
        %814 = vmatmul.mubr.f32.gmra.mxu0 %v642
        %v815 = vpop.f32.mrf.mxu0
        %v816 = vadd.f32 %v621, %v815
        %v817 = vpop.f32.mrf.mxu0
        %818 = vmatprep.mubr.f32.mxu0 0.0
        %819 = vmatmul.mubr.f32.gmra.mxu0 %v645
        %v820 = vpop.f32.mrf.mxu0
        %v821 = vadd.f32 %v621, %v820
        %v822 = vpop.f32.mrf.mxu0
        %823 = vmatprep.mubr.f32.mxu0 0.0
        %824 = vmatmul.mubr.f32.gmra.mxu0 %v648
        %v825 = vpop.f32.mrf.mxu0
        %v826 = vadd.f32 %v621, %v825
        %v827 = vpop.f32.mrf.mxu0
        %828 = vmatprep.mubr.f32.mxu0 0.0
        %829 = vmatmul.mubr.f32.gmra.mxu0 %v651
        %v830 = vpop.f32.mrf.mxu0
        %v831 = vadd.f32 %v621, %v830
        %v832 = vpop.f32.mrf.mxu0
        %833 = vmatprep.mubr.f32.mxu0 0.0
        %834 = vmatmul.mubr.f32.gmra.mxu0 %v654
        %v835 = vpop.f32.mrf.mxu0
        %v836 = vadd.f32 %v621, %v835
        %v837 = vpop.f32.mrf.mxu0
        %838 = vmatprep.mubr.f32.mxu0 0.0
        %839 = vmatmul.mubr.f32.gmra.mxu0 %v657
        %v840 = vpop.f32.mrf.mxu0
        %v841 = vadd.f32 %v621, %v840
        %v842 = vpop.f32.mrf.mxu0
        %843 = vmatprep.mubr.f32.mxu0 0.0
        %844 = vmatmul.mubr.f32.gmra.mxu0 %v660
        %v845 = vpop.f32.mrf.mxu0
        %v846 = vadd.f32 %v621, %v845
        %v847 = vpop.f32.mrf.mxu0
        %848 = vmatprep.mubr.f32.mxu0 0.0
        %849 = vmatmul.mubr.f32.gmra.mxu0 %v663
        %v850 = vpop.f32.mrf.mxu0
        %v851 = vadd.f32 %v621, %v850
        %v852 = vpop.f32.mrf.mxu0
        %853 = vmatprep.mubr.f32.mxu0 0.0
        %854 = vmatmul.mubr.f32.gmra.mxu0 %v666
        %v855 = vpop.f32.mrf.mxu0
        %v856 = vadd.f32 %v621, %v855
        %v857 = vpop.f32.mrf.mxu0
        %858 = vmatprep.mubr.f32.mxu0 0.0
        %859 = vmatmul.mubr.f32.gmra.mxu0 %v669
        %v860 = vpop.f32.mrf.mxu0
        %v861 = vadd.f32 %v621, %v860
        %v862 = vpop.f32.mrf.mxu0
        %863 = vmatprep.mubr.f32.mxu0 0.0
        %864 = vmatmul.mubr.f32.gmra.mxu0 %v672
        %v865 = vpop.f32.mrf.mxu0
        %v866 = vadd.f32 %v621, %v865
        %v867 = vpop.f32.mrf.mxu0
        %868 = vmatprep.mubr.f32.mxu0 0.0
        %869 = vmatmul.mubr.f32.gmra.mxu0 %v675
        %v870 = vpop.f32.mrf.mxu0
        %v871 = vadd.f32 %v621, %v870
        %v872 = vpop.f32.mrf.mxu0
        %873 = vmatprep.mubr.f32.mxu0 0.0
        %874 = vmatmul.mubr.f32.gmra.mxu0 %v678
        %v875 = vpop.f32.mrf.mxu0
        %v876 = vadd.f32 %v621, %v875
        %v877 = vpop.f32.mrf.mxu0
        %878 = vmatprep.mubr.f32.mxu0 0.0
        %879 = vmatmul.mubr.f32.gmra.mxu0 %v681
        %v880 = vpop.f32.mrf.mxu0
        %v881 = vadd.f32 %v621, %v880
        %v882 = vpop.f32.mrf.mxu0
        %883 = vmatprep.mubr.f32.mxu0 0.0
        %884 = vmatmul.mubr.f32.gmra.mxu0 %v684
        %v885 = vpop.f32.mrf.mxu0
        %v886 = vadd.f32 %v621, %v885
        %v887 = vpop.f32.mrf.mxu0
        %888 = vmatprep.mubr.f32.mxu0 0.0
        %889 = vmatmul.mubr.f32.gmra.mxu0 %v687
        %v890 = vpop.f32.mrf.mxu0
        %v891 = vadd.f32 %v621, %v890
        %v892 = vpop.f32.mrf.mxu0
        %893 = vmatprep.mubr.f32.mxu0 0.0
        %894 = vmatmul.mubr.f32.gmra.mxu0 %v690
        %v895 = vpop.f32.mrf.mxu0
        %v896 = vadd.f32 %v621, %v895
        %v897 = vpop.f32.mrf.mxu0
        %898 = vmatprep.mubr.f32.mxu0 0.0
        %899 = vmatmul.mubr.f32.gmra.mxu0 %v693
        %v900 = vpop.f32.mrf.mxu0
        %v901 = vadd.f32 %v621, %v900
        %v902 = vpop.f32.mrf.mxu0
        %903 = vmatprep.mubr.f32.mxu0 0.0
        %904 = vmatmul.mubr.f32.gmra.mxu0 %v696
        %v905 = vpop.f32.mrf.mxu0
        %v906 = vadd.f32 %v621, %v905
        %v907 = vpop.f32.mrf.mxu0
        %908 = vmatprep.mubr.f32.mxu0 0.0
        %909 = vmatmul.mubr.f32.gmra.mxu0 %v699
        %v910 = vpop.f32.mrf.mxu0
        %v911 = vadd.f32 %v621, %v910
        %v912 = vpop.f32.mrf.mxu0
        %913 = vmatprep.mubr.f32.mxu0 0.0
        %914 = vmatmul.mubr.f32.gmra.mxu0 %v702
        %v915 = vpop.f32.mrf.mxu0
        %v916 = vadd.f32 %v621, %v915
        %v917 = vpop.f32.mrf.mxu0
        %918 = vmatprep.mubr.f32.mxu0 0.0
        %919 = vmatmul.mubr.f32.gmra.mxu0 %v705
        %v920 = vpop.f32.mrf.mxu0
        %v921 = vadd.f32 %v621, %v920
        %v922 = vpop.f32.mrf.mxu0
        %923 = vmatprep.mubr.f32.mxu0 0.0
        %924 = vmatmul.mubr.f32.gmra.mxu0 %v708
        %v925 = vpop.f32.mrf.mxu0
        %v926 = vadd.f32 %v621, %v925
        %v927 = vpop.f32.mrf.mxu0
        %928 = vmatprep.mubr.f32.mxu0 0.0
        %929 = vmatmul.mubr.f32.gmra.mxu0 %v711
        %v930 = vpop.f32.mrf.mxu0
        %v931 = vadd.f32 %v621, %v930
        %v932 = vpop.f32.mrf.mxu0
        %933 = vmatprep.mubr.f32.mxu0 0.0
        %934 = vmatmul.mubr.f32.gmra.mxu0 %v714
        %v935 = vpop.f32.mrf.mxu0
        %v936 = vadd.f32 %v621, %v935
        %v937 = vpop.f32.mrf.mxu0
        %938 = vmatprep.mubr.f32.mxu0 0.0
        %939 = vmatmul.mubr.f32.gmra.mxu0 %v717
        %v940 = vpop.f32.mrf.mxu0
        %v941 = vadd.f32 %v621, %v940
        %v942 = vpop.f32.mrf.mxu0
        %943 = vdwg.mxu0
        %v944 = vld [vmem:[#allocation9] sm:$0xff]
        %v945 = vld [vmem:[#allocation9 + $0x8] sm:$0xff]
        %v946 = vld [vmem:[#allocation9 + $0x10] sm:$0xff]
        %v947 = vld [vmem:[#allocation9 + $0x18] sm:$0xff]
        %v948 = vld [vmem:[#allocation10] sm:$0x1]
        %v950 = vlaneseq
        %v951 = vshrl.u32 %v950, 7
        %v952 = vsub.s32 0, %v951
        %v953 = vrot.slane %v948, %v952
        %v956 = vsel %vm562, %v610, 0
        %v959 = vsel %vm562, %v611, 0
        %961 = vmatprep.subr.mxu0 0.0
        %962 = vmatpush1.msra.mxu0 0.0
        %963 = vmatprep.subr.mxu0 0.0
        %964 = vmatpush1.msra.mxu0 0.0
        %965 = vmatprep.subr.mxu0 0.0
        %966 = vmatpush1.msra.mxu0 0.0
        %967 = vmatprep.subr.mxu0 0.0
        %968 = vmatpush1.msra.mxu0 0.0
        %969 = vmatprep.subr.mxu0 0.0
        %970 = vmatpush1.msra.mxu0 0.0
        %971 = vmatprep.subr.mxu0 0.0
        %972 = vmatpush1.msra.mxu0 0.0
        %973 = vmatprep.subr.mxu0 0.0
        %974 = vmatpush1.msra.mxu0 0.0
        %975 = vmatprep.subr.mxu0 0.0
        %976 = vmatpush1.msra.mxu0 0.0
        %977 = vmatprep.subr.mxu0 0.0
        %978 = vmatpush1.msra.mxu0 0.0
        %979 = vmatprep.subr.mxu0 0.0
        %980 = vmatpush1.msra.mxu0 0.0
        %981 = vmatprep.subr.mxu0 0.0
        %982 = vmatpush1.msra.mxu0 0.0
        %983 = vmatprep.subr.mxu0 0.0
        %984 = vmatpush1.msra.mxu0 0.0
        %985 = vmatprep.subr.mxu0 0.0
        %986 = vmatpush1.msra.mxu0 %v947
        %987 = vmatprep.subr.mxu0 0.0
        %988 = vmatpush1.msra.mxu0 %v946
        %989 = vmatprep.subr.mxu0 0.0
        %990 = vmatpush1.msra.mxu0 %v945
        %991 = vmatprep.subr.mxu0 0.0
        %992 = vmatpush1.msra.mxu0 %v944
        %993 = vmatprep.subr.mxu0 0.0
        %994 = vmatpush2.msra.mxu0 0.0
        %995 = vmatprep.subr.mxu0 0.0
        %996 = vmatpush2.msra.mxu0 0.0
        %997 = vmatprep.subr.mxu0 0.0
        %998 = vmatpush2.msra.mxu0 0.0
        %999 = vmatprep.subr.mxu0 0.0
        %1000 = vmatpush2.msra.mxu0 0.0
        %1001 = vmatprep.subr.mxu0 0.0
        %1002 = vmatpush2.msra.mxu0 0.0
        %1003 = vmatprep.subr.mxu0 0.0
        %1004 = vmatpush2.msra.mxu0 0.0
        %1005 = vmatprep.subr.mxu0 0.0
        %1006 = vmatpush2.msra.mxu0 0.0
        %1007 = vmatprep.subr.mxu0 0.0
        %1008 = vmatpush2.msra.mxu0 0.0
        %1009 = vmatprep.subr.mxu0 0.0
        %1010 = vmatpush2.msra.mxu0 0.0
        %1011 = vmatprep.subr.mxu0 0.0
        %1012 = vmatpush2.msra.mxu0 0.0
        %1013 = vmatprep.subr.mxu0 0.0
        %1014 = vmatpush2.msra.mxu0 0.0
        %1015 = vmatprep.subr.mxu0 0.0
        %1016 = vmatpush2.msra.mxu0 0.0
        %1017 = vmatprep.subr.mxu0 0.0
        %1018 = vmatpush2.msra.mxu0 0.0
        %1019 = vmatprep.subr.mxu0 0.0
        %1020 = vmatpush2.msra.mxu0 0.0
        %1021 = vmatprep.subr.mxu0 0.0
        %1022 = vmatpush2.msra.mxu0 0.0
        %1023 = vmatprep.subr.mxu0 0.0
        %1024 = vmatpush2.msra.mxu0 0.0
        %1025 = vmatprep.mubr.f32.mxu0 0.0
        %1026 = vmatmul.mubr.f32.gmra.mxu0 %v956
        %v1027 = vpop.f32.mrf.mxu0
        %v1028 = vadd.f32 %v953, %v1027
        %v1029 = vpop.f32.mrf.mxu0
        %1030 = vmatprep.mubr.f32.mxu0 0.0
        %1031 = vmatmul.mubr.f32.gmra.mxu0 %v959
        %v1032 = vpop.f32.mrf.mxu0
        %v1033 = vadd.f32 %v953, %v1032
        %v1034 = vpop.f32.mrf.mxu0
        %1035 = vdwg.mxu0
        %v1036 = vld [vmem:[#allocation12] sm:$0xff]
        %v1037 = vld [vmem:[#allocation12 + $0x8] sm:$0xff]
        %v1038 = vld [vmem:[#allocation12 + $0x10] sm:$0xff]
        %v1039 = vld [vmem:[#allocation12 + $0x18] sm:$0xff]
        %v1040 = vld [vmem:[#allocation13] sm:$0x1]
        %v1042 = vlaneseq
        %v1043 = vshrl.u32 %v1042, 7
        %v1044 = vsub.s32 0, %v1043
        %v1045 = vrot.slane %v1040, %v1044
        %1047 = vmatprep.subr.mxu0 0.0
        %1048 = vmatpush1.msra.mxu0 0.0
        %1049 = vmatprep.subr.mxu0 0.0
        %1050 = vmatpush1.msra.mxu0 0.0
        %1051 = vmatprep.subr.mxu0 0.0
        %1052 = vmatpush1.msra.mxu0 0.0
        %1053 = vmatprep.subr.mxu0 0.0
        %1054 = vmatpush1.msra.mxu0 0.0
        %1055 = vmatprep.subr.mxu0 0.0
        %1056 = vmatpush1.msra.mxu0 0.0
        %1057 = vmatprep.subr.mxu0 0.0
        %1058 = vmatpush1.msra.mxu0 0.0
        %1059 = vmatprep.subr.mxu0 0.0
        %1060 = vmatpush1.msra.mxu0 0.0
        %1061 = vmatprep.subr.mxu0 0.0
        %1062 = vmatpush1.msra.mxu0 0.0
        %1063 = vmatprep.subr.mxu0 0.0
        %1064 = vmatpush1.msra.mxu0 0.0
        %1065 = vmatprep.subr.mxu0 0.0
        %1066 = vmatpush1.msra.mxu0 0.0
        %1067 = vmatprep.subr.mxu0 0.0
        %1068 = vmatpush1.msra.mxu0 0.0
        %1069 = vmatprep.subr.mxu0 0.0
        %1070 = vmatpush1.msra.mxu0 0.0
        %1071 = vmatprep.subr.mxu0 0.0
        %1072 = vmatpush1.msra.mxu0 %v1039
        %1073 = vmatprep.subr.mxu0 0.0
        %1074 = vmatpush1.msra.mxu0 %v1038
        %1075 = vmatprep.subr.mxu0 0.0
        %1076 = vmatpush1.msra.mxu0 %v1037
        %1077 = vmatprep.subr.mxu0 0.0
        %1078 = vmatpush1.msra.mxu0 %v1036
        %1079 = vmatprep.subr.mxu0 0.0
        %1080 = vmatpush2.msra.mxu0 0.0
        %1081 = vmatprep.subr.mxu0 0.0
        %1082 = vmatpush2.msra.mxu0 0.0
        %1083 = vmatprep.subr.mxu0 0.0
        %1084 = vmatpush2.msra.mxu0 0.0
        %1085 = vmatprep.subr.mxu0 0.0
        %1086 = vmatpush2.msra.mxu0 0.0
        %1087 = vmatprep.subr.mxu0 0.0
        %1088 = vmatpush2.msra.mxu0 0.0
        %1089 = vmatprep.subr.mxu0 0.0
        %1090 = vmatpush2.msra.mxu0 0.0
        %1091 = vmatprep.subr.mxu0 0.0
        %1092 = vmatpush2.msra.mxu0 0.0
        %1093 = vmatprep.subr.mxu0 0.0
        %1094 = vmatpush2.msra.mxu0 0.0
        %1095 = vmatprep.subr.mxu0 0.0
        %1096 = vmatpush2.msra.mxu0 0.0
        %1097 = vmatprep.subr.mxu0 0.0
        %1098 = vmatpush2.msra.mxu0 0.0
        %1099 = vmatprep.subr.mxu0 0.0
        %1100 = vmatpush2.msra.mxu0 0.0
        %1101 = vmatprep.subr.mxu0 0.0
        %1102 = vmatpush2.msra.mxu0 0.0
        %1103 = vmatprep.subr.mxu0 0.0
        %1104 = vmatpush2.msra.mxu0 0.0
        %1105 = vmatprep.subr.mxu0 0.0
        %1106 = vmatpush2.msra.mxu0 0.0
        %1107 = vmatprep.subr.mxu0 0.0
        %1108 = vmatpush2.msra.mxu0 0.0
        %1109 = vmatprep.subr.mxu0 0.0
        %1110 = vmatpush2.msra.mxu0 0.0
        %1111 = vmatprep.mubr.f32.mxu0 0.0
        %1112 = vmatmul.mubr.f32.gmra.mxu0 %v956
        %v1113 = vpop.f32.mrf.mxu0
        %v1114 = vadd.f32 %v1045, %v1113
        %v1115 = vpop.f32.mrf.mxu0
        %1116 = vmatprep.mubr.f32.mxu0 0.0
        %1117 = vmatmul.mubr.f32.gmra.mxu0 %v959
        %v1118 = vpop.f32.mrf.mxu0
        %v1119 = vadd.f32 %v1045, %v1118
        %v1120 = vpop.f32.mrf.mxu0
        %1121 = vdwg.mxu0
        %1122 = vst.msk [vmem:[%s527] sm:$0xff] %vm562, %v1114
        %1123 = vst.msk [vmem:[%s527 + $0x8] sm:$0xff] %vm562, %v1119
        %vm1124 = vcmask 130048
        %v1126 = vsel %vm1124, %v786, 0
        %v1129 = vsel %vm1124, %v791, 0
        %v1132 = vsel %vm1124, %v796, 0
        %v1135 = vsel %vm1124, %v801, 0
        %v1138 = vsel %vm1124, %v806, 0
        %v1141 = vsel %vm1124, %v811, 0
        %v1144 = vsel %vm1124, %v816, 0
        %v1147 = vsel %vm1124, %v821, 0
        %v1150 = vsel %vm1124, %v826, 0
        %v1153 = vsel %vm1124, %v831, 0
        %v1156 = vsel %vm1124, %v836, 0
        %v1159 = vsel %vm1124, %v841, 0
        %v1162 = vsel %vm1124, %v846, 0
        %v1165 = vsel %vm1124, %v851, 0
        %v1168 = vsel %vm1124, %v856, 0
        %v1171 = vsel %vm1124, %v861, 0
        %v1174 = vsel %vm1124, %v866, 0
        %v1177 = vsel %vm1124, %v871, 0
        %v1180 = vsel %vm1124, %v876, 0
        %v1183 = vsel %vm1124, %v881, 0
        %v1186 = vsel %vm1124, %v886, 0
        %v1189 = vsel %vm1124, %v891, 0
        %v1192 = vsel %vm1124, %v896, 0
        %v1195 = vsel %vm1124, %v901, 0
        %v1198 = vsel %vm1124, %v906, 0
        %v1201 = vsel %vm1124, %v911, 0
        %v1204 = vsel %vm1124, %v916, 0
        %v1207 = vsel %vm1124, %v921, 0
        %v1210 = vsel %vm1124, %v926, 0
        %v1213 = vsel %vm1124, %v931, 0
        %v1216 = vsel %vm1124, %v936, 0
        %v1219 = vsel %vm1124, %v941, 0
        %v1222 = vsel %vm1124, %v1028, 0
        %v1225 = vsel %vm1124, %v1033, 0
        %1227 = vmatprep.subr.mxu0 0.0
        %1228 = vmatpush1.xpose.msra.mxu0 0.0
        %1229 = vmatprep.subr.mxu0 0.0
        %1230 = vmatpush1.xpose.msra.mxu0 0.0
        %1231 = vmatprep.subr.mxu0 0.0
        %1232 = vmatpush1.xpose.msra.mxu0 0.0
        %1233 = vmatprep.subr.mxu0 0.0
        %1234 = vmatpush1.xpose.msra.mxu0 0.0
        %1235 = vmatprep.subr.mxu0 0.0
        %1236 = vmatpush1.xpose.msra.mxu0 0.0
        %1237 = vmatprep.subr.mxu0 0.0
        %1238 = vmatpush1.xpose.msra.mxu0 0.0
        %1239 = vmatprep.subr.mxu0 0.0
        %1240 = vmatpush1.xpose.msra.mxu0 0.0
        %1241 = vmatprep.subr.mxu0 0.0
        %1242 = vmatpush1.xpose.msra.mxu0 0.0
        %1243 = vmatprep.subr.mxu0 0.0
        %1244 = vmatpush1.xpose.msra.mxu0 0.0
        %1245 = vmatprep.subr.mxu0 0.0
        %1246 = vmatpush1.xpose.msra.mxu0 0.0
        %1247 = vmatprep.subr.mxu0 0.0
        %1248 = vmatpush1.xpose.msra.mxu0 0.0
        %1249 = vmatprep.subr.mxu0 0.0
        %1250 = vmatpush1.xpose.msra.mxu0 0.0
        %1251 = vmatprep.subr.mxu0 0.0
        %1252 = vmatpush1.xpose.msra.mxu0 0.0
        %1253 = vmatprep.subr.mxu0 0.0
        %1254 = vmatpush1.xpose.msra.mxu0 0.0
        %1255 = vmatprep.subr.mxu0 0.0
        %1256 = vmatpush1.xpose.msra.mxu0 %v1225
        %1257 = vmatprep.subr.mxu0 0.0
        %1258 = vmatpush1.xpose.msra.mxu0 %v1222
        %1259 = vmatprep.subr.mxu0 0.0
        %1260 = vmatpush2.xpose.msra.mxu0 0.0
        %1261 = vmatprep.subr.mxu0 0.0
        %1262 = vmatpush2.xpose.msra.mxu0 0.0
        %1263 = vmatprep.subr.mxu0 0.0
        %1264 = vmatpush2.xpose.msra.mxu0 0.0
        %1265 = vmatprep.subr.mxu0 0.0
        %1266 = vmatpush2.xpose.msra.mxu0 0.0
        %1267 = vmatprep.subr.mxu0 0.0
        %1268 = vmatpush2.xpose.msra.mxu0 0.0
        %1269 = vmatprep.subr.mxu0 0.0
        %1270 = vmatpush2.xpose.msra.mxu0 0.0
        %1271 = vmatprep.subr.mxu0 0.0
        %1272 = vmatpush2.xpose.msra.mxu0 0.0
        %1273 = vmatprep.subr.mxu0 0.0
        %1274 = vmatpush2.xpose.msra.mxu0 0.0
        %1275 = vmatprep.subr.mxu0 0.0
        %1276 = vmatpush2.xpose.msra.mxu0 0.0
        %1277 = vmatprep.subr.mxu0 0.0
        %1278 = vmatpush2.xpose.msra.mxu0 0.0
        %1279 = vmatprep.subr.mxu0 0.0
        %1280 = vmatpush2.xpose.msra.mxu0 0.0
        %1281 = vmatprep.subr.mxu0 0.0
        %1282 = vmatpush2.xpose.msra.mxu0 0.0
        %1283 = vmatprep.subr.mxu0 0.0
        %1284 = vmatpush2.xpose.msra.mxu0 0.0
        %1285 = vmatprep.subr.mxu0 0.0
        %1286 = vmatpush2.xpose.msra.mxu0 0.0
        %1287 = vmatprep.subr.mxu0 0.0
        %1288 = vmatpush2.xpose.msra.mxu0 0.0
        %1289 = vmatprep.subr.mxu0 0.0
        %1290 = vmatpush2.xpose.msra.mxu0 0.0
        %1291 = vmatprep.mubr.f32.mxu0 0.0
        %1292 = vmatmul.mubr.f32.gmra.mxu0 %v1126
        %v1293 = vpop.f32.mrf.mxu0
        %v1294 = vadd.f32 0.0, %v1293
        %v1295 = vpop.f32.mrf.mxu0
        %1296 = vmatprep.mubr.f32.mxu0 0.0
        %1297 = vmatmul.mubr.f32.gmra.mxu0 %v1129
        %v1298 = vpop.f32.mrf.mxu0
        %v1299 = vadd.f32 0.0, %v1298
        %v1300 = vpop.f32.mrf.mxu0
        %1301 = vmatprep.mubr.f32.mxu0 0.0
        %1302 = vmatmul.mubr.f32.gmra.mxu0 %v1132
        %v1303 = vpop.f32.mrf.mxu0
        %v1304 = vadd.f32 0.0, %v1303
        %v1305 = vpop.f32.mrf.mxu0
        %1306 = vmatprep.mubr.f32.mxu0 0.0
        %1307 = vmatmul.mubr.f32.gmra.mxu0 %v1135
        %v1308 = vpop.f32.mrf.mxu0
        %v1309 = vadd.f32 0.0, %v1308
        %v1310 = vpop.f32.mrf.mxu0
        %1311 = vmatprep.mubr.f32.mxu0 0.0
        %1312 = vmatmul.mubr.f32.gmra.mxu0 %v1138
        %v1313 = vpop.f32.mrf.mxu0
        %v1314 = vadd.f32 0.0, %v1313
        %v1315 = vpop.f32.mrf.mxu0
        %1316 = vmatprep.mubr.f32.mxu0 0.0
        %1317 = vmatmul.mubr.f32.gmra.mxu0 %v1141
        %v1318 = vpop.f32.mrf.mxu0
        %v1319 = vadd.f32 0.0, %v1318
        %v1320 = vpop.f32.mrf.mxu0
        %1321 = vmatprep.mubr.f32.mxu0 0.0
        %1322 = vmatmul.mubr.f32.gmra.mxu0 %v1144
        %v1323 = vpop.f32.mrf.mxu0
        %v1324 = vadd.f32 0.0, %v1323
        %v1325 = vpop.f32.mrf.mxu0
        %1326 = vmatprep.mubr.f32.mxu0 0.0
        %1327 = vmatmul.mubr.f32.gmra.mxu0 %v1147
        %v1328 = vpop.f32.mrf.mxu0
        %v1329 = vadd.f32 0.0, %v1328
        %v1330 = vpop.f32.mrf.mxu0
        %1331 = vmatprep.mubr.f32.mxu0 0.0
        %1332 = vmatmul.mubr.f32.gmra.mxu0 %v1150
        %v1333 = vpop.f32.mrf.mxu0
        %v1334 = vadd.f32 0.0, %v1333
        %v1335 = vpop.f32.mrf.mxu0
        %1336 = vmatprep.mubr.f32.mxu0 0.0
        %1337 = vmatmul.mubr.f32.gmra.mxu0 %v1153
        %v1338 = vpop.f32.mrf.mxu0
        %v1339 = vadd.f32 0.0, %v1338
        %v1340 = vpop.f32.mrf.mxu0
        %1341 = vmatprep.mubr.f32.mxu0 0.0
        %1342 = vmatmul.mubr.f32.gmra.mxu0 %v1156
        %v1343 = vpop.f32.mrf.mxu0
        %v1344 = vadd.f32 0.0, %v1343
        %v1345 = vpop.f32.mrf.mxu0
        %1346 = vmatprep.mubr.f32.mxu0 0.0
        %1347 = vmatmul.mubr.f32.gmra.mxu0 %v1159
        %v1348 = vpop.f32.mrf.mxu0
        %v1349 = vadd.f32 0.0, %v1348
        %v1350 = vpop.f32.mrf.mxu0
        %1351 = vmatprep.mubr.f32.mxu0 0.0
        %1352 = vmatmul.mubr.f32.gmra.mxu0 %v1162
        %v1353 = vpop.f32.mrf.mxu0
        %v1354 = vadd.f32 0.0, %v1353
        %v1355 = vpop.f32.mrf.mxu0
        %1356 = vmatprep.mubr.f32.mxu0 0.0
        %1357 = vmatmul.mubr.f32.gmra.mxu0 %v1165
        %v1358 = vpop.f32.mrf.mxu0
        %v1359 = vadd.f32 0.0, %v1358
        %v1360 = vpop.f32.mrf.mxu0
        %1361 = vmatprep.mubr.f32.mxu0 0.0
        %1362 = vmatmul.mubr.f32.gmra.mxu0 %v1168
        %v1363 = vpop.f32.mrf.mxu0
        %v1364 = vadd.f32 0.0, %v1363
        %v1365 = vpop.f32.mrf.mxu0
        %1366 = vmatprep.mubr.f32.mxu0 0.0
        %1367 = vmatmul.mubr.f32.gmra.mxu0 %v1171
        %v1368 = vpop.f32.mrf.mxu0
        %v1369 = vadd.f32 0.0, %v1368
        %v1370 = vpop.f32.mrf.mxu0
        %1371 = vmatprep.mubr.f32.mxu0 0.0
        %1372 = vmatmul.mubr.f32.gmra.mxu0 %v1174
        %v1373 = vpop.f32.mrf.mxu0
        %v1374 = vadd.f32 0.0, %v1373
        %v1375 = vpop.f32.mrf.mxu0
        %1376 = vmatprep.mubr.f32.mxu0 0.0
        %1377 = vmatmul.mubr.f32.gmra.mxu0 %v1177
        %v1378 = vpop.f32.mrf.mxu0
        %v1379 = vadd.f32 0.0, %v1378
        %v1380 = vpop.f32.mrf.mxu0
        %1381 = vmatprep.mubr.f32.mxu0 0.0
        %1382 = vmatmul.mubr.f32.gmra.mxu0 %v1180
        %v1383 = vpop.f32.mrf.mxu0
        %v1384 = vadd.f32 0.0, %v1383
        %v1385 = vpop.f32.mrf.mxu0
        %1386 = vmatprep.mubr.f32.mxu0 0.0
        %1387 = vmatmul.mubr.f32.gmra.mxu0 %v1183
        %v1388 = vpop.f32.mrf.mxu0
        %v1389 = vadd.f32 0.0, %v1388
        %v1390 = vpop.f32.mrf.mxu0
        %1391 = vmatprep.mubr.f32.mxu0 0.0
        %1392 = vmatmul.mubr.f32.gmra.mxu0 %v1186
        %v1393 = vpop.f32.mrf.mxu0
        %v1394 = vadd.f32 0.0, %v1393
        %v1395 = vpop.f32.mrf.mxu0
        %1396 = vmatprep.mubr.f32.mxu0 0.0
        %1397 = vmatmul.mubr.f32.gmra.mxu0 %v1189
        %v1398 = vpop.f32.mrf.mxu0
        %v1399 = vadd.f32 0.0, %v1398
        %v1400 = vpop.f32.mrf.mxu0
        %1401 = vmatprep.mubr.f32.mxu0 0.0
        %1402 = vmatmul.mubr.f32.gmra.mxu0 %v1192
        %v1403 = vpop.f32.mrf.mxu0
        %v1404 = vadd.f32 0.0, %v1403
        %v1405 = vpop.f32.mrf.mxu0
        %1406 = vmatprep.mubr.f32.mxu0 0.0
        %1407 = vmatmul.mubr.f32.gmra.mxu0 %v1195
        %v1408 = vpop.f32.mrf.mxu0
        %v1409 = vadd.f32 0.0, %v1408
        %v1410 = vpop.f32.mrf.mxu0
        %1411 = vmatprep.mubr.f32.mxu0 0.0
        %1412 = vmatmul.mubr.f32.gmra.mxu0 %v1198
        %v1413 = vpop.f32.mrf.mxu0
        %v1414 = vadd.f32 0.0, %v1413
        %v1415 = vpop.f32.mrf.mxu0
        %1416 = vmatprep.mubr.f32.mxu0 0.0
        %1417 = vmatmul.mubr.f32.gmra.mxu0 %v1201
        %v1418 = vpop.f32.mrf.mxu0
        %v1419 = vadd.f32 0.0, %v1418
        %v1420 = vpop.f32.mrf.mxu0
        %1421 = vmatprep.mubr.f32.mxu0 0.0
        %1422 = vmatmul.mubr.f32.gmra.mxu0 %v1204
        %v1423 = vpop.f32.mrf.mxu0
        %v1424 = vadd.f32 0.0, %v1423
        %v1425 = vpop.f32.mrf.mxu0
        %1426 = vmatprep.mubr.f32.mxu0 0.0
        %1427 = vmatmul.mubr.f32.gmra.mxu0 %v1207
        %v1428 = vpop.f32.mrf.mxu0
        %v1429 = vadd.f32 0.0, %v1428
        %v1430 = vpop.f32.mrf.mxu0
        %1431 = vmatprep.mubr.f32.mxu0 0.0
        %1432 = vmatmul.mubr.f32.gmra.mxu0 %v1210
        %v1433 = vpop.f32.mrf.mxu0
        %v1434 = vadd.f32 0.0, %v1433
        %v1435 = vpop.f32.mrf.mxu0
        %1436 = vmatprep.mubr.f32.mxu0 0.0
        %1437 = vmatmul.mubr.f32.gmra.mxu0 %v1213
        %v1438 = vpop.f32.mrf.mxu0
        %v1439 = vadd.f32 0.0, %v1438
        %v1440 = vpop.f32.mrf.mxu0
        %1441 = vmatprep.mubr.f32.mxu0 0.0
        %1442 = vmatmul.mubr.f32.gmra.mxu0 %v1216
        %v1443 = vpop.f32.mrf.mxu0
        %v1444 = vadd.f32 0.0, %v1443
        %v1445 = vpop.f32.mrf.mxu0
        %1446 = vmatprep.mubr.f32.mxu0 0.0
        %1447 = vmatmul.mubr.f32.gmra.mxu0 %v1219
        %v1448 = vpop.f32.mrf.mxu0
        %v1449 = vadd.f32 0.0, %v1448
        %v1450 = vpop.f32.mrf.mxu0
        %1451 = vdwg.mxu0
        %v1452 = vmul.f32 %v1294, 0.25
        %v1453 = vmul.f32 %v1299, 0.25
        %v1454 = vmul.f32 %v1304, 0.25
        %v1455 = vmul.f32 %v1309, 0.25
        %v1456 = vmul.f32 %v1314, 0.25
        %v1457 = vmul.f32 %v1319, 0.25
        %v1458 = vmul.f32 %v1324, 0.25
        %v1459 = vmul.f32 %v1329, 0.25
        %v1460 = vmul.f32 %v1334, 0.25
        %v1461 = vmul.f32 %v1339, 0.25
        %v1462 = vmul.f32 %v1344, 0.25
        %v1463 = vmul.f32 %v1349, 0.25
        %v1464 = vmul.f32 %v1354, 0.25
        %v1465 = vmul.f32 %v1359, 0.25
        %v1466 = vmul.f32 %v1364, 0.25
        %v1467 = vmul.f32 %v1369, 0.25
        %v1468 = vmul.f32 %v1374, 0.25
        %v1469 = vmul.f32 %v1379, 0.25
        %v1470 = vmul.f32 %v1384, 0.25
        %v1471 = vmul.f32 %v1389, 0.25
        %v1472 = vmul.f32 %v1394, 0.25
        %v1473 = vmul.f32 %v1399, 0.25
        %v1474 = vmul.f32 %v1404, 0.25
        %v1475 = vmul.f32 %v1409, 0.25
        %v1476 = vmul.f32 %v1414, 0.25
        %v1477 = vmul.f32 %v1419, 0.25
        %v1478 = vmul.f32 %v1424, 0.25
        %v1479 = vmul.f32 %v1429, 0.25
        %v1480 = vmul.f32 %v1434, 0.25
        %v1481 = vmul.f32 %v1439, 0.25
        %v1482 = vmul.f32 %v1444, 0.25
        %v1483 = vmul.f32 %v1449, 0.25
        %v1484 = vsel %vm1124, %v1452, -inf
        %1485 = vmax.xlane.f32.xlu0 %v1484
        %v1486 = vpop.xlane.xlu0 %1485
        %v1487 = vsel %vm1124, %v1453, -inf
        %1488 = vmax.xlane.f32.xlu0 %v1487
        %v1489 = vpop.xlane.xlu0 %1488
        %v1490 = vsel %vm1124, %v1454, -inf
        %1491 = vmax.xlane.f32.xlu0 %v1490
        %v1492 = vpop.xlane.xlu0 %1491
        %v1493 = vsel %vm1124, %v1455, -inf
        %1494 = vmax.xlane.f32.xlu0 %v1493
        %v1495 = vpop.xlane.xlu0 %1494
        %v1496 = vsel %vm1124, %v1456, -inf
        %1497 = vmax.xlane.f32.xlu0 %v1496
        %v1498 = vpop.xlane.xlu0 %1497
        %v1499 = vsel %vm1124, %v1457, -inf
        %1500 = vmax.xlane.f32.xlu0 %v1499
        %v1501 = vpop.xlane.xlu0 %1500
        %v1502 = vsel %vm1124, %v1458, -inf
        %1503 = vmax.xlane.f32.xlu0 %v1502
        %v1504 = vpop.xlane.xlu0 %1503
        %v1505 = vsel %vm1124, %v1459, -inf
        %1506 = vmax.xlane.f32.xlu0 %v1505
        %v1507 = vpop.xlane.xlu0 %1506
        %v1508 = vsel %vm1124, %v1460, -inf
        %1509 = vmax.xlane.f32.xlu0 %v1508
        %v1510 = vpop.xlane.xlu0 %1509
        %v1511 = vsel %vm1124, %v1461, -inf
        %1512 = vmax.xlane.f32.xlu0 %v1511
        %v1513 = vpop.xlane.xlu0 %1512
        %v1514 = vsel %vm1124, %v1462, -inf
        %1515 = vmax.xlane.f32.xlu0 %v1514
        %v1516 = vpop.xlane.xlu0 %1515
        %v1517 = vsel %vm1124, %v1463, -inf
        %1518 = vmax.xlane.f32.xlu0 %v1517
        %v1519 = vpop.xlane.xlu0 %1518
        %v1520 = vsel %vm1124, %v1464, -inf
        %1521 = vmax.xlane.f32.xlu0 %v1520
        %v1522 = vpop.xlane.xlu0 %1521
        %v1523 = vsel %vm1124, %v1465, -inf
        %1524 = vmax.xlane.f32.xlu0 %v1523
        %v1525 = vpop.xlane.xlu0 %1524
        %v1526 = vsel %vm1124, %v1466, -inf
        %1527 = vmax.xlane.f32.xlu0 %v1526
        %v1528 = vpop.xlane.xlu0 %1527
        %v1529 = vsel %vm1124, %v1467, -inf
        %1530 = vmax.xlane.f32.xlu0 %v1529
        %v1531 = vpop.xlane.xlu0 %1530
        %v1532 = vsel %vm1124, %v1468, -inf
        %1533 = vmax.xlane.f32.xlu0 %v1532
        %v1534 = vpop.xlane.xlu0 %1533
        %v1535 = vsel %vm1124, %v1469, -inf
        %1536 = vmax.xlane.f32.xlu0 %v1535
        %v1537 = vpop.xlane.xlu0 %1536
        %v1538 = vsel %vm1124, %v1470, -inf
        %1539 = vmax.xlane.f32.xlu0 %v1538
        %v1540 = vpop.xlane.xlu0 %1539
        %v1541 = vsel %vm1124, %v1471, -inf
        %1542 = vmax.xlane.f32.xlu0 %v1541
        %v1543 = vpop.xlane.xlu0 %1542
        %v1544 = vsel %vm1124, %v1472, -inf
        %1545 = vmax.xlane.f32.xlu0 %v1544
        %v1546 = vpop.xlane.xlu0 %1545
        %v1547 = vsel %vm1124, %v1473, -inf
        %1548 = vmax.xlane.f32.xlu0 %v1547
        %v1549 = vpop.xlane.xlu0 %1548
        %v1550 = vsel %vm1124, %v1474, -inf
        %1551 = vmax.xlane.f32.xlu0 %v1550
        %v1552 = vpop.xlane.xlu0 %1551
        %v1553 = vsel %vm1124, %v1475, -inf
        %1554 = vmax.xlane.f32.xlu0 %v1553
        %v1555 = vpop.xlane.xlu0 %1554
        %v1556 = vsel %vm1124, %v1476, -inf
        %1557 = vmax.xlane.f32.xlu0 %v1556
        %v1558 = vpop.xlane.xlu0 %1557
        %v1559 = vsel %vm1124, %v1477, -inf
        %1560 = vmax.xlane.f32.xlu0 %v1559
        %v1561 = vpop.xlane.xlu0 %1560
        %v1562 = vsel %vm1124, %v1478, -inf
        %1563 = vmax.xlane.f32.xlu0 %v1562
        %v1564 = vpop.xlane.xlu0 %1563
        %v1565 = vsel %vm1124, %v1479, -inf
        %1566 = vmax.xlane.f32.xlu0 %v1565
        %v1567 = vpop.xlane.xlu0 %1566
        %v1568 = vsel %vm1124, %v1480, -inf
        %1569 = vmax.xlane.f32.xlu0 %v1568
        %v1570 = vpop.xlane.xlu0 %1569
        %v1571 = vsel %vm1124, %v1481, -inf
        %1572 = vmax.xlane.f32.xlu0 %v1571
        %v1573 = vpop.xlane.xlu0 %1572
        %v1574 = vsel %vm1124, %v1482, -inf
        %1575 = vmax.xlane.f32.xlu0 %v1574
        %v1576 = vpop.xlane.xlu0 %1575
        %v1577 = vsel %vm1124, %v1483, -inf
        %1578 = vmax.xlane.f32.xlu0 %v1577
        %v1579 = vpop.xlane.xlu0 %1578
        %v1580 = vsub.f32 %v1452, %v1486
        %v1581 = vsub.f32 %v1453, %v1489
        %v1582 = vsub.f32 %v1454, %v1492
        %v1583 = vsub.f32 %v1455, %v1495
        %v1584 = vsub.f32 %v1456, %v1498
        %v1585 = vsub.f32 %v1457, %v1501
        %v1586 = vsub.f32 %v1458, %v1504
        %v1587 = vsub.f32 %v1459, %v1507
        %v1588 = vsub.f32 %v1460, %v1510
        %v1589 = vsub.f32 %v1461, %v1513
        %v1590 = vsub.f32 %v1462, %v1516
        %v1591 = vsub.f32 %v1463, %v1519
        %v1592 = vsub.f32 %v1464, %v1522
        %v1593 = vsub.f32 %v1465, %v1525
        %v1594 = vsub.f32 %v1466, %v1528
        %v1595 = vsub.f32 %v1467, %v1531
        %v1596 = vsub.f32 %v1468, %v1534
        %v1597 = vsub.f32 %v1469, %v1537
        %v1598 = vsub.f32 %v1470, %v1540
        %v1599 = vsub.f32 %v1471, %v1543
        %v1600 = vsub.f32 %v1472, %v1546
        %v1601 = vsub.f32 %v1473, %v1549
        %v1602 = vsub.f32 %v1474, %v1552
        %v1603 = vsub.f32 %v1475, %v1555
        %v1604 = vsub.f32 %v1476, %v1558
        %v1605 = vsub.f32 %v1477, %v1561
        %v1606 = vsub.f32 %v1478, %v1564
        %v1607 = vsub.f32 %v1479, %v1567
        %v1608 = vsub.f32 %v1480, %v1570
        %v1609 = vsub.f32 %v1481, %v1573
        %v1610 = vsub.f32 %v1482, %v1576
        %v1611 = vsub.f32 %v1483, %v1579
        %v1612 = vmul.f32 %v1580, 1.442695
        %v1613 = vpow.pop %v1612
        %v1614 = vmul.f32 %v1581, 1.442695
        %v1615 = vpow.pop %v1614
        %v1616 = vmul.f32 %v1582, 1.442695
        %v1617 = vpow.pop %v1616
        %v1618 = vmul.f32 %v1583, 1.442695
        %v1619 = vpow.pop %v1618
        %v1620 = vmul.f32 %v1584, 1.442695
        %v1621 = vpow.pop %v1620
        %v1622 = vmul.f32 %v1585, 1.442695
        %v1623 = vpow.pop %v1622
        %v1624 = vmul.f32 %v1586, 1.442695
        %v1625 = vpow.pop %v1624
        %v1626 = vmul.f32 %v1587, 1.442695
        %v1627 = vpow.pop %v1626
        %v1628 = vmul.f32 %v1588, 1.442695
        %v1629 = vpow.pop %v1628
        %v1630 = vmul.f32 %v1589, 1.442695
        %v1631 = vpow.pop %v1630
        %v1632 = vmul.f32 %v1590, 1.442695
        %v1633 = vpow.pop %v1632
        %v1634 = vmul.f32 %v1591, 1.442695
        %v1635 = vpow.pop %v1634
        %v1636 = vmul.f32 %v1592, 1.442695
        %v1637 = vpow.pop %v1636
        %v1638 = vmul.f32 %v1593, 1.442695
        %v1639 = vpow.pop %v1638
        %v1640 = vmul.f32 %v1594, 1.442695
        %v1641 = vpow.pop %v1640
        %v1642 = vmul.f32 %v1595, 1.442695
        %v1643 = vpow.pop %v1642
        %v1644 = vmul.f32 %v1596, 1.442695
        %v1645 = vpow.pop %v1644
        %v1646 = vmul.f32 %v1597, 1.442695
        %v1647 = vpow.pop %v1646
        %v1648 = vmul.f32 %v1598, 1.442695
        %v1649 = vpow.pop %v1648
        %v1650 = vmul.f32 %v1599, 1.442695
        %v1651 = vpow.pop %v1650
        %v1652 = vmul.f32 %v1600, 1.442695
        %v1653 = vpow.pop %v1652
        %v1654 = vmul.f32 %v1601, 1.442695
        %v1655 = vpow.pop %v1654
        %v1656 = vmul.f32 %v1602, 1.442695
        %v1657 = vpow.pop %v1656
        %v1658 = vmul.f32 %v1603, 1.442695
        %v1659 = vpow.pop %v1658
        %v1660 = vmul.f32 %v1604, 1.442695
        %v1661 = vpow.pop %v1660
        %v1662 = vmul.f32 %v1605, 1.442695
        %v1663 = vpow.pop %v1662
        %v1664 = vmul.f32 %v1606, 1.442695
        %v1665 = vpow.pop %v1664
        %v1666 = vmul.f32 %v1607, 1.442695
        %v1667 = vpow.pop %v1666
        %v1668 = vmul.f32 %v1608, 1.442695
        %v1669 = vpow.pop %v1668
        %v1670 = vmul.f32 %v1609, 1.442695
        %v1671 = vpow.pop %v1670
        %v1672 = vmul.f32 %v1610, 1.442695
        %v1673 = vpow.pop %v1672
        %v1674 = vmul.f32 %v1611, 1.442695
        %v1675 = vpow.pop %v1674
        %v1676 = vsel %vm1124, %v1613, 0.0
        %1677 = vadd.xlane.f32.xlu0 %v1676
        %v1678 = vpop.xlane.xlu0 %1677
        %v1679 = vsel %vm1124, %v1615, 0.0
        %1680 = vadd.xlane.f32.xlu0 %v1679
        %v1681 = vpop.xlane.xlu0 %1680
        %v1682 = vsel %vm1124, %v1617, 0.0
        %1683 = vadd.xlane.f32.xlu0 %v1682
        %v1684 = vpop.xlane.xlu0 %1683
        %v1685 = vsel %vm1124, %v1619, 0.0
        %1686 = vadd.xlane.f32.xlu0 %v1685
        %v1687 = vpop.xlane.xlu0 %1686
        %v1688 = vsel %vm1124, %v1621, 0.0
        %1689 = vadd.xlane.f32.xlu0 %v1688
        %v1690 = vpop.xlane.xlu0 %1689
        %v1691 = vsel %vm1124, %v1623, 0.0
        %1692 = vadd.xlane.f32.xlu0 %v1691
        %v1693 = vpop.xlane.xlu0 %1692
        %v1694 = vsel %vm1124, %v1625, 0.0
        %1695 = vadd.xlane.f32.xlu0 %v1694
        %v1696 = vpop.xlane.xlu0 %1695
        %v1697 = vsel %vm1124, %v1627, 0.0
        %1698 = vadd.xlane.f32.xlu0 %v1697
        %v1699 = vpop.xlane.xlu0 %1698
        %v1700 = vsel %vm1124, %v1629, 0.0
        %1701 = vadd.xlane.f32.xlu0 %v1700
        %v1702 = vpop.xlane.xlu0 %1701
        %v1703 = vsel %vm1124, %v1631, 0.0
        %1704 = vadd.xlane.f32.xlu0 %v1703
        %v1705 = vpop.xlane.xlu0 %1704
        %v1706 = vsel %vm1124, %v1633, 0.0
        %1707 = vadd.xlane.f32.xlu0 %v1706
        %v1708 = vpop.xlane.xlu0 %1707
        %v1709 = vsel %vm1124, %v1635, 0.0
        %1710 = vadd.xlane.f32.xlu0 %v1709
        %v1711 = vpop.xlane.xlu0 %1710
        %v1712 = vsel %vm1124, %v1637, 0.0
        %1713 = vadd.xlane.f32.xlu0 %v1712
        %v1714 = vpop.xlane.xlu0 %1713
        %v1715 = vsel %vm1124, %v1639, 0.0
        %1716 = vadd.xlane.f32.xlu0 %v1715
        %v1717 = vpop.xlane.xlu0 %1716
        %v1718 = vsel %vm1124, %v1641, 0.0
        %1719 = vadd.xlane.f32.xlu0 %v1718
        %v1720 = vpop.xlane.xlu0 %1719
        %v1721 = vsel %vm1124, %v1643, 0.0
        %1722 = vadd.xlane.f32.xlu0 %v1721
        %v1723 = vpop.xlane.xlu0 %1722
        %v1724 = vsel %vm1124, %v1645, 0.0
        %1725 = vadd.xlane.f32.xlu0 %v1724
        %v1726 = vpop.xlane.xlu0 %1725
        %v1727 = vsel %vm1124, %v1647, 0.0
        %1728 = vadd.xlane.f32.xlu0 %v1727
        %v1729 = vpop.xlane.xlu0 %1728
        %v1730 = vsel %vm1124, %v1649, 0.0
        %1731 = vadd.xlane.f32.xlu0 %v1730
        %v1732 = vpop.xlane.xlu0 %1731
        %v1733 = vsel %vm1124, %v1651, 0.0
        %1734 = vadd.xlane.f32.xlu0 %v1733
        %v1735 = vpop.xlane.xlu0 %1734
        %v1736 = vsel %vm1124, %v1653, 0.0
        %1737 = vadd.xlane.f32.xlu0 %v1736
        %v1738 = vpop.xlane.xlu0 %1737
        %v1739 = vsel %vm1124, %v1655, 0.0
        %1740 = vadd.xlane.f32.xlu0 %v1739
        %v1741 = vpop.xlane.xlu0 %1740
        %v1742 = vsel %vm1124, %v1657, 0.0
        %1743 = vadd.xlane.f32.xlu0 %v1742
        %v1744 = vpop.xlane.xlu0 %1743
        %v1745 = vsel %vm1124, %v1659, 0.0
        %1746 = vadd.xlane.f32.xlu0 %v1745
        %v1747 = vpop.xlane.xlu0 %1746
        %v1748 = vsel %vm1124, %v1661, 0.0
        %1749 = vadd.xlane.f32.xlu0 %v1748
        %v1750 = vpop.xlane.xlu0 %1749
        %v1751 = vsel %vm1124, %v1663, 0.0
        %1752 = vadd.xlane.f32.xlu0 %v1751
        %v1753 = vpop.xlane.xlu0 %1752
        %v1754 = vsel %vm1124, %v1665, 0.0
        %1755 = vadd.xlane.f32.xlu0 %v1754
        %v1756 = vpop.xlane.xlu0 %1755
        %v1757 = vsel %vm1124, %v1667, 0.0
        %1758 = vadd.xlane.f32.xlu0 %v1757
        %v1759 = vpop.xlane.xlu0 %1758
        %v1760 = vsel %vm1124, %v1669, 0.0
        %1761 = vadd.xlane.f32.xlu0 %v1760
        %v1762 = vpop.xlane.xlu0 %1761
        %v1763 = vsel %vm1124, %v1671, 0.0
        %1764 = vadd.xlane.f32.xlu0 %v1763
        %v1765 = vpop.xlane.xlu0 %1764
        %v1766 = vsel %vm1124, %v1673, 0.0
        %1767 = vadd.xlane.f32.xlu0 %v1766
        %v1768 = vpop.xlane.xlu0 %1767
        %v1769 = vsel %vm1124, %v1675, 0.0
        %1770 = vadd.xlane.f32.xlu0 %v1769
        %v1771 = vpop.xlane.xlu0 %1770
        %v1772 = vrcp.pop %v1678
        %v1773 = vmul.f32 %v1613, %v1772
        %v1774 = vrcp.pop %v1681
        %v1775 = vmul.f32 %v1615, %v1774
        %v1776 = vrcp.pop %v1684
        %v1777 = vmul.f32 %v1617, %v1776
        %v1778 = vrcp.pop %v1687
        %v1779 = vmul.f32 %v1619, %v1778
        %v1780 = vrcp.pop %v1690
        %v1781 = vmul.f32 %v1621, %v1780
        %v1782 = vrcp.pop %v1693
        %v1783 = vmul.f32 %v1623, %v1782
        %v1784 = vrcp.pop %v1696
        %v1785 = vmul.f32 %v1625, %v1784
        %v1786 = vrcp.pop %v1699
        %v1787 = vmul.f32 %v1627, %v1786
        %v1788 = vrcp.pop %v1702
        %v1789 = vmul.f32 %v1629, %v1788
        %v1790 = vrcp.pop %v1705
        %v1791 = vmul.f32 %v1631, %v1790
        %v1792 = vrcp.pop %v1708
        %v1793 = vmul.f32 %v1633, %v1792
        %v1794 = vrcp.pop %v1711
        %v1795 = vmul.f32 %v1635, %v1794
        %v1796 = vrcp.pop %v1714
        %v1797 = vmul.f32 %v1637, %v1796
        %v1798 = vrcp.pop %v1717
        %v1799 = vmul.f32 %v1639, %v1798
        %v1800 = vrcp.pop %v1720
        %v1801 = vmul.f32 %v1641, %v1800
        %v1802 = vrcp.pop %v1723
        %v1803 = vmul.f32 %v1643, %v1802
        %v1804 = vrcp.pop %v1726
        %v1805 = vmul.f32 %v1645, %v1804
        %v1806 = vrcp.pop %v1729
        %v1807 = vmul.f32 %v1647, %v1806
        %v1808 = vrcp.pop %v1732
        %v1809 = vmul.f32 %v1649, %v1808
        %v1810 = vrcp.pop %v1735
        %v1811 = vmul.f32 %v1651, %v1810
        %v1812 = vrcp.pop %v1738
        %v1813 = vmul.f32 %v1653, %v1812
        %v1814 = vrcp.pop %v1741
        %v1815 = vmul.f32 %v1655, %v1814
        %v1816 = vrcp.pop %v1744
        %v1817 = vmul.f32 %v1657, %v1816
        %v1818 = vrcp.pop %v1747
        %v1819 = vmul.f32 %v1659, %v1818
        %v1820 = vrcp.pop %v1750
        %v1821 = vmul.f32 %v1661, %v1820
        %v1822 = vrcp.pop %v1753
        %v1823 = vmul.f32 %v1663, %v1822
        %v1824 = vrcp.pop %v1756
        %v1825 = vmul.f32 %v1665, %v1824
        %v1826 = vrcp.pop %v1759
        %v1827 = vmul.f32 %v1667, %v1826
        %v1828 = vrcp.pop %v1762
        %v1829 = vmul.f32 %v1669, %v1828
        %v1830 = vrcp.pop %v1765
        %v1831 = vmul.f32 %v1671, %v1830
        %v1832 = vrcp.pop %v1768
        %v1833 = vmul.f32 %v1673, %v1832
        %v1834 = vrcp.pop %v1771
        %v1835 = vmul.f32 %v1675, %v1834
        %v1837 = vsel %vm1124, %v1773, 0
        %v1840 = vsel %vm1124, %v1775, 0
        %v1843 = vsel %vm1124, %v1777, 0
        %v1846 = vsel %vm1124, %v1779, 0
        %v1849 = vsel %vm1124, %v1781, 0
        %v1852 = vsel %vm1124, %v1783, 0
        %v1855 = vsel %vm1124, %v1785, 0
        %v1858 = vsel %vm1124, %v1787, 0
        %v1861 = vsel %vm1124, %v1789, 0
        %v1864 = vsel %vm1124, %v1791, 0
        %v1867 = vsel %vm1124, %v1793, 0
        %v1870 = vsel %vm1124, %v1795, 0
        %v1873 = vsel %vm1124, %v1797, 0
        %v1876 = vsel %vm1124, %v1799, 0
        %v1879 = vsel %vm1124, %v1801, 0
        %v1882 = vsel %vm1124, %v1803, 0
        %v1885 = vsel %vm1124, %v1805, 0
        %v1888 = vsel %vm1124, %v1807, 0
        %v1891 = vsel %vm1124, %v1809, 0
        %v1894 = vsel %vm1124, %v1811, 0
        %v1897 = vsel %vm1124, %v1813, 0
        %v1900 = vsel %vm1124, %v1815, 0
        %v1903 = vsel %vm1124, %v1817, 0
        %v1906 = vsel %vm1124, %v1819, 0
        %v1909 = vsel %vm1124, %v1821, 0
        %v1912 = vsel %vm1124, %v1823, 0
        %v1915 = vsel %vm1124, %v1825, 0
        %v1918 = vsel %vm1124, %v1827, 0
        %v1921 = vsel %vm1124, %v1829, 0
        %v1924 = vsel %vm1124, %v1831, 0
        %v1927 = vsel %vm1124, %v1833, 0
        %v1930 = vsel %vm1124, %v1835, 0
        %1932 = vmatprep.subr.mxu0 0.0
        %1933 = vmatpush1.msra.mxu0 0.0
        %1934 = vmatprep.subr.mxu0 0.0
        %1935 = vmatpush1.msra.mxu0 0.0
        %1936 = vmatprep.subr.mxu0 0.0
        %1937 = vmatpush1.msra.mxu0 0.0
        %1938 = vmatprep.subr.mxu0 0.0
        %1939 = vmatpush1.msra.mxu0 0.0
        %1940 = vmatprep.subr.mxu0 0.0
        %1941 = vmatpush1.msra.mxu0 0.0
        %1942 = vmatprep.subr.mxu0 0.0
        %1943 = vmatpush1.msra.mxu0 0.0
        %1944 = vmatprep.subr.mxu0 0.0
        %1945 = vmatpush1.msra.mxu0 0.0
        %1946 = vmatprep.subr.mxu0 0.0
        %1947 = vmatpush1.msra.mxu0 0.0
        %1948 = vmatprep.subr.mxu0 0.0
        %1949 = vmatpush1.msra.mxu0 0.0
        %1950 = vmatprep.subr.mxu0 0.0
        %1951 = vmatpush1.msra.mxu0 0.0
        %1952 = vmatprep.subr.mxu0 0.0
        %1953 = vmatpush1.msra.mxu0 0.0
        %1954 = vmatprep.subr.mxu0 0.0
        %1955 = vmatpush1.msra.mxu0 0.0
        %1956 = vmatprep.subr.mxu0 0.0
        %1957 = vmatpush1.msra.mxu0 0.0
        %1958 = vmatprep.subr.mxu0 0.0
        %1959 = vmatpush1.msra.mxu0 0.0
        %1960 = vmatprep.subr.mxu0 0.0
        %1961 = vmatpush1.msra.mxu0 %v1119
        %1962 = vmatprep.subr.mxu0 0.0
        %1963 = vmatpush1.msra.mxu0 %v1114
        %1964 = vmatprep.subr.mxu0 0.0
        %1965 = vmatpush2.msra.mxu0 0.0
        %1966 = vmatprep.subr.mxu0 0.0
        %1967 = vmatpush2.msra.mxu0 0.0
        %1968 = vmatprep.subr.mxu0 0.0
        %1969 = vmatpush2.msra.mxu0 0.0
        %1970 = vmatprep.subr.mxu0 0.0
        %1971 = vmatpush2.msra.mxu0 0.0
        %1972 = vmatprep.subr.mxu0 0.0
        %1973 = vmatpush2.msra.mxu0 0.0
        %1974 = vmatprep.subr.mxu0 0.0
        %1975 = vmatpush2.msra.mxu0 0.0
        %1976 = vmatprep.subr.mxu0 0.0
        %1977 = vmatpush2.msra.mxu0 0.0
        %1978 = vmatprep.subr.mxu0 0.0
        %1979 = vmatpush2.msra.mxu0 0.0
        %1980 = vmatprep.subr.mxu0 0.0
        %1981 = vmatpush2.msra.mxu0 0.0
        %1982 = vmatprep.subr.mxu0 0.0
        %1983 = vmatpush2.msra.mxu0 0.0
        %1984 = vmatprep.subr.mxu0 0.0
        %1985 = vmatpush2.msra.mxu0 0.0
        %1986 = vmatprep.subr.mxu0 0.0
        %1987 = vmatpush2.msra.mxu0 0.0
        %1988 = vmatprep.subr.mxu0 0.0
        %1989 = vmatpush2.msra.mxu0 0.0
        %1990 = vmatprep.subr.mxu0 0.0
        %1991 = vmatpush2.msra.mxu0 0.0
        %1992 = vmatprep.subr.mxu0 0.0
        %1993 = vmatpush2.msra.mxu0 0.0
        %1994 = vmatprep.subr.mxu0 0.0
        %1995 = vmatpush2.msra.mxu0 0.0
        %1996 = vmatprep.mubr.f32.mxu0 0.0
        %1997 = vmatmul.mubr.f32.gmra.mxu0 %v1837
        %v1998 = vpop.f32.mrf.mxu0
        %v1999 = vadd.f32 0.0, %v1998
        %v2000 = vpop.f32.mrf.mxu0
        %2001 = vmatprep.mubr.f32.mxu0 0.0
        %2002 = vmatmul.mubr.f32.gmra.mxu0 %v1840
        %v2003 = vpop.f32.mrf.mxu0
        %v2004 = vadd.f32 0.0, %v2003
        %v2005 = vpop.f32.mrf.mxu0
        %2006 = vmatprep.mubr.f32.mxu0 0.0
        %2007 = vmatmul.mubr.f32.gmra.mxu0 %v1843
        %v2008 = vpop.f32.mrf.mxu0
        %v2009 = vadd.f32 0.0, %v2008
        %v2010 = vpop.f32.mrf.mxu0
        %2011 = vmatprep.mubr.f32.mxu0 0.0
        %2012 = vmatmul.mubr.f32.gmra.mxu0 %v1846
        %v2013 = vpop.f32.mrf.mxu0
        %v2014 = vadd.f32 0.0, %v2013
        %v2015 = vpop.f32.mrf.mxu0
        %2016 = vmatprep.mubr.f32.mxu0 0.0
        %2017 = vmatmul.mubr.f32.gmra.mxu0 %v1849
        %v2018 = vpop.f32.mrf.mxu0
        %v2019 = vadd.f32 0.0, %v2018
        %v2020 = vpop.f32.mrf.mxu0
        %2021 = vmatprep.mubr.f32.mxu0 0.0
        %2022 = vmatmul.mubr.f32.gmra.mxu0 %v1852
        %v2023 = vpop.f32.mrf.mxu0
        %v2024 = vadd.f32 0.0, %v2023
        %v2025 = vpop.f32.mrf.mxu0
        %2026 = vmatprep.mubr.f32.mxu0 0.0
        %2027 = vmatmul.mubr.f32.gmra.mxu0 %v1855
        %v2028 = vpop.f32.mrf.mxu0
        %v2029 = vadd.f32 0.0, %v2028
        %v2030 = vpop.f32.mrf.mxu0
        %2031 = vmatprep.mubr.f32.mxu0 0.0
        %2032 = vmatmul.mubr.f32.gmra.mxu0 %v1858
        %v2033 = vpop.f32.mrf.mxu0
        %v2034 = vadd.f32 0.0, %v2033
        %v2035 = vpop.f32.mrf.mxu0
        %2036 = vmatprep.mubr.f32.mxu0 0.0
        %2037 = vmatmul.mubr.f32.gmra.mxu0 %v1861
        %v2038 = vpop.f32.mrf.mxu0
        %v2039 = vadd.f32 0.0, %v2038
        %v2040 = vpop.f32.mrf.mxu0
        %2041 = vmatprep.mubr.f32.mxu0 0.0
        %2042 = vmatmul.mubr.f32.gmra.mxu0 %v1864
        %v2043 = vpop.f32.mrf.mxu0
        %v2044 = vadd.f32 0.0, %v2043
        %v2045 = vpop.f32.mrf.mxu0
        %2046 = vmatprep.mubr.f32.mxu0 0.0
        %2047 = vmatmul.mubr.f32.gmra.mxu0 %v1867
        %v2048 = vpop.f32.mrf.mxu0
        %v2049 = vadd.f32 0.0, %v2048
        %v2050 = vpop.f32.mrf.mxu0
        %2051 = vmatprep.mubr.f32.mxu0 0.0
        %2052 = vmatmul.mubr.f32.gmra.mxu0 %v1870
        %v2053 = vpop.f32.mrf.mxu0
        %v2054 = vadd.f32 0.0, %v2053
        %v2055 = vpop.f32.mrf.mxu0
        %2056 = vmatprep.mubr.f32.mxu0 0.0
        %2057 = vmatmul.mubr.f32.gmra.mxu0 %v1873
        %v2058 = vpop.f32.mrf.mxu0
        %v2059 = vadd.f32 0.0, %v2058
        %v2060 = vpop.f32.mrf.mxu0
        %2061 = vmatprep.mubr.f32.mxu0 0.0
        %2062 = vmatmul.mubr.f32.gmra.mxu0 %v1876
        %v2063 = vpop.f32.mrf.mxu0
        %v2064 = vadd.f32 0.0, %v2063
        %v2065 = vpop.f32.mrf.mxu0
        %2066 = vmatprep.mubr.f32.mxu0 0.0
        %2067 = vmatmul.mubr.f32.gmra.mxu0 %v1879
        %v2068 = vpop.f32.mrf.mxu0
        %v2069 = vadd.f32 0.0, %v2068
        %v2070 = vpop.f32.mrf.mxu0
        %2071 = vmatprep.mubr.f32.mxu0 0.0
        %2072 = vmatmul.mubr.f32.gmra.mxu0 %v1882
        %v2073 = vpop.f32.mrf.mxu0
        %v2074 = vadd.f32 0.0, %v2073
        %v2075 = vpop.f32.mrf.mxu0
        %2076 = vmatprep.mubr.f32.mxu0 0.0
        %2077 = vmatmul.mubr.f32.gmra.mxu0 %v1885
        %v2078 = vpop.f32.mrf.mxu0
        %v2079 = vadd.f32 0.0, %v2078
        %v2080 = vpop.f32.mrf.mxu0
        %2081 = vmatprep.mubr.f32.mxu0 0.0
        %2082 = vmatmul.mubr.f32.gmra.mxu0 %v1888
        %v2083 = vpop.f32.mrf.mxu0
        %v2084 = vadd.f32 0.0, %v2083
        %v2085 = vpop.f32.mrf.mxu0
        %2086 = vmatprep.mubr.f32.mxu0 0.0
        %2087 = vmatmul.mubr.f32.gmra.mxu0 %v1891
        %v2088 = vpop.f32.mrf.mxu0
        %v2089 = vadd.f32 0.0, %v2088
        %v2090 = vpop.f32.mrf.mxu0
        %2091 = vmatprep.mubr.f32.mxu0 0.0
        %2092 = vmatmul.mubr.f32.gmra.mxu0 %v1894
        %v2093 = vpop.f32.mrf.mxu0
        %v2094 = vadd.f32 0.0, %v2093
        %v2095 = vpop.f32.mrf.mxu0
        %2096 = vmatprep.mubr.f32.mxu0 0.0
        %2097 = vmatmul.mubr.f32.gmra.mxu0 %v1897
        %v2098 = vpop.f32.mrf.mxu0
        %v2099 = vadd.f32 0.0, %v2098
        %v2100 = vpop.f32.mrf.mxu0
        %2101 = vmatprep.mubr.f32.mxu0 0.0
        %2102 = vmatmul.mubr.f32.gmra.mxu0 %v1900
        %v2103 = vpop.f32.mrf.mxu0
        %v2104 = vadd.f32 0.0, %v2103
        %v2105 = vpop.f32.mrf.mxu0
        %2106 = vmatprep.mubr.f32.mxu0 0.0
        %2107 = vmatmul.mubr.f32.gmra.mxu0 %v1903
        %v2108 = vpop.f32.mrf.mxu0
        %v2109 = vadd.f32 0.0, %v2108
        %v2110 = vpop.f32.mrf.mxu0
        %2111 = vmatprep.mubr.f32.mxu0 0.0
        %2112 = vmatmul.mubr.f32.gmra.mxu0 %v1906
        %v2113 = vpop.f32.mrf.mxu0
        %v2114 = vadd.f32 0.0, %v2113
        %v2115 = vpop.f32.mrf.mxu0
        %2116 = vmatprep.mubr.f32.mxu0 0.0
        %2117 = vmatmul.mubr.f32.gmra.mxu0 %v1909
        %v2118 = vpop.f32.mrf.mxu0
        %v2119 = vadd.f32 0.0, %v2118
        %v2120 = vpop.f32.mrf.mxu0
        %2121 = vmatprep.mubr.f32.mxu0 0.0
        %2122 = vmatmul.mubr.f32.gmra.mxu0 %v1912
        %v2123 = vpop.f32.mrf.mxu0
        %v2124 = vadd.f32 0.0, %v2123
        %v2125 = vpop.f32.mrf.mxu0
        %2126 = vmatprep.mubr.f32.mxu0 0.0
        %2127 = vmatmul.mubr.f32.gmra.mxu0 %v1915
        %v2128 = vpop.f32.mrf.mxu0
        %v2129 = vadd.f32 0.0, %v2128
        %v2130 = vpop.f32.mrf.mxu0
        %2131 = vmatprep.mubr.f32.mxu0 0.0
        %2132 = vmatmul.mubr.f32.gmra.mxu0 %v1918
        %v2133 = vpop.f32.mrf.mxu0
        %v2134 = vadd.f32 0.0, %v2133
        %v2135 = vpop.f32.mrf.mxu0
        %2136 = vmatprep.mubr.f32.mxu0 0.0
        %2137 = vmatmul.mubr.f32.gmra.mxu0 %v1921
        %v2138 = vpop.f32.mrf.mxu0
        %v2139 = vadd.f32 0.0, %v2138
        %v2140 = vpop.f32.mrf.mxu0
        %2141 = vmatprep.mubr.f32.mxu0 0.0
        %2142 = vmatmul.mubr.f32.gmra.mxu0 %v1924
        %v2143 = vpop.f32.mrf.mxu0
        %v2144 = vadd.f32 0.0, %v2143
        %v2145 = vpop.f32.mrf.mxu0
        %2146 = vmatprep.mubr.f32.mxu0 0.0
        %2147 = vmatmul.mubr.f32.gmra.mxu0 %v1927
        %v2148 = vpop.f32.mrf.mxu0
        %v2149 = vadd.f32 0.0, %v2148
        %v2150 = vpop.f32.mrf.mxu0
        %2151 = vmatprep.mubr.f32.mxu0 0.0
        %2152 = vmatmul.mubr.f32.gmra.mxu0 %v1930
        %v2153 = vpop.f32.mrf.mxu0
        %v2154 = vadd.f32 0.0, %v2153
        %v2155 = vpop.f32.mrf.mxu0
        %2156 = vdwg.mxu0
        %2157 = vst.msk [vmem:[%s521] sm:$0xff] %vm1124, %v1999
        %2158 = vst.msk [vmem:[%s521 + $0x8] sm:$0xff] %vm1124, %v2004
        %2159 = vst.msk [vmem:[%s521 + $0x10] sm:$0xff] %vm1124, %v2009
        %2160 = vst.msk [vmem:[%s521 + $0x18] sm:$0xff] %vm1124, %v2014
        %2161 = vst.msk [vmem:[%s521 + $0x20] sm:$0xff] %vm1124, %v2019
        %2162 = vst.msk [vmem:[%s521 + $0x28] sm:$0xff] %vm1124, %v2024
        %2163 = vst.msk [vmem:[%s521 + $0x30] sm:$0xff] %vm1124, %v2029
        %2164 = vst.msk [vmem:[%s521 + $0x38] sm:$0xff] %vm1124, %v2034
        %2165 = vst.msk [vmem:[%s521 + $0x40] sm:$0xff] %vm1124, %v2039
        %2166 = vst.msk [vmem:[%s521 + $0x48] sm:$0xff] %vm1124, %v2044
        %2167 = vst.msk [vmem:[%s521 + $0x50] sm:$0xff] %vm1124, %v2049
        %2168 = vst.msk [vmem:[%s521 + $0x58] sm:$0xff] %vm1124, %v2054
        %2169 = vst.msk [vmem:[%s521 + $0x60] sm:$0xff] %vm1124, %v2059
        %2170 = vst.msk [vmem:[%s521 + $0x68] sm:$0xff] %vm1124, %v2064
        %2171 = vst.msk [vmem:[%s521 + $0x70] sm:$0xff] %vm1124, %v2069
        %2172 = vst.msk [vmem:[%s521 + $0x78] sm:$0xff] %vm1124, %v2074
        %2173 = vst.msk [vmem:[%s521 + $0x80] sm:$0xff] %vm1124, %v2079
        %2174 = vst.msk [vmem:[%s521 + $0x88] sm:$0xff] %vm1124, %v2084
        %2175 = vst.msk [vmem:[%s521 + $0x90] sm:$0xff] %vm1124, %v2089
        %2176 = vst.msk [vmem:[%s521 + $0x98] sm:$0xff] %vm1124, %v2094
        %2177 = vst.msk [vmem:[%s521 + $0xa0] sm:$0xff] %vm1124, %v2099
        %2178 = vst.msk [vmem:[%s521 + $0xa8] sm:$0xff] %vm1124, %v2104
        %2179 = vst.msk [vmem:[%s521 + $0xb0] sm:$0xff] %vm1124, %v2109
        %2180 = vst.msk [vmem:[%s521 + $0xb8] sm:$0xff] %vm1124, %v2114
        %2181 = vst.msk [vmem:[%s521 + $0xc0] sm:$0xff] %vm1124, %v2119
        %2182 = vst.msk [vmem:[%s521 + $0xc8] sm:$0xff] %vm1124, %v2124
        %2183 = vst.msk [vmem:[%s521 + $0xd0] sm:$0xff] %vm1124, %v2129
        %2184 = vst.msk [vmem:[%s521 + $0xd8] sm:$0xff] %vm1124, %v2134
        %2185 = vst.msk [vmem:[%s521 + $0xe0] sm:$0xff] %vm1124, %v2139
        %2186 = vst.msk [vmem:[%s521 + $0xe8] sm:$0xff] %vm1124, %v2144
        %2187 = vst.msk [vmem:[%s521 + $0xf0] sm:$0xff] %vm1124, %v2149
        %2188 = vst.msk [vmem:[%s521 + $0xf8] sm:$0xff] %vm1124, %v2154
        %2189 = vrot.lane.b32.xlu0 %v786, 112
        %v2190 = vpop.permute.xlu0 %2189
        %2191 = vrot.lane.b32.xlu0 %v791, 112
        %v2192 = vpop.permute.xlu0 %2191
        %2193 = vrot.lane.b32.xlu0 %v796, 112
        %v2194 = vpop.permute.xlu0 %2193
        %2195 = vrot.lane.b32.xlu0 %v801, 112
        %v2196 = vpop.permute.xlu0 %2195
        %2197 = vrot.lane.b32.xlu0 %v806, 112
        %v2198 = vpop.permute.xlu0 %2197
        %2199 = vrot.lane.b32.xlu0 %v811, 112
        %v2200 = vpop.permute.xlu0 %2199
        %2201 = vrot.lane.b32.xlu0 %v816, 112
        %v2202 = vpop.permute.xlu0 %2201
        %2203 = vrot.lane.b32.xlu0 %v821, 112
        %v2204 = vpop.permute.xlu0 %2203
        %2205 = vrot.lane.b32.xlu0 %v826, 112
        %v2206 = vpop.permute.xlu0 %2205
        %2207 = vrot.lane.b32.xlu0 %v831, 112
        %v2208 = vpop.permute.xlu0 %2207
        %2209 = vrot.lane.b32.xlu0 %v836, 112
        %v2210 = vpop.permute.xlu0 %2209
        %2211 = vrot.lane.b32.xlu0 %v841, 112
        %v2212 = vpop.permute.xlu0 %2211
        %2213 = vrot.lane.b32.xlu0 %v846, 112
        %v2214 = vpop.permute.xlu0 %2213
        %2215 = vrot.lane.b32.xlu0 %v851, 112
        %v2216 = vpop.permute.xlu0 %2215
        %2217 = vrot.lane.b32.xlu0 %v856, 112
        %v2218 = vpop.permute.xlu0 %2217
        %2219 = vrot.lane.b32.xlu0 %v861, 112
        %v2220 = vpop.permute.xlu0 %2219
        %2221 = vrot.lane.b32.xlu0 %v866, 112
        %v2222 = vpop.permute.xlu0 %2221
        %2223 = vrot.lane.b32.xlu0 %v871, 112
        %v2224 = vpop.permute.xlu0 %2223
        %2225 = vrot.lane.b32.xlu0 %v876, 112
        %v2226 = vpop.permute.xlu0 %2225
        %2227 = vrot.lane.b32.xlu0 %v881, 112
        %v2228 = vpop.permute.xlu0 %2227
        %2229 = vrot.lane.b32.xlu0 %v886, 112
        %v2230 = vpop.permute.xlu0 %2229
        %2231 = vrot.lane.b32.xlu0 %v891, 112
        %v2232 = vpop.permute.xlu0 %2231
        %2233 = vrot.lane.b32.xlu0 %v896, 112
        %v2234 = vpop.permute.xlu0 %2233
        %2235 = vrot.lane.b32.xlu0 %v901, 112
        %v2236 = vpop.permute.xlu0 %2235
        %2237 = vrot.lane.b32.xlu0 %v906, 112
        %v2238 = vpop.permute.xlu0 %2237
        %2239 = vrot.lane.b32.xlu0 %v911, 112
        %v2240 = vpop.permute.xlu0 %2239
        %2241 = vrot.lane.b32.xlu0 %v916, 112
        %v2242 = vpop.permute.xlu0 %2241
        %2243 = vrot.lane.b32.xlu0 %v921, 112
        %v2244 = vpop.permute.xlu0 %2243
        %2245 = vrot.lane.b32.xlu0 %v926, 112
        %v2246 = vpop.permute.xlu0 %2245
        %2247 = vrot.lane.b32.xlu0 %v931, 112
        %v2248 = vpop.permute.xlu0 %2247
        %2249 = vrot.lane.b32.xlu0 %v936, 112
        %v2250 = vpop.permute.xlu0 %2249
        %2251 = vrot.lane.b32.xlu0 %v941, 112
        %v2252 = vpop.permute.xlu0 %2251
        %2253 = vrot.lane.b32.xlu0 %v1028, 112
        %v2254 = vpop.permute.xlu0 %2253
        %2255 = vrot.lane.b32.xlu0 %v1033, 112
        %v2256 = vpop.permute.xlu0 %2255
        %v2257 = vsel %vm1124, %v2190, 0
        %v2259 = vsel %vm1124, %v2192, 0
        %v2261 = vsel %vm1124, %v2194, 0
        %v2263 = vsel %vm1124, %v2196, 0
        %v2265 = vsel %vm1124, %v2198, 0
        %v2267 = vsel %vm1124, %v2200, 0
        %v2269 = vsel %vm1124, %v2202, 0
        %v2271 = vsel %vm1124, %v2204, 0
        %v2273 = vsel %vm1124, %v2206, 0
        %v2275 = vsel %vm1124, %v2208, 0
        %v2277 = vsel %vm1124, %v2210, 0
        %v2279 = vsel %vm1124, %v2212, 0
        %v2281 = vsel %vm1124, %v2214, 0
        %v2283 = vsel %vm1124, %v2216, 0
        %v2285 = vsel %vm1124, %v2218, 0
        %v2287 = vsel %vm1124, %v2220, 0
        %v2289 = vsel %vm1124, %v2222, 0
        %v2291 = vsel %vm1124, %v2224, 0
        %v2293 = vsel %vm1124, %v2226, 0
        %v2295 = vsel %vm1124, %v2228, 0
        %v2297 = vsel %vm1124, %v2230, 0
        %v2299 = vsel %vm1124, %v2232, 0
        %v2301 = vsel %vm1124, %v2234, 0
        %v2303 = vsel %vm1124, %v2236, 0
        %v2305 = vsel %vm1124, %v2238, 0
        %v2307 = vsel %vm1124, %v2240, 0
        %v2309 = vsel %vm1124, %v2242, 0
        %v2311 = vsel %vm1124, %v2244, 0
        %v2313 = vsel %vm1124, %v2246, 0
        %v2315 = vsel %vm1124, %v2248, 0
        %v2317 = vsel %vm1124, %v2250, 0
        %v2319 = vsel %vm1124, %v2252, 0
        %v2321 = vsel %vm1124, %v2254, 0
        %v2323 = vsel %vm1124, %v2256, 0
        %2325 = vmatprep.subr.mxu0 0.0
        %2326 = vmatpush1.xpose.msra.mxu0 0.0
        %2327 = vmatprep.subr.mxu0 0.0
        %2328 = vmatpush1.xpose.msra.mxu0 0.0
        %2329 = vmatprep.subr.mxu0 0.0
        %2330 = vmatpush1.xpose.msra.mxu0 0.0
        %2331 = vmatprep.subr.mxu0 0.0
        %2332 = vmatpush1.xpose.msra.mxu0 0.0
        %2333 = vmatprep.subr.mxu0 0.0
        %2334 = vmatpush1.xpose.msra.mxu0 0.0
        %2335 = vmatprep.subr.mxu0 0.0
        %2336 = vmatpush1.xpose.msra.mxu0 0.0
        %2337 = vmatprep.subr.mxu0 0.0
        %2338 = vmatpush1.xpose.msra.mxu0 0.0
        %2339 = vmatprep.subr.mxu0 0.0
        %2340 = vmatpush1.xpose.msra.mxu0 0.0
        %2341 = vmatprep.subr.mxu0 0.0
        %2342 = vmatpush1.xpose.msra.mxu0 0.0
        %2343 = vmatprep.subr.mxu0 0.0
        %2344 = vmatpush1.xpose.msra.mxu0 0.0
        %2345 = vmatprep.subr.mxu0 0.0
        %2346 = vmatpush1.xpose.msra.mxu0 0.0
        %2347 = vmatprep.subr.mxu0 0.0
        %2348 = vmatpush1.xpose.msra.mxu0 0.0
        %2349 = vmatprep.subr.mxu0 0.0
        %2350 = vmatpush1.xpose.msra.mxu0 0.0
        %2351 = vmatprep.subr.mxu0 0.0
        %2352 = vmatpush1.xpose.msra.mxu0 0.0
        %2353 = vmatprep.subr.mxu0 0.0
        %2354 = vmatpush1.xpose.msra.mxu0 %v2323
        %2355 = vmatprep.subr.mxu0 0.0
        %2356 = vmatpush1.xpose.msra.mxu0 %v2321
        %2357 = vmatprep.subr.mxu0 0.0
        %2358 = vmatpush2.xpose.msra.mxu0 0.0
        %2359 = vmatprep.subr.mxu0 0.0
        %2360 = vmatpush2.xpose.msra.mxu0 0.0
        %2361 = vmatprep.subr.mxu0 0.0
        %2362 = vmatpush2.xpose.msra.mxu0 0.0
        %2363 = vmatprep.subr.mxu0 0.0
        %2364 = vmatpush2.xpose.msra.mxu0 0.0
        %2365 = vmatprep.subr.mxu0 0.0
        %2366 = vmatpush2.xpose.msra.mxu0 0.0
        %2367 = vmatprep.subr.mxu0 0.0
        %2368 = vmatpush2.xpose.msra.mxu0 0.0
        %2369 = vmatprep.subr.mxu0 0.0
        %2370 = vmatpush2.xpose.msra.mxu0 0.0
        %2371 = vmatprep.subr.mxu0 0.0
        %2372 = vmatpush2.xpose.msra.mxu0 0.0
        %2373 = vmatprep.subr.mxu0 0.0
        %2374 = vmatpush2.xpose.msra.mxu0 0.0
        %2375 = vmatprep.subr.mxu0 0.0
        %2376 = vmatpush2.xpose.msra.mxu0 0.0
        %2377 = vmatprep.subr.mxu0 0.0
        %2378 = vmatpush2.xpose.msra.mxu0 0.0
        %2379 = vmatprep.subr.mxu0 0.0
        %2380 = vmatpush2.xpose.msra.mxu0 0.0
        %2381 = vmatprep.subr.mxu0 0.0
        %2382 = vmatpush2.xpose.msra.mxu0 0.0
        %2383 = vmatprep.subr.mxu0 0.0
        %2384 = vmatpush2.xpose.msra.mxu0 0.0
        %2385 = vmatprep.subr.mxu0 0.0
        %2386 = vmatpush2.xpose.msra.mxu0 0.0
        %2387 = vmatprep.subr.mxu0 0.0
        %2388 = vmatpush2.xpose.msra.mxu0 0.0
        %2389 = vmatprep.mubr.f32.mxu0 0.0
        %2390 = vmatmul.mubr.f32.gmra.mxu0 %v2257
        %v2391 = vpop.f32.mrf.mxu0
        %v2392 = vadd.f32 0.0, %v2391
        %v2393 = vpop.f32.mrf.mxu0
        %2394 = vmatprep.mubr.f32.mxu0 0.0
        %2395 = vmatmul.mubr.f32.gmra.mxu0 %v2259
        %v2396 = vpop.f32.mrf.mxu0
        %v2397 = vadd.f32 0.0, %v2396
        %v2398 = vpop.f32.mrf.mxu0
        %2399 = vmatprep.mubr.f32.mxu0 0.0
        %2400 = vmatmul.mubr.f32.gmra.mxu0 %v2261
        %v2401 = vpop.f32.mrf.mxu0
        %v2402 = vadd.f32 0.0, %v2401
        %v2403 = vpop.f32.mrf.mxu0
        %2404 = vmatprep.mubr.f32.mxu0 0.0
        %2405 = vmatmul.mubr.f32.gmra.mxu0 %v2263
        %v2406 = vpop.f32.mrf.mxu0
        %v2407 = vadd.f32 0.0, %v2406
        %v2408 = vpop.f32.mrf.mxu0
        %2409 = vmatprep.mubr.f32.mxu0 0.0
        %2410 = vmatmul.mubr.f32.gmra.mxu0 %v2265
        %v2411 = vpop.f32.mrf.mxu0
        %v2412 = vadd.f32 0.0, %v2411
        %v2413 = vpop.f32.mrf.mxu0
        %2414 = vmatprep.mubr.f32.mxu0 0.0
        %2415 = vmatmul.mubr.f32.gmra.mxu0 %v2267
        %v2416 = vpop.f32.mrf.mxu0
        %v2417 = vadd.f32 0.0, %v2416
        %v2418 = vpop.f32.mrf.mxu0
        %2419 = vmatprep.mubr.f32.mxu0 0.0
        %2420 = vmatmul.mubr.f32.gmra.mxu0 %v2269
        %v2421 = vpop.f32.mrf.mxu0
        %v2422 = vadd.f32 0.0, %v2421
        %v2423 = vpop.f32.mrf.mxu0
        %2424 = vmatprep.mubr.f32.mxu0 0.0
        %2425 = vmatmul.mubr.f32.gmra.mxu0 %v2271
        %v2426 = vpop.f32.mrf.mxu0
        %v2427 = vadd.f32 0.0, %v2426
        %v2428 = vpop.f32.mrf.mxu0
        %2429 = vmatprep.mubr.f32.mxu0 0.0
        %2430 = vmatmul.mubr.f32.gmra.mxu0 %v2273
        %v2431 = vpop.f32.mrf.mxu0
        %v2432 = vadd.f32 0.0, %v2431
        %v2433 = vpop.f32.mrf.mxu0
        %2434 = vmatprep.mubr.f32.mxu0 0.0
        %2435 = vmatmul.mubr.f32.gmra.mxu0 %v2275
        %v2436 = vpop.f32.mrf.mxu0
        %v2437 = vadd.f32 0.0, %v2436
        %v2438 = vpop.f32.mrf.mxu0
        %2439 = vmatprep.mubr.f32.mxu0 0.0
        %2440 = vmatmul.mubr.f32.gmra.mxu0 %v2277
        %v2441 = vpop.f32.mrf.mxu0
        %v2442 = vadd.f32 0.0, %v2441
        %v2443 = vpop.f32.mrf.mxu0
        %2444 = vmatprep.mubr.f32.mxu0 0.0
        %2445 = vmatmul.mubr.f32.gmra.mxu0 %v2279
        %v2446 = vpop.f32.mrf.mxu0
        %v2447 = vadd.f32 0.0, %v2446
        %v2448 = vpop.f32.mrf.mxu0
        %2449 = vmatprep.mubr.f32.mxu0 0.0
        %2450 = vmatmul.mubr.f32.gmra.mxu0 %v2281
        %v2451 = vpop.f32.mrf.mxu0
        %v2452 = vadd.f32 0.0, %v2451
        %v2453 = vpop.f32.mrf.mxu0
        %2454 = vmatprep.mubr.f32.mxu0 0.0
        %2455 = vmatmul.mubr.f32.gmra.mxu0 %v2283
        %v2456 = vpop.f32.mrf.mxu0
        %v2457 = vadd.f32 0.0, %v2456
        %v2458 = vpop.f32.mrf.mxu0
        %2459 = vmatprep.mubr.f32.mxu0 0.0
        %2460 = vmatmul.mubr.f32.gmra.mxu0 %v2285
        %v2461 = vpop.f32.mrf.mxu0
        %v2462 = vadd.f32 0.0, %v2461
        %v2463 = vpop.f32.mrf.mxu0
        %2464 = vmatprep.mubr.f32.mxu0 0.0
        %2465 = vmatmul.mubr.f32.gmra.mxu0 %v2287
        %v2466 = vpop.f32.mrf.mxu0
        %v2467 = vadd.f32 0.0, %v2466
        %v2468 = vpop.f32.mrf.mxu0
        %2469 = vmatprep.mubr.f32.mxu0 0.0
        %2470 = vmatmul.mubr.f32.gmra.mxu0 %v2289
        %v2471 = vpop.f32.mrf.mxu0
        %v2472 = vadd.f32 0.0, %v2471
        %v2473 = vpop.f32.mrf.mxu0
        %2474 = vmatprep.mubr.f32.mxu0 0.0
        %2475 = vmatmul.mubr.f32.gmra.mxu0 %v2291
        %v2476 = vpop.f32.mrf.mxu0
        %v2477 = vadd.f32 0.0, %v2476
        %v2478 = vpop.f32.mrf.mxu0
        %2479 = vmatprep.mubr.f32.mxu0 0.0
        %2480 = vmatmul.mubr.f32.gmra.mxu0 %v2293
        %v2481 = vpop.f32.mrf.mxu0
        %v2482 = vadd.f32 0.0, %v2481
        %v2483 = vpop.f32.mrf.mxu0
        %2484 = vmatprep.mubr.f32.mxu0 0.0
        %2485 = vmatmul.mubr.f32.gmra.mxu0 %v2295
        %v2486 = vpop.f32.mrf.mxu0
        %v2487 = vadd.f32 0.0, %v2486
        %v2488 = vpop.f32.mrf.mxu0
        %2489 = vmatprep.mubr.f32.mxu0 0.0
        %2490 = vmatmul.mubr.f32.gmra.mxu0 %v2297
        %v2491 = vpop.f32.mrf.mxu0
        %v2492 = vadd.f32 0.0, %v2491
        %v2493 = vpop.f32.mrf.mxu0
        %2494 = vmatprep.mubr.f32.mxu0 0.0
        %2495 = vmatmul.mubr.f32.gmra.mxu0 %v2299
        %v2496 = vpop.f32.mrf.mxu0
        %v2497 = vadd.f32 0.0, %v2496
        %v2498 = vpop.f32.mrf.mxu0
        %2499 = vmatprep.mubr.f32.mxu0 0.0
        %2500 = vmatmul.mubr.f32.gmra.mxu0 %v2301
        %v2501 = vpop.f32.mrf.mxu0
        %v2502 = vadd.f32 0.0, %v2501
        %v2503 = vpop.f32.mrf.mxu0
        %2504 = vmatprep.mubr.f32.mxu0 0.0
        %2505 = vmatmul.mubr.f32.gmra.mxu0 %v2303
        %v2506 = vpop.f32.mrf.mxu0
        %v2507 = vadd.f32 0.0, %v2506
        %v2508 = vpop.f32.mrf.mxu0
        %2509 = vmatprep.mubr.f32.mxu0 0.0
        %2510 = vmatmul.mubr.f32.gmra.mxu0 %v2305
        %v2511 = vpop.f32.mrf.mxu0
        %v2512 = vadd.f32 0.0, %v2511
        %v2513 = vpop.f32.mrf.mxu0
        %2514 = vmatprep.mubr.f32.mxu0 0.0
        %2515 = vmatmul.mubr.f32.gmra.mxu0 %v2307
        %v2516 = vpop.f32.mrf.mxu0
        %v2517 = vadd.f32 0.0, %v2516
        %v2518 = vpop.f32.mrf.mxu0
        %2519 = vmatprep.mubr.f32.mxu0 0.0
        %2520 = vmatmul.mubr.f32.gmra.mxu0 %v2309
        %v2521 = vpop.f32.mrf.mxu0
        %v2522 = vadd.f32 0.0, %v2521
        %v2523 = vpop.f32.mrf.mxu0
        %2524 = vmatprep.mubr.f32.mxu0 0.0
        %2525 = vmatmul.mubr.f32.gmra.mxu0 %v2311
        %v2526 = vpop.f32.mrf.mxu0
        %v2527 = vadd.f32 0.0, %v2526
        %v2528 = vpop.f32.mrf.mxu0
        %2529 = vmatprep.mubr.f32.mxu0 0.0
        %2530 = vmatmul.mubr.f32.gmra.mxu0 %v2313
        %v2531 = vpop.f32.mrf.mxu0
        %v2532 = vadd.f32 0.0, %v2531
        %v2533 = vpop.f32.mrf.mxu0
        %2534 = vmatprep.mubr.f32.mxu0 0.0
        %2535 = vmatmul.mubr.f32.gmra.mxu0 %v2315
        %v2536 = vpop.f32.mrf.mxu0
        %v2537 = vadd.f32 0.0, %v2536
        %v2538 = vpop.f32.mrf.mxu0
        %2539 = vmatprep.mubr.f32.mxu0 0.0
        %2540 = vmatmul.mubr.f32.gmra.mxu0 %v2317
        %v2541 = vpop.f32.mrf.mxu0
        %v2542 = vadd.f32 0.0, %v2541
        %v2543 = vpop.f32.mrf.mxu0
        %2544 = vmatprep.mubr.f32.mxu0 0.0
        %2545 = vmatmul.mubr.f32.gmra.mxu0 %v2319
        %v2546 = vpop.f32.mrf.mxu0
        %v2547 = vadd.f32 0.0, %v2546
        %v2548 = vpop.f32.mrf.mxu0
        %2549 = vdwg.mxu0
        %v2550 = vmul.f32 %v2392, 0.25
        %v2551 = vmul.f32 %v2397, 0.25
        %v2552 = vmul.f32 %v2402, 0.25
        %v2553 = vmul.f32 %v2407, 0.25
        %v2554 = vmul.f32 %v2412, 0.25
        %v2555 = vmul.f32 %v2417, 0.25
        %v2556 = vmul.f32 %v2422, 0.25
        %v2557 = vmul.f32 %v2427, 0.25
        %v2558 = vmul.f32 %v2432, 0.25
        %v2559 = vmul.f32 %v2437, 0.25
        %v2560 = vmul.f32 %v2442, 0.25
        %v2561 = vmul.f32 %v2447, 0.25
        %v2562 = vmul.f32 %v2452, 0.25
        %v2563 = vmul.f32 %v2457, 0.25
        %v2564 = vmul.f32 %v2462, 0.25
        %v2565 = vmul.f32 %v2467, 0.25
        %v2566 = vmul.f32 %v2472, 0.25
        %v2567 = vmul.f32 %v2477, 0.25
        %v2568 = vmul.f32 %v2482, 0.25
        %v2569 = vmul.f32 %v2487, 0.25
        %v2570 = vmul.f32 %v2492, 0.25
        %v2571 = vmul.f32 %v2497, 0.25
        %v2572 = vmul.f32 %v2502, 0.25
        %v2573 = vmul.f32 %v2507, 0.25
        %v2574 = vmul.f32 %v2512, 0.25
        %v2575 = vmul.f32 %v2517, 0.25
        %v2576 = vmul.f32 %v2522, 0.25
        %v2577 = vmul.f32 %v2527, 0.25
        %v2578 = vmul.f32 %v2532, 0.25
        %v2579 = vmul.f32 %v2537, 0.25
        %v2580 = vmul.f32 %v2542, 0.25
        %v2581 = vmul.f32 %v2547, 0.25
        %v2582 = vsel %vm1124, %v2550, -inf
        %2583 = vmax.xlane.f32.xlu0 %v2582
        %v2584 = vpop.xlane.xlu0 %2583
        %v2585 = vsel %vm1124, %v2551, -inf
        %2586 = vmax.xlane.f32.xlu0 %v2585
        %v2587 = vpop.xlane.xlu0 %2586
        %v2588 = vsel %vm1124, %v2552, -inf
        %2589 = vmax.xlane.f32.xlu0 %v2588
        %v2590 = vpop.xlane.xlu0 %2589
        %v2591 = vsel %vm1124, %v2553, -inf
        %2592 = vmax.xlane.f32.xlu0 %v2591
        %v2593 = vpop.xlane.xlu0 %2592
        %v2594 = vsel %vm1124, %v2554, -inf
        %2595 = vmax.xlane.f32.xlu0 %v2594
        %v2596 = vpop.xlane.xlu0 %2595
        %v2597 = vsel %vm1124, %v2555, -inf
        %2598 = vmax.xlane.f32.xlu0 %v2597
        %v2599 = vpop.xlane.xlu0 %2598
        %v2600 = vsel %vm1124, %v2556, -inf
        %2601 = vmax.xlane.f32.xlu0 %v2600
        %v2602 = vpop.xlane.xlu0 %2601
        %v2603 = vsel %vm1124, %v2557, -inf
        %2604 = vmax.xlane.f32.xlu0 %v2603
        %v2605 = vpop.xlane.xlu0 %2604
        %v2606 = vsel %vm1124, %v2558, -inf
        %2607 = vmax.xlane.f32.xlu0 %v2606
        %v2608 = vpop.xlane.xlu0 %2607
        %v2609 = vsel %vm1124, %v2559, -inf
        %2610 = vmax.xlane.f32.xlu0 %v2609
        %v2611 = vpop.xlane.xlu0 %2610
        %v2612 = vsel %vm1124, %v2560, -inf
        %2613 = vmax.xlane.f32.xlu0 %v2612
        %v2614 = vpop.xlane.xlu0 %2613
        %v2615 = vsel %vm1124, %v2561, -inf
        %2616 = vmax.xlane.f32.xlu0 %v2615
        %v2617 = vpop.xlane.xlu0 %2616
        %v2618 = vsel %vm1124, %v2562, -inf
        %2619 = vmax.xlane.f32.xlu0 %v2618
        %v2620 = vpop.xlane.xlu0 %2619
        %v2621 = vsel %vm1124, %v2563, -inf
        %2622 = vmax.xlane.f32.xlu0 %v2621
        %v2623 = vpop.xlane.xlu0 %2622
        %v2624 = vsel %vm1124, %v2564, -inf
        %2625 = vmax.xlane.f32.xlu0 %v2624
        %v2626 = vpop.xlane.xlu0 %2625
        %v2627 = vsel %vm1124, %v2565, -inf
        %2628 = vmax.xlane.f32.xlu0 %v2627
        %v2629 = vpop.xlane.xlu0 %2628
        %v2630 = vsel %vm1124, %v2566, -inf
        %2631 = vmax.xlane.f32.xlu0 %v2630
        %v2632 = vpop.xlane.xlu0 %2631
        %v2633 = vsel %vm1124, %v2567, -inf
        %2634 = vmax.xlane.f32.xlu0 %v2633
        %v2635 = vpop.xlane.xlu0 %2634
        %v2636 = vsel %vm1124, %v2568, -inf
        %2637 = vmax.xlane.f32.xlu0 %v2636
        %v2638 = vpop.xlane.xlu0 %2637
        %v2639 = vsel %vm1124, %v2569, -inf
        %2640 = vmax.xlane.f32.xlu0 %v2639
        %v2641 = vpop.xlane.xlu0 %2640
        %v2642 = vsel %vm1124, %v2570, -inf
        %2643 = vmax.xlane.f32.xlu0 %v2642
        %v2644 = vpop.xlane.xlu0 %2643
        %v2645 = vsel %vm1124, %v2571, -inf
        %2646 = vmax.xlane.f32.xlu0 %v2645
        %v2647 = vpop.xlane.xlu0 %2646
        %v2648 = vsel %vm1124, %v2572, -inf
        %2649 = vmax.xlane.f32.xlu0 %v2648
        %v2650 = vpop.xlane.xlu0 %2649
        %v2651 = vsel %vm1124, %v2573, -inf
        %2652 = vmax.xlane.f32.xlu0 %v2651
        %v2653 = vpop.xlane.xlu0 %2652
        %v2654 = vsel %vm1124, %v2574, -inf
        %2655 = vmax.xlane.f32.xlu0 %v2654
        %v2656 = vpop.xlane.xlu0 %2655
        %v2657 = vsel %vm1124, %v2575, -inf
        %2658 = vmax.xlane.f32.xlu0 %v2657
        %v2659 = vpop.xlane.xlu0 %2658
        %v2660 = vsel %vm1124, %v2576, -inf
        %2661 = vmax.xlane.f32.xlu0 %v2660
        %v2662 = vpop.xlane.xlu0 %2661
        %v2663 = vsel %vm1124, %v2577, -inf
        %2664 = vmax.xlane.f32.xlu0 %v2663
        %v2665 = vpop.xlane.xlu0 %2664
        %v2666 = vsel %vm1124, %v2578, -inf
        %2667 = vmax.xlane.f32.xlu0 %v2666
        %v2668 = vpop.xlane.xlu0 %2667
        %v2669 = vsel %vm1124, %v2579, -inf
        %2670 = vmax.xlane.f32.xlu0 %v2669
        %v2671 = vpop.xlane.xlu0 %2670
        %v2672 = vsel %vm1124, %v2580, -inf
        %2673 = vmax.xlane.f32.xlu0 %v2672
        %v2674 = vpop.xlane.xlu0 %2673
        %v2675 = vsel %vm1124, %v2581, -inf
        %2676 = vmax.xlane.f32.xlu0 %v2675
        %v2677 = vpop.xlane.xlu0 %2676
        %v2678 = vsub.f32 %v2550, %v2584
        %v2679 = vsub.f32 %v2551, %v2587
        %v2680 = vsub.f32 %v2552, %v2590
        %v2681 = vsub.f32 %v2553, %v2593
        %v2682 = vsub.f32 %v2554, %v2596
        %v2683 = vsub.f32 %v2555, %v2599
        %v2684 = vsub.f32 %v2556, %v2602
        %v2685 = vsub.f32 %v2557, %v2605
        %v2686 = vsub.f32 %v2558, %v2608
        %v2687 = vsub.f32 %v2559, %v2611
        %v2688 = vsub.f32 %v2560, %v2614
        %v2689 = vsub.f32 %v2561, %v2617
        %v2690 = vsub.f32 %v2562, %v2620
        %v2691 = vsub.f32 %v2563, %v2623
        %v2692 = vsub.f32 %v2564, %v2626
        %v2693 = vsub.f32 %v2565, %v2629
        %v2694 = vsub.f32 %v2566, %v2632
        %v2695 = vsub.f32 %v2567, %v2635
        %v2696 = vsub.f32 %v2568, %v2638
        %v2697 = vsub.f32 %v2569, %v2641
        %v2698 = vsub.f32 %v2570, %v2644
        %v2699 = vsub.f32 %v2571, %v2647
        %v2700 = vsub.f32 %v2572, %v2650
        %v2701 = vsub.f32 %v2573, %v2653
        %v2702 = vsub.f32 %v2574, %v2656
        %v2703 = vsub.f32 %v2575, %v2659
        %v2704 = vsub.f32 %v2576, %v2662
        %v2705 = vsub.f32 %v2577, %v2665
        %v2706 = vsub.f32 %v2578, %v2668
        %v2707 = vsub.f32 %v2579, %v2671
        %v2708 = vsub.f32 %v2580, %v2674
        %v2709 = vsub.f32 %v2581, %v2677
        %v2710 = vmul.f32 %v2678, 1.442695
        %v2711 = vpow.pop %v2710
        %v2712 = vmul.f32 %v2679, 1.442695
        %v2713 = vpow.pop %v2712
        %v2714 = vmul.f32 %v2680, 1.442695
        %v2715 = vpow.pop %v2714
        %v2716 = vmul.f32 %v2681, 1.442695
        %v2717 = vpow.pop %v2716
        %v2718 = vmul.f32 %v2682, 1.442695
        %v2719 = vpow.pop %v2718
        %v2720 = vmul.f32 %v2683, 1.442695
        %v2721 = vpow.pop %v2720
        %v2722 = vmul.f32 %v2684, 1.442695
        %v2723 = vpow.pop %v2722
        %v2724 = vmul.f32 %v2685, 1.442695
        %v2725 = vpow.pop %v2724
        %v2726 = vmul.f32 %v2686, 1.442695
        %v2727 = vpow.pop %v2726
        %v2728 = vmul.f32 %v2687, 1.442695
        %v2729 = vpow.pop %v2728
        %v2730 = vmul.f32 %v2688, 1.442695
        %v2731 = vpow.pop %v2730
        %v2732 = vmul.f32 %v2689, 1.442695
        %v2733 = vpow.pop %v2732
        %v2734 = vmul.f32 %v2690, 1.442695
        %v2735 = vpow.pop %v2734
        %v2736 = vmul.f32 %v2691, 1.442695
        %v2737 = vpow.pop %v2736
        %v2738 = vmul.f32 %v2692, 1.442695
        %v2739 = vpow.pop %v2738
        %v2740 = vmul.f32 %v2693, 1.442695
        %v2741 = vpow.pop %v2740
        %v2742 = vmul.f32 %v2694, 1.442695
        %v2743 = vpow.pop %v2742
        %v2744 = vmul.f32 %v2695, 1.442695
        %v2745 = vpow.pop %v2744
        %v2746 = vmul.f32 %v2696, 1.442695
        %v2747 = vpow.pop %v2746
        %v2748 = vmul.f32 %v2697, 1.442695
        %v2749 = vpow.pop %v2748
        %v2750 = vmul.f32 %v2698, 1.442695
        %v2751 = vpow.pop %v2750
        %v2752 = vmul.f32 %v2699, 1.442695
        %v2753 = vpow.pop %v2752
        %v2754 = vmul.f32 %v2700, 1.442695
        %v2755 = vpow.pop %v2754
        %v2756 = vmul.f32 %v2701, 1.442695
        %v2757 = vpow.pop %v2756
        %v2758 = vmul.f32 %v2702, 1.442695
        %v2759 = vpow.pop %v2758
        %v2760 = vmul.f32 %v2703, 1.442695
        %v2761 = vpow.pop %v2760
        %v2762 = vmul.f32 %v2704, 1.442695
        %v2763 = vpow.pop %v2762
        %v2764 = vmul.f32 %v2705, 1.442695
        %v2765 = vpow.pop %v2764
        %v2766 = vmul.f32 %v2706, 1.442695
        %v2767 = vpow.pop %v2766
        %v2768 = vmul.f32 %v2707, 1.442695
        %v2769 = vpow.pop %v2768
        %v2770 = vmul.f32 %v2708, 1.442695
        %v2771 = vpow.pop %v2770
        %v2772 = vmul.f32 %v2709, 1.442695
        %v2773 = vpow.pop %v2772
        %v2774 = vsel %vm1124, %v2711, 0.0
        %2775 = vadd.xlane.f32.xlu0 %v2774
        %v2776 = vpop.xlane.xlu0 %2775
        %v2777 = vsel %vm1124, %v2713, 0.0
        %2778 = vadd.xlane.f32.xlu0 %v2777
        %v2779 = vpop.xlane.xlu0 %2778
        %v2780 = vsel %vm1124, %v2715, 0.0
        %2781 = vadd.xlane.f32.xlu0 %v2780
        %v2782 = vpop.xlane.xlu0 %2781
        %v2783 = vsel %vm1124, %v2717, 0.0
        %2784 = vadd.xlane.f32.xlu0 %v2783
        %v2785 = vpop.xlane.xlu0 %2784
        %v2786 = vsel %vm1124, %v2719, 0.0
        %2787 = vadd.xlane.f32.xlu0 %v2786
        %v2788 = vpop.xlane.xlu0 %2787
        %v2789 = vsel %vm1124, %v2721, 0.0
        %2790 = vadd.xlane.f32.xlu0 %v2789
        %v2791 = vpop.xlane.xlu0 %2790
        %v2792 = vsel %vm1124, %v2723, 0.0
        %2793 = vadd.xlane.f32.xlu0 %v2792
        %v2794 = vpop.xlane.xlu0 %2793
        %v2795 = vsel %vm1124, %v2725, 0.0
        %2796 = vadd.xlane.f32.xlu0 %v2795
        %v2797 = vpop.xlane.xlu0 %2796
        %v2798 = vsel %vm1124, %v2727, 0.0
        %2799 = vadd.xlane.f32.xlu0 %v2798
        %v2800 = vpop.xlane.xlu0 %2799
        %v2801 = vsel %vm1124, %v2729, 0.0
        %2802 = vadd.xlane.f32.xlu0 %v2801
        %v2803 = vpop.xlane.xlu0 %2802
        %v2804 = vsel %vm1124, %v2731, 0.0
        %2805 = vadd.xlane.f32.xlu0 %v2804
        %v2806 = vpop.xlane.xlu0 %2805
        %v2807 = vsel %vm1124, %v2733, 0.0
        %2808 = vadd.xlane.f32.xlu0 %v2807
        %v2809 = vpop.xlane.xlu0 %2808
        %v2810 = vsel %vm1124, %v2735, 0.0
        %2811 = vadd.xlane.f32.xlu0 %v2810
        %v2812 = vpop.xlane.xlu0 %2811
        %v2813 = vsel %vm1124, %v2737, 0.0
        %2814 = vadd.xlane.f32.xlu0 %v2813
        %v2815 = vpop.xlane.xlu0 %2814
        %v2816 = vsel %vm1124, %v2739, 0.0
        %2817 = vadd.xlane.f32.xlu0 %v2816
        %v2818 = vpop.xlane.xlu0 %2817
        %v2819 = vsel %vm1124, %v2741, 0.0
        %2820 = vadd.xlane.f32.xlu0 %v2819
        %v2821 = vpop.xlane.xlu0 %2820
        %v2822 = vsel %vm1124, %v2743, 0.0
        %2823 = vadd.xlane.f32.xlu0 %v2822
        %v2824 = vpop.xlane.xlu0 %2823
        %v2825 = vsel %vm1124, %v2745, 0.0
        %2826 = vadd.xlane.f32.xlu0 %v2825
        %v2827 = vpop.xlane.xlu0 %2826
        %v2828 = vsel %vm1124, %v2747, 0.0
        %2829 = vadd.xlane.f32.xlu0 %v2828
        %v2830 = vpop.xlane.xlu0 %2829
        %v2831 = vsel %vm1124, %v2749, 0.0
        %2832 = vadd.xlane.f32.xlu0 %v2831
        %v2833 = vpop.xlane.xlu0 %2832
        %v2834 = vsel %vm1124, %v2751, 0.0
        %2835 = vadd.xlane.f32.xlu0 %v2834
        %v2836 = vpop.xlane.xlu0 %2835
        %v2837 = vsel %vm1124, %v2753, 0.0
        %2838 = vadd.xlane.f32.xlu0 %v2837
        %v2839 = vpop.xlane.xlu0 %2838
        %v2840 = vsel %vm1124, %v2755, 0.0
        %2841 = vadd.xlane.f32.xlu0 %v2840
        %v2842 = vpop.xlane.xlu0 %2841
        %v2843 = vsel %vm1124, %v2757, 0.0
        %2844 = vadd.xlane.f32.xlu0 %v2843
        %v2845 = vpop.xlane.xlu0 %2844
        %v2846 = vsel %vm1124, %v2759, 0.0
        %2847 = vadd.xlane.f32.xlu0 %v2846
        %v2848 = vpop.xlane.xlu0 %2847
        %v2849 = vsel %vm1124, %v2761, 0.0
        %2850 = vadd.xlane.f32.xlu0 %v2849
        %v2851 = vpop.xlane.xlu0 %2850
        %v2852 = vsel %vm1124, %v2763, 0.0
        %2853 = vadd.xlane.f32.xlu0 %v2852
        %v2854 = vpop.xlane.xlu0 %2853
        %v2855 = vsel %vm1124, %v2765, 0.0
        %2856 = vadd.xlane.f32.xlu0 %v2855
        %v2857 = vpop.xlane.xlu0 %2856
        %v2858 = vsel %vm1124, %v2767, 0.0
        %2859 = vadd.xlane.f32.xlu0 %v2858
        %v2860 = vpop.xlane.xlu0 %2859
        %v2861 = vsel %vm1124, %v2769, 0.0
        %2862 = vadd.xlane.f32.xlu0 %v2861
        %v2863 = vpop.xlane.xlu0 %2862
        %v2864 = vsel %vm1124, %v2771, 0.0
        %2865 = vadd.xlane.f32.xlu0 %v2864
        %v2866 = vpop.xlane.xlu0 %2865
        %v2867 = vsel %vm1124, %v2773, 0.0
        %2868 = vadd.xlane.f32.xlu0 %v2867
        %v2869 = vpop.xlane.xlu0 %2868
        %v2870 = vrcp.pop %v2776
        %v2871 = vmul.f32 %v2711, %v2870
        %v2872 = vrcp.pop %v2779
        %v2873 = vmul.f32 %v2713, %v2872
        %v2874 = vrcp.pop %v2782
        %v2875 = vmul.f32 %v2715, %v2874
        %v2876 = vrcp.pop %v2785
        %v2877 = vmul.f32 %v2717, %v2876
        %v2878 = vrcp.pop %v2788
        %v2879 = vmul.f32 %v2719, %v2878
        %v2880 = vrcp.pop %v2791
        %v2881 = vmul.f32 %v2721, %v2880
        %v2882 = vrcp.pop %v2794
        %v2883 = vmul.f32 %v2723, %v2882
        %v2884 = vrcp.pop %v2797
        %v2885 = vmul.f32 %v2725, %v2884
        %v2886 = vrcp.pop %v2800
        %v2887 = vmul.f32 %v2727, %v2886
        %v2888 = vrcp.pop %v2803
        %v2889 = vmul.f32 %v2729, %v2888
        %v2890 = vrcp.pop %v2806
        %v2891 = vmul.f32 %v2731, %v2890
        %v2892 = vrcp.pop %v2809
        %v2893 = vmul.f32 %v2733, %v2892
        %v2894 = vrcp.pop %v2812
        %v2895 = vmul.f32 %v2735, %v2894
        %v2896 = vrcp.pop %v2815
        %v2897 = vmul.f32 %v2737, %v2896
        %v2898 = vrcp.pop %v2818
        %v2899 = vmul.f32 %v2739, %v2898
        %v2900 = vrcp.pop %v2821
        %v2901 = vmul.f32 %v2741, %v2900
        %v2902 = vrcp.pop %v2824
        %v2903 = vmul.f32 %v2743, %v2902
        %v2904 = vrcp.pop %v2827
        %v2905 = vmul.f32 %v2745, %v2904
        %v2906 = vrcp.pop %v2830
        %v2907 = vmul.f32 %v2747, %v2906
        %v2908 = vrcp.pop %v2833
        %v2909 = vmul.f32 %v2749, %v2908
        %v2910 = vrcp.pop %v2836
        %v2911 = vmul.f32 %v2751, %v2910
        %v2912 = vrcp.pop %v2839
        %v2913 = vmul.f32 %v2753, %v2912
        %v2914 = vrcp.pop %v2842
        %v2915 = vmul.f32 %v2755, %v2914
        %v2916 = vrcp.pop %v2845
        %v2917 = vmul.f32 %v2757, %v2916
        %v2918 = vrcp.pop %v2848
        %v2919 = vmul.f32 %v2759, %v2918
        %v2920 = vrcp.pop %v2851
        %v2921 = vmul.f32 %v2761, %v2920
        %v2922 = vrcp.pop %v2854
        %v2923 = vmul.f32 %v2763, %v2922
        %v2924 = vrcp.pop %v2857
        %v2925 = vmul.f32 %v2765, %v2924
        %v2926 = vrcp.pop %v2860
        %v2927 = vmul.f32 %v2767, %v2926
        %v2928 = vrcp.pop %v2863
        %v2929 = vmul.f32 %v2769, %v2928
        %v2930 = vrcp.pop %v2866
        %v2931 = vmul.f32 %v2771, %v2930
        %v2932 = vrcp.pop %v2869
        %v2933 = vmul.f32 %v2773, %v2932
        %2936 = vrot.lane.b32.xlu0 %v1114, 112
        %v2937 = vpop.permute.xlu0 %2936
        %2938 = vrot.lane.b32.xlu0 %v1119, 112
        %v2939 = vpop.permute.xlu0 %2938
        %v2943 = vsel %vm1124, %v2871, 0
        %v2946 = vsel %vm1124, %v2873, 0
        %v2949 = vsel %vm1124, %v2875, 0
        %v2952 = vsel %vm1124, %v2877, 0
        %v2955 = vsel %vm1124, %v2879, 0
        %v2958 = vsel %vm1124, %v2881, 0
        %v2961 = vsel %vm1124, %v2883, 0
        %v2964 = vsel %vm1124, %v2885, 0
        %v2967 = vsel %vm1124, %v2887, 0
        %v2970 = vsel %vm1124, %v2889, 0
        %v2973 = vsel %vm1124, %v2891, 0
        %v2976 = vsel %vm1124, %v2893, 0
        %v2979 = vsel %vm1124, %v2895, 0
        %v2982 = vsel %vm1124, %v2897, 0
        %v2985 = vsel %vm1124, %v2899, 0
        %v2988 = vsel %vm1124, %v2901, 0
        %v2991 = vsel %vm1124, %v2903, 0
        %v2994 = vsel %vm1124, %v2905, 0
        %v2997 = vsel %vm1124, %v2907, 0
        %v3000 = vsel %vm1124, %v2909, 0
        %v3003 = vsel %vm1124, %v2911, 0
        %v3006 = vsel %vm1124, %v2913, 0
        %v3009 = vsel %vm1124, %v2915, 0
        %v3012 = vsel %vm1124, %v2917, 0
        %v3015 = vsel %vm1124, %v2919, 0
        %v3018 = vsel %vm1124, %v2921, 0
        %v3021 = vsel %vm1124, %v2923, 0
        %v3024 = vsel %vm1124, %v2925, 0
        %v3027 = vsel %vm1124, %v2927, 0
        %v3030 = vsel %vm1124, %v2929, 0
        %v3033 = vsel %vm1124, %v2931, 0
        %v3036 = vsel %vm1124, %v2933, 0
        %3038 = vmatprep.subr.mxu0 0.0
        %3039 = vmatpush1.msra.mxu0 0.0
        %3040 = vmatprep.subr.mxu0 0.0
        %3041 = vmatpush1.msra.mxu0 0.0
        %3042 = vmatprep.subr.mxu0 0.0
        %3043 = vmatpush1.msra.mxu0 0.0
        %3044 = vmatprep.subr.mxu0 0.0
        %3045 = vmatpush1.msra.mxu0 0.0
        %3046 = vmatprep.subr.mxu0 0.0
        %3047 = vmatpush1.msra.mxu0 0.0
        %3048 = vmatprep.subr.mxu0 0.0
        %3049 = vmatpush1.msra.mxu0 0.0
        %3050 = vmatprep.subr.mxu0 0.0
        %3051 = vmatpush1.msra.mxu0 0.0
        %3052 = vmatprep.subr.mxu0 0.0
        %3053 = vmatpush1.msra.mxu0 0.0
        %3054 = vmatprep.subr.mxu0 0.0
        %3055 = vmatpush1.msra.mxu0 0.0
        %3056 = vmatprep.subr.mxu0 0.0
        %3057 = vmatpush1.msra.mxu0 0.0
        %3058 = vmatprep.subr.mxu0 0.0
        %3059 = vmatpush1.msra.mxu0 0.0
        %3060 = vmatprep.subr.mxu0 0.0
        %3061 = vmatpush1.msra.mxu0 0.0
        %3062 = vmatprep.subr.mxu0 0.0
        %3063 = vmatpush1.msra.mxu0 0.0
        %3064 = vmatprep.subr.mxu0 0.0
        %3065 = vmatpush1.msra.mxu0 0.0
        %3066 = vmatprep.subr.mxu0 0.0
        %3067 = vmatpush1.msra.mxu0 %v2939
        %3068 = vmatprep.subr.mxu0 0.0
        %3069 = vmatpush1.msra.mxu0 %v2937
        %3070 = vmatprep.subr.mxu0 0.0
        %3071 = vmatpush2.msra.mxu0 0.0
        %3072 = vmatprep.subr.mxu0 0.0
        %3073 = vmatpush2.msra.mxu0 0.0
        %3074 = vmatprep.subr.mxu0 0.0
        %3075 = vmatpush2.msra.mxu0 0.0
        %3076 = vmatprep.subr.mxu0 0.0
        %3077 = vmatpush2.msra.mxu0 0.0
        %3078 = vmatprep.subr.mxu0 0.0
        %3079 = vmatpush2.msra.mxu0 0.0
        %3080 = vmatprep.subr.mxu0 0.0
        %3081 = vmatpush2.msra.mxu0 0.0
        %3082 = vmatprep.subr.mxu0 0.0
        %3083 = vmatpush2.msra.mxu0 0.0
        %3084 = vmatprep.subr.mxu0 0.0
        %3085 = vmatpush2.msra.mxu0 0.0
        %3086 = vmatprep.subr.mxu0 0.0
        %3087 = vmatpush2.msra.mxu0 0.0
        %3088 = vmatprep.subr.mxu0 0.0
        %3089 = vmatpush2.msra.mxu0 0.0
        %3090 = vmatprep.subr.mxu0 0.0
        %3091 = vmatpush2.msra.mxu0 0.0
        %3092 = vmatprep.subr.mxu0 0.0
        %3093 = vmatpush2.msra.mxu0 0.0
        %3094 = vmatprep.subr.mxu0 0.0
        %3095 = vmatpush2.msra.mxu0 0.0
        %3096 = vmatprep.subr.mxu0 0.0
        %3097 = vmatpush2.msra.mxu0 0.0
        %3098 = vmatprep.subr.mxu0 0.0
        %3099 = vmatpush2.msra.mxu0 0.0
        %3100 = vmatprep.subr.mxu0 0.0
        %3101 = vmatpush2.msra.mxu0 0.0
        %3102 = vmatprep.mubr.f32.mxu0 0.0
        %3103 = vmatmul.mubr.f32.gmra.mxu0 %v2943
        %v3104 = vpop.f32.mrf.mxu0
        %v3105 = vadd.f32 0.0, %v3104
        %v3106 = vpop.f32.mrf.mxu0
        %3107 = vmatprep.mubr.f32.mxu0 0.0
        %3108 = vmatmul.mubr.f32.gmra.mxu0 %v2946
        %v3109 = vpop.f32.mrf.mxu0
        %v3110 = vadd.f32 0.0, %v3109
        %v3111 = vpop.f32.mrf.mxu0
        %3112 = vmatprep.mubr.f32.mxu0 0.0
        %3113 = vmatmul.mubr.f32.gmra.mxu0 %v2949
        %v3114 = vpop.f32.mrf.mxu0
        %v3115 = vadd.f32 0.0, %v3114
        %v3116 = vpop.f32.mrf.mxu0
        %3117 = vmatprep.mubr.f32.mxu0 0.0
        %3118 = vmatmul.mubr.f32.gmra.mxu0 %v2952
        %v3119 = vpop.f32.mrf.mxu0
        %v3120 = vadd.f32 0.0, %v3119
        %v3121 = vpop.f32.mrf.mxu0
        %3122 = vmatprep.mubr.f32.mxu0 0.0
        %3123 = vmatmul.mubr.f32.gmra.mxu0 %v2955
        %v3124 = vpop.f32.mrf.mxu0
        %v3125 = vadd.f32 0.0, %v3124
        %v3126 = vpop.f32.mrf.mxu0
        %3127 = vmatprep.mubr.f32.mxu0 0.0
        %3128 = vmatmul.mubr.f32.gmra.mxu0 %v2958
        %v3129 = vpop.f32.mrf.mxu0
        %v3130 = vadd.f32 0.0, %v3129
        %v3131 = vpop.f32.mrf.mxu0
        %3132 = vmatprep.mubr.f32.mxu0 0.0
        %3133 = vmatmul.mubr.f32.gmra.mxu0 %v2961
        %v3134 = vpop.f32.mrf.mxu0
        %v3135 = vadd.f32 0.0, %v3134
        %v3136 = vpop.f32.mrf.mxu0
        %3137 = vmatprep.mubr.f32.mxu0 0.0
        %3138 = vmatmul.mubr.f32.gmra.mxu0 %v2964
        %v3139 = vpop.f32.mrf.mxu0
        %v3140 = vadd.f32 0.0, %v3139
        %v3141 = vpop.f32.mrf.mxu0
        %3142 = vmatprep.mubr.f32.mxu0 0.0
        %3143 = vmatmul.mubr.f32.gmra.mxu0 %v2967
        %v3144 = vpop.f32.mrf.mxu0
        %v3145 = vadd.f32 0.0, %v3144
        %v3146 = vpop.f32.mrf.mxu0
        %3147 = vmatprep.mubr.f32.mxu0 0.0
        %3148 = vmatmul.mubr.f32.gmra.mxu0 %v2970
        %v3149 = vpop.f32.mrf.mxu0
        %v3150 = vadd.f32 0.0, %v3149
        %v3151 = vpop.f32.mrf.mxu0
        %3152 = vmatprep.mubr.f32.mxu0 0.0
        %3153 = vmatmul.mubr.f32.gmra.mxu0 %v2973
        %v3154 = vpop.f32.mrf.mxu0
        %v3155 = vadd.f32 0.0, %v3154
        %v3156 = vpop.f32.mrf.mxu0
        %3157 = vmatprep.mubr.f32.mxu0 0.0
        %3158 = vmatmul.mubr.f32.gmra.mxu0 %v2976
        %v3159 = vpop.f32.mrf.mxu0
        %v3160 = vadd.f32 0.0, %v3159
        %v3161 = vpop.f32.mrf.mxu0
        %3162 = vmatprep.mubr.f32.mxu0 0.0
        %3163 = vmatmul.mubr.f32.gmra.mxu0 %v2979
        %v3164 = vpop.f32.mrf.mxu0
        %v3165 = vadd.f32 0.0, %v3164
        %v3166 = vpop.f32.mrf.mxu0
        %3167 = vmatprep.mubr.f32.mxu0 0.0
        %3168 = vmatmul.mubr.f32.gmra.mxu0 %v2982
        %v3169 = vpop.f32.mrf.mxu0
        %v3170 = vadd.f32 0.0, %v3169
        %v3171 = vpop.f32.mrf.mxu0
        %3172 = vmatprep.mubr.f32.mxu0 0.0
        %3173 = vmatmul.mubr.f32.gmra.mxu0 %v2985
        %v3174 = vpop.f32.mrf.mxu0
        %v3175 = vadd.f32 0.0, %v3174
        %v3176 = vpop.f32.mrf.mxu0
        %3177 = vmatprep.mubr.f32.mxu0 0.0
        %3178 = vmatmul.mubr.f32.gmra.mxu0 %v2988
        %v3179 = vpop.f32.mrf.mxu0
        %v3180 = vadd.f32 0.0, %v3179
        %v3181 = vpop.f32.mrf.mxu0
        %3182 = vmatprep.mubr.f32.mxu0 0.0
        %3183 = vmatmul.mubr.f32.gmra.mxu0 %v2991
        %v3184 = vpop.f32.mrf.mxu0
        %v3185 = vadd.f32 0.0, %v3184
        %v3186 = vpop.f32.mrf.mxu0
        %3187 = vmatprep.mubr.f32.mxu0 0.0
        %3188 = vmatmul.mubr.f32.gmra.mxu0 %v2994
        %v3189 = vpop.f32.mrf.mxu0
        %v3190 = vadd.f32 0.0, %v3189
        %v3191 = vpop.f32.mrf.mxu0
        %3192 = vmatprep.mubr.f32.mxu0 0.0
        %3193 = vmatmul.mubr.f32.gmra.mxu0 %v2997
        %v3194 = vpop.f32.mrf.mxu0
        %v3195 = vadd.f32 0.0, %v3194
        %v3196 = vpop.f32.mrf.mxu0
        %3197 = vmatprep.mubr.f32.mxu0 0.0
        %3198 = vmatmul.mubr.f32.gmra.mxu0 %v3000
        %v3199 = vpop.f32.mrf.mxu0
        %v3200 = vadd.f32 0.0, %v3199
        %v3201 = vpop.f32.mrf.mxu0
        %3202 = vmatprep.mubr.f32.mxu0 0.0
        %3203 = vmatmul.mubr.f32.gmra.mxu0 %v3003
        %v3204 = vpop.f32.mrf.mxu0
        %v3205 = vadd.f32 0.0, %v3204
        %v3206 = vpop.f32.mrf.mxu0
        %3207 = vmatprep.mubr.f32.mxu0 0.0
        %3208 = vmatmul.mubr.f32.gmra.mxu0 %v3006
        %v3209 = vpop.f32.mrf.mxu0
        %v3210 = vadd.f32 0.0, %v3209
        %v3211 = vpop.f32.mrf.mxu0
        %3212 = vmatprep.mubr.f32.mxu0 0.0
        %3213 = vmatmul.mubr.f32.gmra.mxu0 %v3009
        %v3214 = vpop.f32.mrf.mxu0
        %v3215 = vadd.f32 0.0, %v3214
        %v3216 = vpop.f32.mrf.mxu0
        %3217 = vmatprep.mubr.f32.mxu0 0.0
        %3218 = vmatmul.mubr.f32.gmra.mxu0 %v3012
        %v3219 = vpop.f32.mrf.mxu0
        %v3220 = vadd.f32 0.0, %v3219
        %v3221 = vpop.f32.mrf.mxu0
        %3222 = vmatprep.mubr.f32.mxu0 0.0
        %3223 = vmatmul.mubr.f32.gmra.mxu0 %v3015
        %v3224 = vpop.f32.mrf.mxu0
        %v3225 = vadd.f32 0.0, %v3224
        %v3226 = vpop.f32.mrf.mxu0
        %3227 = vmatprep.mubr.f32.mxu0 0.0
        %3228 = vmatmul.mubr.f32.gmra.mxu0 %v3018
        %v3229 = vpop.f32.mrf.mxu0
        %v3230 = vadd.f32 0.0, %v3229
        %v3231 = vpop.f32.mrf.mxu0
        %3232 = vmatprep.mubr.f32.mxu0 0.0
        %3233 = vmatmul.mubr.f32.gmra.mxu0 %v3021
        %v3234 = vpop.f32.mrf.mxu0
        %v3235 = vadd.f32 0.0, %v3234
        %v3236 = vpop.f32.mrf.mxu0
        %3237 = vmatprep.mubr.f32.mxu0 0.0
        %3238 = vmatmul.mubr.f32.gmra.mxu0 %v3024
        %v3239 = vpop.f32.mrf.mxu0
        %v3240 = vadd.f32 0.0, %v3239
        %v3241 = vpop.f32.mrf.mxu0
        %3242 = vmatprep.mubr.f32.mxu0 0.0
        %3243 = vmatmul.mubr.f32.gmra.mxu0 %v3027
        %v3244 = vpop.f32.mrf.mxu0
        %v3245 = vadd.f32 0.0, %v3244
        %v3246 = vpop.f32.mrf.mxu0
        %3247 = vmatprep.mubr.f32.mxu0 0.0
        %3248 = vmatmul.mubr.f32.gmra.mxu0 %v3030
        %v3249 = vpop.f32.mrf.mxu0
        %v3250 = vadd.f32 0.0, %v3249
        %v3251 = vpop.f32.mrf.mxu0
        %3252 = vmatprep.mubr.f32.mxu0 0.0
        %3253 = vmatmul.mubr.f32.gmra.mxu0 %v3033
        %v3254 = vpop.f32.mrf.mxu0
        %v3255 = vadd.f32 0.0, %v3254
        %v3256 = vpop.f32.mrf.mxu0
        %3257 = vmatprep.mubr.f32.mxu0 0.0
        %3258 = vmatmul.mubr.f32.gmra.mxu0 %v3036
        %v3259 = vpop.f32.mrf.mxu0
        %v3260 = vadd.f32 0.0, %v3259
        %v3261 = vpop.f32.mrf.mxu0
        %3262 = vdwg.mxu0
        %3295 = vrot.lane.b32.xlu0 %v3105, 16
        %v3296 = vpop.permute.xlu0 %3295
        %3297 = vrot.lane.b32.xlu0 %v3110, 16
        %v3298 = vpop.permute.xlu0 %3297
        %3299 = vrot.lane.b32.xlu0 %v3115, 16
        %v3300 = vpop.permute.xlu0 %3299
        %3301 = vrot.lane.b32.xlu0 %v3120, 16
        %v3302 = vpop.permute.xlu0 %3301
        %3303 = vrot.lane.b32.xlu0 %v3125, 16
        %v3304 = vpop.permute.xlu0 %3303
        %3305 = vrot.lane.b32.xlu0 %v3130, 16
        %v3306 = vpop.permute.xlu0 %3305
        %3307 = vrot.lane.b32.xlu0 %v3135, 16
        %v3308 = vpop.permute.xlu0 %3307
        %3309 = vrot.lane.b32.xlu0 %v3140, 16
        %v3310 = vpop.permute.xlu0 %3309
        %3311 = vrot.lane.b32.xlu0 %v3145, 16
        %v3312 = vpop.permute.xlu0 %3311
        %3313 = vrot.lane.b32.xlu0 %v3150, 16
        %v3314 = vpop.permute.xlu0 %3313
        %3315 = vrot.lane.b32.xlu0 %v3155, 16
        %v3316 = vpop.permute.xlu0 %3315
        %3317 = vrot.lane.b32.xlu0 %v3160, 16
        %v3318 = vpop.permute.xlu0 %3317
        %3319 = vrot.lane.b32.xlu0 %v3165, 16
        %v3320 = vpop.permute.xlu0 %3319
        %3321 = vrot.lane.b32.xlu0 %v3170, 16
        %v3322 = vpop.permute.xlu0 %3321
        %3323 = vrot.lane.b32.xlu0 %v3175, 16
        %v3324 = vpop.permute.xlu0 %3323
        %3325 = vrot.lane.b32.xlu0 %v3180, 16
        %v3326 = vpop.permute.xlu0 %3325
        %3327 = vrot.lane.b32.xlu0 %v3185, 16
        %v3328 = vpop.permute.xlu0 %3327
        %3329 = vrot.lane.b32.xlu0 %v3190, 16
        %v3330 = vpop.permute.xlu0 %3329
        %3331 = vrot.lane.b32.xlu0 %v3195, 16
        %v3332 = vpop.permute.xlu0 %3331
        %3333 = vrot.lane.b32.xlu0 %v3200, 16
        %v3334 = vpop.permute.xlu0 %3333
        %3335 = vrot.lane.b32.xlu0 %v3205, 16
        %v3336 = vpop.permute.xlu0 %3335
        %3337 = vrot.lane.b32.xlu0 %v3210, 16
        %v3338 = vpop.permute.xlu0 %3337
        %3339 = vrot.lane.b32.xlu0 %v3215, 16
        %v3340 = vpop.permute.xlu0 %3339
        %3341 = vrot.lane.b32.xlu0 %v3220, 16
        %v3342 = vpop.permute.xlu0 %3341
        %3343 = vrot.lane.b32.xlu0 %v3225, 16
        %v3344 = vpop.permute.xlu0 %3343
        %3345 = vrot.lane.b32.xlu0 %v3230, 16
        %v3346 = vpop.permute.xlu0 %3345
        %3347 = vrot.lane.b32.xlu0 %v3235, 16
        %v3348 = vpop.permute.xlu0 %3347
        %3349 = vrot.lane.b32.xlu0 %v3240, 16
        %v3350 = vpop.permute.xlu0 %3349
        %3351 = vrot.lane.b32.xlu0 %v3245, 16
        %v3352 = vpop.permute.xlu0 %3351
        %3353 = vrot.lane.b32.xlu0 %v3250, 16
        %v3354 = vpop.permute.xlu0 %3353
        %3355 = vrot.lane.b32.xlu0 %v3255, 16
        %v3356 = vpop.permute.xlu0 %3355
        %3357 = vrot.lane.b32.xlu0 %v3260, 16
        %v3358 = vpop.permute.xlu0 %3357
        %vm3391 = vcmask 261248
        %3392 = vst.msk [vmem:[%s521] sm:$0xff] %vm3391, %v3296
        %3393 = vst.msk [vmem:[%s521 + $0x8] sm:$0xff] %vm3391, %v3298
        %3394 = vst.msk [vmem:[%s521 + $0x10] sm:$0xff] %vm3391, %v3300
        %3395 = vst.msk [vmem:[%s521 + $0x18] sm:$0xff] %vm3391, %v3302
        %3396 = vst.msk [vmem:[%s521 + $0x20] sm:$0xff] %vm3391, %v3304
        %3397 = vst.msk [vmem:[%s521 + $0x28] sm:$0xff] %vm3391, %v3306
        %3398 = vst.msk [vmem:[%s521 + $0x30] sm:$0xff] %vm3391, %v3308
        %3399 = vst.msk [vmem:[%s521 + $0x38] sm:$0xff] %vm3391, %v3310
        %3400 = vst.msk [vmem:[%s521 + $0x40] sm:$0xff] %vm3391, %v3312
        %3401 = vst.msk [vmem:[%s521 + $0x48] sm:$0xff] %vm3391, %v3314
        %3402 = vst.msk [vmem:[%s521 + $0x50] sm:$0xff] %vm3391, %v3316
        %3403 = vst.msk [vmem:[%s521 + $0x58] sm:$0xff] %vm3391, %v3318
        %3404 = vst.msk [vmem:[%s521 + $0x60] sm:$0xff] %vm3391, %v3320
        %3405 = vst.msk [vmem:[%s521 + $0x68] sm:$0xff] %vm3391, %v3322
        %3406 = vst.msk [vmem:[%s521 + $0x70] sm:$0xff] %vm3391, %v3324
        %3407 = vst.msk [vmem:[%s521 + $0x78] sm:$0xff] %vm3391, %v3326
        %3408 = vst.msk [vmem:[%s521 + $0x80] sm:$0xff] %vm3391, %v3328
        %3409 = vst.msk [vmem:[%s521 + $0x88] sm:$0xff] %vm3391, %v3330
        %3410 = vst.msk [vmem:[%s521 + $0x90] sm:$0xff] %vm3391, %v3332
        %3411 = vst.msk [vmem:[%s521 + $0x98] sm:$0xff] %vm3391, %v3334
        %3412 = vst.msk [vmem:[%s521 + $0xa0] sm:$0xff] %vm3391, %v3336
        %3413 = vst.msk [vmem:[%s521 + $0xa8] sm:$0xff] %vm3391, %v3338
        %3414 = vst.msk [vmem:[%s521 + $0xb0] sm:$0xff] %vm3391, %v3340
        %3415 = vst.msk [vmem:[%s521 + $0xb8] sm:$0xff] %vm3391, %v3342
        %3416 = vst.msk [vmem:[%s521 + $0xc0] sm:$0xff] %vm3391, %v3344
        %3417 = vst.msk [vmem:[%s521 + $0xc8] sm:$0xff] %vm3391, %v3346
        %3418 = vst.msk [vmem:[%s521 + $0xd0] sm:$0xff] %vm3391, %v3348
        %3419 = vst.msk [vmem:[%s521 + $0xd8] sm:$0xff] %vm3391, %v3350
        %3420 = vst.msk [vmem:[%s521 + $0xe0] sm:$0xff] %vm3391, %v3352
        %3421 = vst.msk [vmem:[%s521 + $0xe8] sm:$0xff] %vm3391, %v3354
        %3422 = vst.msk [vmem:[%s521 + $0xf0] sm:$0xff] %vm3391, %v3356
        %3423 = vst.msk [vmem:[%s521 + $0xf8] sm:$0xff] %vm3391, %v3358
        %s3424 = smul.u32 32, %s28
        %p3425 = scmp.lt.s32.totalorder %s3424, 63
        %s3426 = scalar_select %p3425, %s3424, 63
        %s3427 = smul.addr %s3426, 8
        %s3428 = scalar_lea.vmem %s10, %s3427
        %p3429 = scmp.lt.s32.totalorder %s28, 1
        %s3430 = scalar_select %p3429, %s28, 1
        %s3431 = smul.addr %s3430, 2
        %s3432 = smul.addr %s3431, 8
        %s3433 = scalar_lea.vmem %s11, %s3432
        // Predicated region
        $region93: #{_lambda_.2} parent=59 // pred_check
          %p3434 = pneg %p266
        $region94: #{_lambda_.2} parent=59 // pred_check_branch
          %3436 = sbr.rel (%p3434) target = $region96
        $region95: #{_lambda_.2} parent=59 // pred_region
          %s3437 = smul.u32 32, %s28
        $region96: #{_lambda_.2} parent=59 // pred_fallthru
          _
        // Predicated region
        $region97: #{_lambda_.2} parent=59 // pred_check
          %p3438 = pneg %p292
        $region98: #{_lambda_.2} parent=59 // pred_check_branch
          %3440 = sbr.rel (%p3438) target = $region100
        $region99: #{_lambda_.2} parent=59 // pred_region
          _
        $region100: #{_lambda_.2} parent=59 // pred_fallthru
          _
      $region60: #{_lambda_.2} parent=5 // pred_fallthru
        _
      %p3441 = scmp.le.s32.totalorder 2, %s23
      // Predicated region
      $region101: #{_lambda_.2} parent=5 // pred_check
        %p3442 = pneg %p3441
      $region102: #{_lambda_.2} parent=5 // pred_check_branch
        %3444 = sbr.rel (%p3442) target = $region104
      $region103: #{_lambda_.2} parent=5 // pred_region
        %s3445 = ssub.s32 %s23, 2
        // Predicated region
        $region105: #{_lambda_.2} parent=103 // pred_check
          %p3446 = pneg %p272
        $region106: #{_lambda_.2} parent=103 // pred_check_branch
          %3448 = sbr.rel (%p3446) target = $region108
        $region107: #{_lambda_.2} parent=103 // pred_region
          %s3449 = smul.u32 32, %s29
          %p3450 = scmp.lt.s32.totalorder %s3449, 63
          %s3451 = scalar_select %p3450, %s3449, 63
          %s3452 = smul.addr %s3451, 8
          %s3453 = scalar_lea.vmem %s10, %s3452
        $region108: #{_lambda_.2} parent=103 // pred_fallthru
          _
        // Predicated region
        $region109: #{_lambda_.2} parent=103 // pred_check
          %p3454 = pneg %p298
        $region110: #{_lambda_.2} parent=103 // pred_check_branch
          %3456 = sbr.rel (%p3454) target = $region112
        $region111: #{_lambda_.2} parent=103 // pred_region
          %p3457 = scmp.lt.s32.totalorder %s29, 1
          %s3458 = scalar_select %p3457, %s29, 1
          %s3459 = smul.addr %s3458, 2
          %s3460 = smul.addr %s3459, 8
          %s3461 = scalar_lea.vmem %s11, %s3460
        $region112: #{_lambda_.2} parent=103 // pred_fallthru
          _
      $region104: #{_lambda_.2} parent=5 // pred_fallthru
        _
    $region6: #{_lambda_.2} parent=1 // loop_footer
      %s27 = sadd.s32 1, %s23
    $region7: #{_lambda_.2} parent=1 // loop_footer_branch
      %22 = sbr.rel target = $region3
    $region8: #{_lambda_.2} parent=1 // loop_exit
      _
    %3462 = vsyncpa [#allocation3], 1
    %s3463 = scalar_lea.sflag [#allocation3], 1
    %3464 = vsyncpa %s3463, 1
    %3465 = vsyncpa [#allocation5], 1
    %3466 = vsyncpa [#allocation8], 1
    %3467 = vsyncpa [#allocation11], 1
    %3468 = vsyncpa [#allocation14], 1

// kernel: _lambda_.3
$region0: #{_lambda_.3}
  #allocation0 [shape = 'u32[]', space=smem, size = 0x4, offset = 0x4, fixed_abs, tag = 'smem constant byte address 0x4 - core index']
  #allocation1 [shape = 'u32[144,128]{1,0:T(1,128)}', space=vmem, size = 0x12000, scoped, tag = 'internal scratch']
  %s0 = inlined_call_operand.vmem [shape: f32[512,32], index: 0, kind: input, shape index: {}]
  %s1 = inlined_call_operand.vmem [shape: f32[512,32], index: 1, kind: input, shape index: {}]
  %s2 = inlined_call_operand.vmem [shape: f32[1,32], index: 2, kind: input, shape index: {}]
  %s3 = inlined_call_operand.vmem [shape: f32[1,32], index: 3, kind: input, shape index: {}]
  %s4 = inlined_call_operand.vmem [shape: f32[32,32], index: 4, kind: input, shape index: {}]
  %s5 = inlined_call_operand.vmem [shape: f32[1,32], index: 5, kind: input, shape index: {}]
  %s6 = inlined_call_operand.vmem [shape: f32[512,32], index: 6, kind: output, shape index: {}]
  %s7 = sld [smem:[#allocation0]]
  $region34: #{_lambda_.3} parent=0
    _
  %s9 = ssub.s32 1, %s7
  %s10 = scalar_select 0, %s9, %s7
  // Predicated region
  $region2: #{_lambda_.3} parent=0 // pred_check
    _
  $region3: #{_lambda_.3} parent=0 // pred_check_branch
    %12 = sbr.rel (0) target = $region5
  $region4: #{_lambda_.3} parent=0 // pred_region
    _
  $region5: #{_lambda_.3} parent=0 // pred_fallthru
    _
  // Predicated region
  $region6: #{_lambda_.3} parent=0 // pred_check
    _
  $region7: #{_lambda_.3} parent=0 // pred_check_branch
    %14 = sbr.rel (0) target = $region9
  $region8: #{_lambda_.3} parent=0 // pred_region
    _
  $region9: #{_lambda_.3} parent=0 // pred_fallthru
    _
  // Predicated region
  $region10: #{_lambda_.3} parent=0 // pred_check
    _
  $region11: #{_lambda_.3} parent=0 // pred_check_branch
    %16 = sbr.rel (0) target = $region13
  $region12: #{_lambda_.3} parent=0 // pred_region
    _
  $region13: #{_lambda_.3} parent=0 // pred_fallthru
    _
  // Predicated region
  $region14: #{_lambda_.3} parent=0 // pred_check
    _
  $region15: #{_lambda_.3} parent=0 // pred_check_branch
    %18 = sbr.rel (0) target = $region17
  $region16: #{_lambda_.3} parent=0 // pred_region
    _
  $region17: #{_lambda_.3} parent=0 // pred_fallthru
    _
  // Predicated region
  $region18: #{_lambda_.3} parent=0 // pred_check
    _
  $region19: #{_lambda_.3} parent=0 // pred_check_branch
    %20 = sbr.rel (0) target = $region21
  $region20: #{_lambda_.3} parent=0 // pred_region
    _
  $region21: #{_lambda_.3} parent=0 // pred_fallthru
    _
  // Predicated region
  $region22: #{_lambda_.3} parent=0 // pred_check
    _
  $region23: #{_lambda_.3} parent=0 // pred_check_branch
    %22 = sbr.rel (0) target = $region25
  $region24: #{_lambda_.3} parent=0 // pred_region
    _
  $region25: #{_lambda_.3} parent=0 // pred_fallthru
    _
  %v23 = vld [vmem:[%s0] sm:$0xff]
  %v24 = vld [vmem:[%s0 + $0x8] sm:$0xff]
  %v25 = vld [vmem:[%s0 + $0x10] sm:$0xff]
  %v26 = vld [vmem:[%s0 + $0x18] sm:$0xff]
  %v27 = vld [vmem:[%s0 + $0x20] sm:$0xff]
  %v28 = vld [vmem:[%s0 + $0x28] sm:$0xff]
  %v29 = vld [vmem:[%s0 + $0x30] sm:$0xff]
  %v30 = vld [vmem:[%s0 + $0x38] sm:$0xff]
  %v31 = vld [vmem:[%s0 + $0x40] sm:$0xff]
  %v32 = vld [vmem:[%s0 + $0x48] sm:$0xff]
  %v33 = vld [vmem:[%s0 + $0x50] sm:$0xff]
  %v34 = vld [vmem:[%s0 + $0x58] sm:$0xff]
  %v35 = vld [vmem:[%s0 + $0x60] sm:$0xff]
  %v36 = vld [vmem:[%s0 + $0x68] sm:$0xff]
  %v37 = vld [vmem:[%s0 + $0x70] sm:$0xff]
  %v38 = vld [vmem:[%s0 + $0x78] sm:$0xff]
  %v39 = vld [vmem:[%s0 + $0x80] sm:$0xff]
  %v40 = vld [vmem:[%s0 + $0x88] sm:$0xff]
  %v41 = vld [vmem:[%s0 + $0x90] sm:$0xff]
  %v42 = vld [vmem:[%s0 + $0x98] sm:$0xff]
  %v43 = vld [vmem:[%s0 + $0xa0] sm:$0xff]
  %v44 = vld [vmem:[%s0 + $0xa8] sm:$0xff]
  %v45 = vld [vmem:[%s0 + $0xb0] sm:$0xff]
  %v46 = vld [vmem:[%s0 + $0xb8] sm:$0xff]
  %v47 = vld [vmem:[%s0 + $0xc0] sm:$0xff]
  %v48 = vld [vmem:[%s0 + $0xc8] sm:$0xff]
  %v49 = vld [vmem:[%s0 + $0xd0] sm:$0xff]
  %v50 = vld [vmem:[%s0 + $0xd8] sm:$0xff]
  %v51 = vld [vmem:[%s0 + $0xe0] sm:$0xff]
  %v52 = vld [vmem:[%s0 + $0xe8] sm:$0xff]
  %v53 = vld [vmem:[%s0 + $0xf0] sm:$0xff]
  %v54 = vld [vmem:[%s0 + $0xf8] sm:$0xff]
  %v55 = vld [vmem:[%s0 + $0x100] sm:$0xff]
  %v56 = vld [vmem:[%s0 + $0x108] sm:$0xff]
  %v57 = vld [vmem:[%s0 + $0x110] sm:$0xff]
  %v58 = vld [vmem:[%s0 + $0x118] sm:$0xff]
  %v59 = vld [vmem:[%s0 + $0x120] sm:$0xff]
  %v60 = vld [vmem:[%s0 + $0x128] sm:$0xff]
  %v61 = vld [vmem:[%s0 + $0x130] sm:$0xff]
  %v62 = vld [vmem:[%s0 + $0x138] sm:$0xff]
  %v63 = vld [vmem:[%s0 + $0x140] sm:$0xff]
  %v64 = vld [vmem:[%s0 + $0x148] sm:$0xff]
  %v65 = vld [vmem:[%s0 + $0x150] sm:$0xff]
  %v66 = vld [vmem:[%s0 + $0x158] sm:$0xff]
  %v67 = vld [vmem:[%s0 + $0x160] sm:$0xff]
  %v68 = vld [vmem:[%s0 + $0x168] sm:$0xff]
  %v69 = vld [vmem:[%s0 + $0x170] sm:$0xff]
  %v70 = vld [vmem:[%s0 + $0x178] sm:$0xff]
  %v71 = vld [vmem:[%s0 + $0x180] sm:$0xff]
  %v72 = vld [vmem:[%s0 + $0x188] sm:$0xff]
  %v73 = vld [vmem:[%s0 + $0x190] sm:$0xff]
  %v74 = vld [vmem:[%s0 + $0x198] sm:$0xff]
  %v75 = vld [vmem:[%s0 + $0x1a0] sm:$0xff]
  %v76 = vld [vmem:[%s0 + $0x1a8] sm:$0xff]
  %v77 = vld [vmem:[%s0 + $0x1b0] sm:$0xff]
  %v78 = vld [vmem:[%s0 + $0x1b8] sm:$0xff]
  %v79 = vld [vmem:[%s0 + $0x1c0] sm:$0xff]
  %v80 = vld [vmem:[%s0 + $0x1c8] sm:$0xff]
  %v81 = vld [vmem:[%s0 + $0x1d0] sm:$0xff]
  %v82 = vld [vmem:[%s0 + $0x1d8] sm:$0xff]
  %v83 = vld [vmem:[%s0 + $0x1e0] sm:$0xff]
  %v84 = vld [vmem:[%s0 + $0x1e8] sm:$0xff]
  %v85 = vld [vmem:[%s0 + $0x1f0] sm:$0xff]
  %v86 = vld [vmem:[%s0 + $0x1f8] sm:$0xff]
  %v87 = vld [vmem:[%s1] sm:$0xff]
  %v88 = vld [vmem:[%s1 + $0x8] sm:$0xff]
  %v89 = vld [vmem:[%s1 + $0x10] sm:$0xff]
  %v90 = vld [vmem:[%s1 + $0x18] sm:$0xff]
  %v91 = vld [vmem:[%s1 + $0x20] sm:$0xff]
  %v92 = vld [vmem:[%s1 + $0x28] sm:$0xff]
  %v93 = vld [vmem:[%s1 + $0x30] sm:$0xff]
  %v94 = vld [vmem:[%s1 + $0x38] sm:$0xff]
  %v95 = vld [vmem:[%s1 + $0x40] sm:$0xff]
  %v96 = vld [vmem:[%s1 + $0x48] sm:$0xff]
  %v97 = vld [vmem:[%s1 + $0x50] sm:$0xff]
  %v98 = vld [vmem:[%s1 + $0x58] sm:$0xff]
  %v99 = vld [vmem:[%s1 + $0x60] sm:$0xff]
  %v100 = vld [vmem:[%s1 + $0x68] sm:$0xff]
  %v101 = vld [vmem:[%s1 + $0x70] sm:$0xff]
  %v102 = vld [vmem:[%s1 + $0x78] sm:$0xff]
  %v103 = vld [vmem:[%s1 + $0x80] sm:$0xff]
  %v104 = vld [vmem:[%s1 + $0x88] sm:$0xff]
  %v105 = vld [vmem:[%s1 + $0x90] sm:$0xff]
  %v106 = vld [vmem:[%s1 + $0x98] sm:$0xff]
  %v107 = vld [vmem:[%s1 + $0xa0] sm:$0xff]
  %v108 = vld [vmem:[%s1 + $0xa8] sm:$0xff]
  %v109 = vld [vmem:[%s1 + $0xb0] sm:$0xff]
  %v110 = vld [vmem:[%s1 + $0xb8] sm:$0xff]
  %v111 = vld [vmem:[%s1 + $0xc0] sm:$0xff]
  %v112 = vld [vmem:[%s1 + $0xc8] sm:$0xff]
  %v113 = vld [vmem:[%s1 + $0xd0] sm:$0xff]
  %v114 = vld [vmem:[%s1 + $0xd8] sm:$0xff]
  %v115 = vld [vmem:[%s1 + $0xe0] sm:$0xff]
  %v116 = vld [vmem:[%s1 + $0xe8] sm:$0xff]
  %v117 = vld [vmem:[%s1 + $0xf0] sm:$0xff]
  %v118 = vld [vmem:[%s1 + $0xf8] sm:$0xff]
  %v119 = vld [vmem:[%s1 + $0x100] sm:$0xff]
  %v120 = vld [vmem:[%s1 + $0x108] sm:$0xff]
  %v121 = vld [vmem:[%s1 + $0x110] sm:$0xff]
  %v122 = vld [vmem:[%s1 + $0x118] sm:$0xff]
  %v123 = vld [vmem:[%s1 + $0x120] sm:$0xff]
  %v124 = vld [vmem:[%s1 + $0x128] sm:$0xff]
  %v125 = vld [vmem:[%s1 + $0x130] sm:$0xff]
  %v126 = vld [vmem:[%s1 + $0x138] sm:$0xff]
  %v127 = vld [vmem:[%s1 + $0x140] sm:$0xff]
  %v128 = vld [vmem:[%s1 + $0x148] sm:$0xff]
  %v129 = vld [vmem:[%s1 + $0x150] sm:$0xff]
  %v130 = vld [vmem:[%s1 + $0x158] sm:$0xff]
  %v131 = vld [vmem:[%s1 + $0x160] sm:$0xff]
  %v132 = vld [vmem:[%s1 + $0x168] sm:$0xff]
  %v133 = vld [vmem:[%s1 + $0x170] sm:$0xff]
  %v134 = vld [vmem:[%s1 + $0x178] sm:$0xff]
  %v135 = vld [vmem:[%s1 + $0x180] sm:$0xff]
  %v136 = vld [vmem:[%s1 + $0x188] sm:$0xff]
  %v137 = vld [vmem:[%s1 + $0x190] sm:$0xff]
  %v138 = vld [vmem:[%s1 + $0x198] sm:$0xff]
  %v139 = vld [vmem:[%s1 + $0x1a0] sm:$0xff]
  %v140 = vld [vmem:[%s1 + $0x1a8] sm:$0xff]
  %v141 = vld [vmem:[%s1 + $0x1b0] sm:$0xff]
  %v142 = vld [vmem:[%s1 + $0x1b8] sm:$0xff]
  %v143 = vld [vmem:[%s1 + $0x1c0] sm:$0xff]
  %v144 = vld [vmem:[%s1 + $0x1c8] sm:$0xff]
  %v145 = vld [vmem:[%s1 + $0x1d0] sm:$0xff]
  %v146 = vld [vmem:[%s1 + $0x1d8] sm:$0xff]
  %v147 = vld [vmem:[%s1 + $0x1e0] sm:$0xff]
  %v148 = vld [vmem:[%s1 + $0x1e8] sm:$0xff]
  %v149 = vld [vmem:[%s1 + $0x1f0] sm:$0xff]
  %v150 = vld [vmem:[%s1 + $0x1f8] sm:$0xff]
  %vm151 = vcmask 261120
  %v152 = vsel %vm151, %v87, 0.0
  %153 = vadd.xlane.f32.xlu0 %v152
  %v154 = vpop.xlane.xlu0 %153
  %v155 = vsel %vm151, %v88, 0.0
  %156 = vadd.xlane.f32.xlu0 %v155
  %v157 = vpop.xlane.xlu0 %156
  %v158 = vsel %vm151, %v89, 0.0
  %159 = vadd.xlane.f32.xlu0 %v158
  %v160 = vpop.xlane.xlu0 %159
  %v161 = vsel %vm151, %v90, 0.0
  %162 = vadd.xlane.f32.xlu0 %v161
  %v163 = vpop.xlane.xlu0 %162
  %v164 = vsel %vm151, %v91, 0.0
  %165 = vadd.xlane.f32.xlu0 %v164
  %v166 = vpop.xlane.xlu0 %165
  %v167 = vsel %vm151, %v92, 0.0
  %168 = vadd.xlane.f32.xlu0 %v167
  %v169 = vpop.xlane.xlu0 %168
  %v170 = vsel %vm151, %v93, 0.0
  %171 = vadd.xlane.f32.xlu0 %v170
  %v172 = vpop.xlane.xlu0 %171
  %v173 = vsel %vm151, %v94, 0.0
  %174 = vadd.xlane.f32.xlu0 %v173
  %v175 = vpop.xlane.xlu0 %174
  %v176 = vsel %vm151, %v95, 0.0
  %177 = vadd.xlane.f32.xlu0 %v176
  %v178 = vpop.xlane.xlu0 %177
  %v179 = vsel %vm151, %v96, 0.0
  %180 = vadd.xlane.f32.xlu0 %v179
  %v181 = vpop.xlane.xlu0 %180
  %v182 = vsel %vm151, %v97, 0.0
  %183 = vadd.xlane.f32.xlu0 %v182
  %v184 = vpop.xlane.xlu0 %183
  %v185 = vsel %vm151, %v98, 0.0
  %186 = vadd.xlane.f32.xlu0 %v185
  %v187 = vpop.xlane.xlu0 %186
  %v188 = vsel %vm151, %v99, 0.0
  %189 = vadd.xlane.f32.xlu0 %v188
  %v190 = vpop.xlane.xlu0 %189
  %v191 = vsel %vm151, %v100, 0.0
  %192 = vadd.xlane.f32.xlu0 %v191
  %v193 = vpop.xlane.xlu0 %192
  %v194 = vsel %vm151, %v101, 0.0
  %195 = vadd.xlane.f32.xlu0 %v194
  %v196 = vpop.xlane.xlu0 %195
  %v197 = vsel %vm151, %v102, 0.0
  %198 = vadd.xlane.f32.xlu0 %v197
  %v199 = vpop.xlane.xlu0 %198
  %v200 = vsel %vm151, %v103, 0.0
  %201 = vadd.xlane.f32.xlu0 %v200
  %v202 = vpop.xlane.xlu0 %201
  %v203 = vsel %vm151, %v104, 0.0
  %204 = vadd.xlane.f32.xlu0 %v203
  %v205 = vpop.xlane.xlu0 %204
  %v206 = vsel %vm151, %v105, 0.0
  %207 = vadd.xlane.f32.xlu0 %v206
  %v208 = vpop.xlane.xlu0 %207
  %v209 = vsel %vm151, %v106, 0.0
  %210 = vadd.xlane.f32.xlu0 %v209
  %v211 = vpop.xlane.xlu0 %210
  %v212 = vsel %vm151, %v107, 0.0
  %213 = vadd.xlane.f32.xlu0 %v212
  %v214 = vpop.xlane.xlu0 %213
  %v215 = vsel %vm151, %v108, 0.0
  %216 = vadd.xlane.f32.xlu0 %v215
  %v217 = vpop.xlane.xlu0 %216
  %v218 = vsel %vm151, %v109, 0.0
  %219 = vadd.xlane.f32.xlu0 %v218
  %v220 = vpop.xlane.xlu0 %219
  %v221 = vsel %vm151, %v110, 0.0
  %222 = vadd.xlane.f32.xlu0 %v221
  %v223 = vpop.xlane.xlu0 %222
  %v224 = vsel %vm151, %v111, 0.0
  %225 = vadd.xlane.f32.xlu0 %v224
  %v226 = vpop.xlane.xlu0 %225
  %v227 = vsel %vm151, %v112, 0.0
  %228 = vadd.xlane.f32.xlu0 %v227
  %v229 = vpop.xlane.xlu0 %228
  %v230 = vsel %vm151, %v113, 0.0
  %231 = vadd.xlane.f32.xlu0 %v230
  %v232 = vpop.xlane.xlu0 %231
  %v233 = vsel %vm151, %v114, 0.0
  %234 = vadd.xlane.f32.xlu0 %v233
  %v235 = vpop.xlane.xlu0 %234
  %v236 = vsel %vm151, %v115, 0.0
  %237 = vadd.xlane.f32.xlu0 %v236
  %v238 = vpop.xlane.xlu0 %237
  %v239 = vsel %vm151, %v116, 0.0
  %240 = vadd.xlane.f32.xlu0 %v239
  %v241 = vpop.xlane.xlu0 %240
  %v242 = vsel %vm151, %v117, 0.0
  %243 = vadd.xlane.f32.xlu0 %v242
  %v244 = vpop.xlane.xlu0 %243
  %v245 = vsel %vm151, %v118, 0.0
  %246 = vadd.xlane.f32.xlu0 %v245
  %v247 = vpop.xlane.xlu0 %246
  %v248 = vsel %vm151, %v119, 0.0
  %249 = vadd.xlane.f32.xlu0 %v248
  %v250 = vpop.xlane.xlu0 %249
  %v251 = vsel %vm151, %v120, 0.0
  %252 = vadd.xlane.f32.xlu0 %v251
  %v253 = vpop.xlane.xlu0 %252
  %v254 = vsel %vm151, %v121, 0.0
  %255 = vadd.xlane.f32.xlu0 %v254
  %v256 = vpop.xlane.xlu0 %255
  %v257 = vsel %vm151, %v122, 0.0
  %258 = vadd.xlane.f32.xlu0 %v257
  %v259 = vpop.xlane.xlu0 %258
  %v260 = vsel %vm151, %v123, 0.0
  %261 = vadd.xlane.f32.xlu0 %v260
  %v262 = vpop.xlane.xlu0 %261
  %v263 = vsel %vm151, %v124, 0.0
  %264 = vadd.xlane.f32.xlu0 %v263
  %v265 = vpop.xlane.xlu0 %264
  %v266 = vsel %vm151, %v125, 0.0
  %267 = vadd.xlane.f32.xlu0 %v266
  %v268 = vpop.xlane.xlu0 %267
  %v269 = vsel %vm151, %v126, 0.0
  %270 = vadd.xlane.f32.xlu0 %v269
  %v271 = vpop.xlane.xlu0 %270
  %v272 = vsel %vm151, %v127, 0.0
  %273 = vadd.xlane.f32.xlu0 %v272
  %v274 = vpop.xlane.xlu0 %273
  %v275 = vsel %vm151, %v128, 0.0
  %276 = vadd.xlane.f32.xlu0 %v275
  %v277 = vpop.xlane.xlu0 %276
  %v278 = vsel %vm151, %v129, 0.0
  %279 = vadd.xlane.f32.xlu0 %v278
  %v280 = vpop.xlane.xlu0 %279
  %v281 = vsel %vm151, %v130, 0.0
  %282 = vadd.xlane.f32.xlu0 %v281
  %v283 = vpop.xlane.xlu0 %282
  %v284 = vsel %vm151, %v131, 0.0
  %285 = vadd.xlane.f32.xlu0 %v284
  %v286 = vpop.xlane.xlu0 %285
  %v287 = vsel %vm151, %v132, 0.0
  %288 = vadd.xlane.f32.xlu0 %v287
  %v289 = vpop.xlane.xlu0 %288
  %v290 = vsel %vm151, %v133, 0.0
  %291 = vadd.xlane.f32.xlu0 %v290
  %v292 = vpop.xlane.xlu0 %291
  %v293 = vsel %vm151, %v134, 0.0
  %294 = vadd.xlane.f32.xlu0 %v293
  %v295 = vpop.xlane.xlu0 %294
  %v296 = vsel %vm151, %v135, 0.0
  %297 = vadd.xlane.f32.xlu0 %v296
  %v298 = vpop.xlane.xlu0 %297
  %v299 = vsel %vm151, %v136, 0.0
  %300 = vadd.xlane.f32.xlu0 %v299
  %v301 = vpop.xlane.xlu0 %300
  %v302 = vsel %vm151, %v137, 0.0
  %303 = vadd.xlane.f32.xlu0 %v302
  %v304 = vpop.xlane.xlu0 %303
  %v305 = vsel %vm151, %v138, 0.0
  %306 = vadd.xlane.f32.xlu0 %v305
  %v307 = vpop.xlane.xlu0 %306
  %v308 = vsel %vm151, %v139, 0.0
  %309 = vadd.xlane.f32.xlu0 %v308
  %v310 = vpop.xlane.xlu0 %309
  %v311 = vsel %vm151, %v140, 0.0
  %312 = vadd.xlane.f32.xlu0 %v311
  %v313 = vpop.xlane.xlu0 %312
  %v314 = vsel %vm151, %v141, 0.0
  %315 = vadd.xlane.f32.xlu0 %v314
  %v316 = vpop.xlane.xlu0 %315
  %v317 = vsel %vm151, %v142, 0.0
  %318 = vadd.xlane.f32.xlu0 %v317
  %v319 = vpop.xlane.xlu0 %318
  %v320 = vsel %vm151, %v143, 0.0
  %321 = vadd.xlane.f32.xlu0 %v320
  %v322 = vpop.xlane.xlu0 %321
  %v323 = vsel %vm151, %v144, 0.0
  %324 = vadd.xlane.f32.xlu0 %v323
  %v325 = vpop.xlane.xlu0 %324
  %v326 = vsel %vm151, %v145, 0.0
  %327 = vadd.xlane.f32.xlu0 %v326
  %v328 = vpop.xlane.xlu0 %327
  %v329 = vsel %vm151, %v146, 0.0
  %330 = vadd.xlane.f32.xlu0 %v329
  %v331 = vpop.xlane.xlu0 %330
  %v332 = vsel %vm151, %v147, 0.0
  %333 = vadd.xlane.f32.xlu0 %v332
  %v334 = vpop.xlane.xlu0 %333
  %v335 = vsel %vm151, %v148, 0.0
  %336 = vadd.xlane.f32.xlu0 %v335
  %v337 = vpop.xlane.xlu0 %336
  %v338 = vsel %vm151, %v149, 0.0
  %339 = vadd.xlane.f32.xlu0 %v338
  %v340 = vpop.xlane.xlu0 %339
  %v341 = vsel %vm151, %v150, 0.0
  %342 = vadd.xlane.f32.xlu0 %v341
  %v343 = vpop.xlane.xlu0 %342
  %v344 = vrcp.pop 32.0
  %v345 = vmul.f32 %v154, %v344
  %v346 = vmul.f32 %v157, %v344
  %v347 = vmul.f32 %v160, %v344
  %v348 = vmul.f32 %v163, %v344
  %v349 = vmul.f32 %v166, %v344
  %v350 = vmul.f32 %v169, %v344
  %v351 = vmul.f32 %v172, %v344
  %v352 = vmul.f32 %v175, %v344
  %v353 = vmul.f32 %v178, %v344
  %v354 = vmul.f32 %v181, %v344
  %v355 = vmul.f32 %v184, %v344
  %v356 = vmul.f32 %v187, %v344
  %v357 = vmul.f32 %v190, %v344
  %v358 = vmul.f32 %v193, %v344
  %v359 = vmul.f32 %v196, %v344
  %v360 = vmul.f32 %v199, %v344
  %v361 = vmul.f32 %v202, %v344
  %v362 = vmul.f32 %v205, %v344
  %v363 = vmul.f32 %v208, %v344
  %v364 = vmul.f32 %v211, %v344
  %v365 = vmul.f32 %v214, %v344
  %v366 = vmul.f32 %v217, %v344
  %v367 = vmul.f32 %v220, %v344
  %v368 = vmul.f32 %v223, %v344
  %v369 = vmul.f32 %v226, %v344
  %v370 = vmul.f32 %v229, %v344
  %v371 = vmul.f32 %v232, %v344
  %v372 = vmul.f32 %v235, %v344
  %v373 = vmul.f32 %v238, %v344
  %v374 = vmul.f32 %v241, %v344
  %v375 = vmul.f32 %v244, %v344
  %v376 = vmul.f32 %v247, %v344
  %v377 = vmul.f32 %v250, %v344
  %v378 = vmul.f32 %v253, %v344
  %v379 = vmul.f32 %v256, %v344
  %v380 = vmul.f32 %v259, %v344
  %v381 = vmul.f32 %v262, %v344
  %v382 = vmul.f32 %v265, %v344
  %v383 = vmul.f32 %v268, %v344
  %v384 = vmul.f32 %v271, %v344
  %v385 = vmul.f32 %v274, %v344
  %v386 = vmul.f32 %v277, %v344
  %v387 = vmul.f32 %v280, %v344
  %v388 = vmul.f32 %v283, %v344
  %v389 = vmul.f32 %v286, %v344
  %v390 = vmul.f32 %v289, %v344
  %v391 = vmul.f32 %v292, %v344
  %v392 = vmul.f32 %v295, %v344
  %v393 = vmul.f32 %v298, %v344
  %v394 = vmul.f32 %v301, %v344
  %v395 = vmul.f32 %v304, %v344
  %v396 = vmul.f32 %v307, %v344
  %v397 = vmul.f32 %v310, %v344
  %v398 = vmul.f32 %v313, %v344
  %v399 = vmul.f32 %v316, %v344
  %v400 = vmul.f32 %v319, %v344
  %v401 = vmul.f32 %v322, %v344
  %v402 = vmul.f32 %v325, %v344
  %v403 = vmul.f32 %v328, %v344
  %v404 = vmul.f32 %v331, %v344
  %v405 = vmul.f32 %v334, %v344
  %v406 = vmul.f32 %v337, %v344
  %v407 = vmul.f32 %v340, %v344
  %v408 = vmul.f32 %v343, %v344
  %v409 = vmul.f32 %v87, %v87
  %v410 = vmul.f32 %v88, %v88
  %v411 = vmul.f32 %v89, %v89
  %v412 = vmul.f32 %v90, %v90
  %v413 = vmul.f32 %v91, %v91
  %v414 = vmul.f32 %v92, %v92
  %v415 = vmul.f32 %v93, %v93
  %v416 = vmul.f32 %v94, %v94
  %v417 = vmul.f32 %v95, %v95
  %v418 = vmul.f32 %v96, %v96
  %v419 = vmul.f32 %v97, %v97
  %v420 = vmul.f32 %v98, %v98
  %v421 = vmul.f32 %v99, %v99
  %v422 = vmul.f32 %v100, %v100
  %v423 = vmul.f32 %v101, %v101
  %v424 = vmul.f32 %v102, %v102
  %v425 = vmul.f32 %v103, %v103
  %v426 = vmul.f32 %v104, %v104
  %v427 = vmul.f32 %v105, %v105
  %v428 = vmul.f32 %v106, %v106
  %v429 = vmul.f32 %v107, %v107
  %v430 = vmul.f32 %v108, %v108
  %v431 = vmul.f32 %v109, %v109
  %v432 = vmul.f32 %v110, %v110
  %v433 = vmul.f32 %v111, %v111
  %v434 = vmul.f32 %v112, %v112
  %v435 = vmul.f32 %v113, %v113
  %v436 = vmul.f32 %v114, %v114
  %v437 = vmul.f32 %v115, %v115
  %v438 = vmul.f32 %v116, %v116
  %v439 = vmul.f32 %v117, %v117
  %v440 = vmul.f32 %v118, %v118
  %v441 = vmul.f32 %v119, %v119
  %v442 = vmul.f32 %v120, %v120
  %v443 = vmul.f32 %v121, %v121
  %v444 = vmul.f32 %v122, %v122
  %v445 = vmul.f32 %v123, %v123
  %v446 = vmul.f32 %v124, %v124
  %v447 = vmul.f32 %v125, %v125
  %v448 = vmul.f32 %v126, %v126
  %v449 = vmul.f32 %v127, %v127
  %v450 = vmul.f32 %v128, %v128
  %v451 = vmul.f32 %v129, %v129
  %v452 = vmul.f32 %v130, %v130
  %v453 = vmul.f32 %v131, %v131
  %v454 = vmul.f32 %v132, %v132
  %v455 = vmul.f32 %v133, %v133
  %v456 = vmul.f32 %v134, %v134
  %v457 = vmul.f32 %v135, %v135
  %v458 = vmul.f32 %v136, %v136
  %v459 = vmul.f32 %v137, %v137
  %v460 = vmul.f32 %v138, %v138
  %v461 = vmul.f32 %v139, %v139
  %v462 = vmul.f32 %v140, %v140
  %v463 = vmul.f32 %v141, %v141
  %v464 = vmul.f32 %v142, %v142
  %v465 = vmul.f32 %v143, %v143
  %v466 = vmul.f32 %v144, %v144
  %v467 = vmul.f32 %v145, %v145
  %v468 = vmul.f32 %v146, %v146
  %v469 = vmul.f32 %v147, %v147
  %v470 = vmul.f32 %v148, %v148
  %v471 = vmul.f32 %v149, %v149
  %v472 = vmul.f32 %v150, %v150
  %v473 = vsel %vm151, %v409, 0.0
  %474 = vadd.xlane.f32.xlu0 %v473
  %v475 = vpop.xlane.xlu0 %474
  %v476 = vsel %vm151, %v410, 0.0
  %477 = vadd.xlane.f32.xlu0 %v476
  %v478 = vpop.xlane.xlu0 %477
  %v479 = vsel %vm151, %v411, 0.0
  %480 = vadd.xlane.f32.xlu0 %v479
  %v481 = vpop.xlane.xlu0 %480
  %v482 = vsel %vm151, %v412, 0.0
  %483 = vadd.xlane.f32.xlu0 %v482
  %v484 = vpop.xlane.xlu0 %483
  %v485 = vsel %vm151, %v413, 0.0
  %486 = vadd.xlane.f32.xlu0 %v485
  %v487 = vpop.xlane.xlu0 %486
  %v488 = vsel %vm151, %v414, 0.0
  %489 = vadd.xlane.f32.xlu0 %v488
  %v490 = vpop.xlane.xlu0 %489
  %v491 = vsel %vm151, %v415, 0.0
  %492 = vadd.xlane.f32.xlu0 %v491
  %v493 = vpop.xlane.xlu0 %492
  %v494 = vsel %vm151, %v416, 0.0
  %495 = vadd.xlane.f32.xlu0 %v494
  %v496 = vpop.xlane.xlu0 %495
  %v497 = vsel %vm151, %v417, 0.0
  %498 = vadd.xlane.f32.xlu0 %v497
  %v499 = vpop.xlane.xlu0 %498
  %v500 = vsel %vm151, %v418, 0.0
  %501 = vadd.xlane.f32.xlu0 %v500
  %v502 = vpop.xlane.xlu0 %501
  %v503 = vsel %vm151, %v419, 0.0
  %504 = vadd.xlane.f32.xlu0 %v503
  %v505 = vpop.xlane.xlu0 %504
  %v506 = vsel %vm151, %v420, 0.0
  %507 = vadd.xlane.f32.xlu0 %v506
  %v508 = vpop.xlane.xlu0 %507
  %v509 = vsel %vm151, %v421, 0.0
  %510 = vadd.xlane.f32.xlu0 %v509
  %v511 = vpop.xlane.xlu0 %510
  %v512 = vsel %vm151, %v422, 0.0
  %513 = vadd.xlane.f32.xlu0 %v512
  %v514 = vpop.xlane.xlu0 %513
  %v515 = vsel %vm151, %v423, 0.0
  %516 = vadd.xlane.f32.xlu0 %v515
  %v517 = vpop.xlane.xlu0 %516
  %v518 = vsel %vm151, %v424, 0.0
  %519 = vadd.xlane.f32.xlu0 %v518
  %v520 = vpop.xlane.xlu0 %519
  %v521 = vsel %vm151, %v425, 0.0
  %522 = vadd.xlane.f32.xlu0 %v521
  %v523 = vpop.xlane.xlu0 %522
  %v524 = vsel %vm151, %v426, 0.0
  %525 = vadd.xlane.f32.xlu0 %v524
  %v526 = vpop.xlane.xlu0 %525
  %v527 = vsel %vm151, %v427, 0.0
  %528 = vadd.xlane.f32.xlu0 %v527
  %v529 = vpop.xlane.xlu0 %528
  %v530 = vsel %vm151, %v428, 0.0
  %531 = vadd.xlane.f32.xlu0 %v530
  %v532 = vpop.xlane.xlu0 %531
  %v533 = vsel %vm151, %v429, 0.0
  %534 = vadd.xlane.f32.xlu0 %v533
  %v535 = vpop.xlane.xlu0 %534
  %v536 = vsel %vm151, %v430, 0.0
  %537 = vadd.xlane.f32.xlu0 %v536
  %v538 = vpop.xlane.xlu0 %537
  %v539 = vsel %vm151, %v431, 0.0
  %540 = vadd.xlane.f32.xlu0 %v539
  %v541 = vpop.xlane.xlu0 %540
  %v542 = vsel %vm151, %v432, 0.0
  %543 = vadd.xlane.f32.xlu0 %v542
  %v544 = vpop.xlane.xlu0 %543
  %v545 = vsel %vm151, %v433, 0.0
  %546 = vadd.xlane.f32.xlu0 %v545
  %v547 = vpop.xlane.xlu0 %546
  %v548 = vsel %vm151, %v434, 0.0
  %549 = vadd.xlane.f32.xlu0 %v548
  %v550 = vpop.xlane.xlu0 %549
  %v551 = vsel %vm151, %v435, 0.0
  %552 = vadd.xlane.f32.xlu0 %v551
  %v553 = vpop.xlane.xlu0 %552
  %v554 = vsel %vm151, %v436, 0.0
  %555 = vadd.xlane.f32.xlu0 %v554
  %v556 = vpop.xlane.xlu0 %555
  %v557 = vsel %vm151, %v437, 0.0
  %558 = vadd.xlane.f32.xlu0 %v557
  %v559 = vpop.xlane.xlu0 %558
  %v560 = vsel %vm151, %v438, 0.0
  %561 = vadd.xlane.f32.xlu0 %v560
  %v562 = vpop.xlane.xlu0 %561
  %v563 = vsel %vm151, %v439, 0.0
  %564 = vadd.xlane.f32.xlu0 %v563
  %v565 = vpop.xlane.xlu0 %564
  %v566 = vsel %vm151, %v440, 0.0
  %567 = vadd.xlane.f32.xlu0 %v566
  %v568 = vpop.xlane.xlu0 %567
  %v569 = vsel %vm151, %v441, 0.0
  %570 = vadd.xlane.f32.xlu0 %v569
  %v571 = vpop.xlane.xlu0 %570
  %v572 = vsel %vm151, %v442, 0.0
  %573 = vadd.xlane.f32.xlu0 %v572
  %v574 = vpop.xlane.xlu0 %573
  %v575 = vsel %vm151, %v443, 0.0
  %576 = vadd.xlane.f32.xlu0 %v575
  %v577 = vpop.xlane.xlu0 %576
  %v578 = vsel %vm151, %v444, 0.0
  %579 = vadd.xlane.f32.xlu0 %v578
  %v580 = vpop.xlane.xlu0 %579
  %v581 = vsel %vm151, %v445, 0.0
  %582 = vadd.xlane.f32.xlu0 %v581
  %v583 = vpop.xlane.xlu0 %582
  %v584 = vsel %vm151, %v446, 0.0
  %585 = vadd.xlane.f32.xlu0 %v584
  %v586 = vpop.xlane.xlu0 %585
  %v587 = vsel %vm151, %v447, 0.0
  %588 = vadd.xlane.f32.xlu0 %v587
  %v589 = vpop.xlane.xlu0 %588
  %v590 = vsel %vm151, %v448, 0.0
  %591 = vadd.xlane.f32.xlu0 %v590
  %v592 = vpop.xlane.xlu0 %591
  %v593 = vsel %vm151, %v449, 0.0
  %594 = vadd.xlane.f32.xlu0 %v593
  %v595 = vpop.xlane.xlu0 %594
  %v596 = vsel %vm151, %v450, 0.0
  %597 = vadd.xlane.f32.xlu0 %v596
  %v598 = vpop.xlane.xlu0 %597
  %v599 = vsel %vm151, %v451, 0.0
  %600 = vadd.xlane.f32.xlu0 %v599
  %v601 = vpop.xlane.xlu0 %600
  %v602 = vsel %vm151, %v452, 0.0
  %603 = vadd.xlane.f32.xlu0 %v602
  %v604 = vpop.xlane.xlu0 %603
  %v605 = vsel %vm151, %v453, 0.0
  %606 = vadd.xlane.f32.xlu0 %v605
  %v607 = vpop.xlane.xlu0 %606
  %v608 = vsel %vm151, %v454, 0.0
  %609 = vadd.xlane.f32.xlu0 %v608
  %v610 = vpop.xlane.xlu0 %609
  %v611 = vsel %vm151, %v455, 0.0
  %612 = vadd.xlane.f32.xlu0 %v611
  %v613 = vpop.xlane.xlu0 %612
  %v614 = vsel %vm151, %v456, 0.0
  %615 = vadd.xlane.f32.xlu0 %v614
  %v616 = vpop.xlane.xlu0 %615
  %v617 = vsel %vm151, %v457, 0.0
  %618 = vadd.xlane.f32.xlu0 %v617
  %v619 = vpop.xlane.xlu0 %618
  %v620 = vsel %vm151, %v458, 0.0
  %621 = vadd.xlane.f32.xlu0 %v620
  %v622 = vpop.xlane.xlu0 %621
  %v623 = vsel %vm151, %v459, 0.0
  %624 = vadd.xlane.f32.xlu0 %v623
  %v625 = vpop.xlane.xlu0 %624
  %v626 = vsel %vm151, %v460, 0.0
  %627 = vadd.xlane.f32.xlu0 %v626
  %v628 = vpop.xlane.xlu0 %627
  %v629 = vsel %vm151, %v461, 0.0
  %630 = vadd.xlane.f32.xlu0 %v629
  %v631 = vpop.xlane.xlu0 %630
  %v632 = vsel %vm151, %v462, 0.0
  %633 = vadd.xlane.f32.xlu0 %v632
  %v634 = vpop.xlane.xlu0 %633
  %v635 = vsel %vm151, %v463, 0.0
  %636 = vadd.xlane.f32.xlu0 %v635
  %v637 = vpop.xlane.xlu0 %636
  %v638 = vsel %vm151, %v464, 0.0
  %639 = vadd.xlane.f32.xlu0 %v638
  %v640 = vpop.xlane.xlu0 %639
  %v641 = vsel %vm151, %v465, 0.0
  %642 = vadd.xlane.f32.xlu0 %v641
  %v643 = vpop.xlane.xlu0 %642
  %v644 = vsel %vm151, %v466, 0.0
  %645 = vadd.xlane.f32.xlu0 %v644
  %v646 = vpop.xlane.xlu0 %645
  %v647 = vsel %vm151, %v467, 0.0
  %648 = vadd.xlane.f32.xlu0 %v647
  %v649 = vpop.xlane.xlu0 %648
  %v650 = vsel %vm151, %v468, 0.0
  %651 = vadd.xlane.f32.xlu0 %v650
  %v652 = vpop.xlane.xlu0 %651
  %v653 = vsel %vm151, %v469, 0.0
  %654 = vadd.xlane.f32.xlu0 %v653
  %v655 = vpop.xlane.xlu0 %654
  %v656 = vsel %vm151, %v470, 0.0
  %657 = vadd.xlane.f32.xlu0 %v656
  %v658 = vpop.xlane.xlu0 %657
  %v659 = vsel %vm151, %v471, 0.0
  %660 = vadd.xlane.f32.xlu0 %v659
  %v661 = vpop.xlane.xlu0 %660
  %v662 = vsel %vm151, %v472, 0.0
  %663 = vadd.xlane.f32.xlu0 %v662
  %v664 = vpop.xlane.xlu0 %663
  %v665 = vmul.f32 %v475, %v344
  %v666 = vmul.f32 %v478, %v344
  %v667 = vmul.f32 %v481, %v344
  %v668 = vmul.f32 %v484, %v344
  %v669 = vmul.f32 %v487, %v344
  %v670 = vmul.f32 %v490, %v344
  %v671 = vmul.f32 %v493, %v344
  %v672 = vmul.f32 %v496, %v344
  %v673 = vmul.f32 %v499, %v344
  %v674 = vmul.f32 %v502, %v344
  %v675 = vmul.f32 %v505, %v344
  %v676 = vmul.f32 %v508, %v344
  %v677 = vmul.f32 %v511, %v344
  %v678 = vmul.f32 %v514, %v344
  %v679 = vmul.f32 %v517, %v344
  %v680 = vmul.f32 %v520, %v344
  %v681 = vmul.f32 %v523, %v344
  %v682 = vmul.f32 %v526, %v344
  %v683 = vmul.f32 %v529, %v344
  %v684 = vmul.f32 %v532, %v344
  %v685 = vmul.f32 %v535, %v344
  %v686 = vmul.f32 %v538, %v344
  %v687 = vmul.f32 %v541, %v344
  %v688 = vmul.f32 %v544, %v344
  %v689 = vmul.f32 %v547, %v344
  %v690 = vmul.f32 %v550, %v344
  %v691 = vmul.f32 %v553, %v344
  %v692 = vmul.f32 %v556, %v344
  %v693 = vmul.f32 %v559, %v344
  %v694 = vmul.f32 %v562, %v344
  %v695 = vmul.f32 %v565, %v344
  %v696 = vmul.f32 %v568, %v344
  %v697 = vmul.f32 %v571, %v344
  %v698 = vmul.f32 %v574, %v344
  %v699 = vmul.f32 %v577, %v344
  %v700 = vmul.f32 %v580, %v344
  %v701 = vmul.f32 %v583, %v344
  %v702 = vmul.f32 %v586, %v344
  %v703 = vmul.f32 %v589, %v344
  %v704 = vmul.f32 %v592, %v344
  %v705 = vmul.f32 %v595, %v344
  %v706 = vmul.f32 %v598, %v344
  %v707 = vmul.f32 %v601, %v344
  %v708 = vmul.f32 %v604, %v344
  %v709 = vmul.f32 %v607, %v344
  %v710 = vmul.f32 %v610, %v344
  %v711 = vmul.f32 %v613, %v344
  %v712 = vmul.f32 %v616, %v344
  %v713 = vmul.f32 %v619, %v344
  %v714 = vmul.f32 %v622, %v344
  %v715 = vmul.f32 %v625, %v344
  %v716 = vmul.f32 %v628, %v344
  %v717 = vmul.f32 %v631, %v344
  %v718 = vmul.f32 %v634, %v344
  %v719 = vmul.f32 %v637, %v344
  %v720 = vmul.f32 %v640, %v344
  %v721 = vmul.f32 %v643, %v344
  %v722 = vmul.f32 %v646, %v344
  %v723 = vmul.f32 %v649, %v344
  %v724 = vmul.f32 %v652, %v344
  %v725 = vmul.f32 %v655, %v344
  %v726 = vmul.f32 %v658, %v344
  %v727 = vmul.f32 %v661, %v344
  %v728 = vmul.f32 %v664, %v344
  %v729 = vmul.f32 %v345, %v345
  %v730 = vmul.f32 %v346, %v346
  %v731 = vmul.f32 %v347, %v347
  %v732 = vmul.f32 %v348, %v348
  %v733 = vmul.f32 %v349, %v349
  %v734 = vmul.f32 %v350, %v350
  %v735 = vmul.f32 %v351, %v351
  %v736 = vmul.f32 %v352, %v352
  %v737 = vmul.f32 %v353, %v353
  %v738 = vmul.f32 %v354, %v354
  %v739 = vmul.f32 %v355, %v355
  %v740 = vmul.f32 %v356, %v356
  %v741 = vmul.f32 %v357, %v357
  %v742 = vmul.f32 %v358, %v358
  %v743 = vmul.f32 %v359, %v359
  %v744 = vmul.f32 %v360, %v360
  %v745 = vmul.f32 %v361, %v361
  %v746 = vmul.f32 %v362, %v362
  %v747 = vmul.f32 %v363, %v363
  %v748 = vmul.f32 %v364, %v364
  %v749 = vmul.f32 %v365, %v365
  %v750 = vmul.f32 %v366, %v366
  %v751 = vmul.f32 %v367, %v367
  %v752 = vmul.f32 %v368, %v368
  %v753 = vmul.f32 %v369, %v369
  %v754 = vmul.f32 %v370, %v370
  %v755 = vmul.f32 %v371, %v371
  %v756 = vmul.f32 %v372, %v372
  %v757 = vmul.f32 %v373, %v373
  %v758 = vmul.f32 %v374, %v374
  %v759 = vmul.f32 %v375, %v375
  %v760 = vmul.f32 %v376, %v376
  %v761 = vmul.f32 %v377, %v377
  %v762 = vmul.f32 %v378, %v378
  %v763 = vmul.f32 %v379, %v379
  %v764 = vmul.f32 %v380, %v380
  %v765 = vmul.f32 %v381, %v381
  %v766 = vmul.f32 %v382, %v382
  %v767 = vmul.f32 %v383, %v383
  %v768 = vmul.f32 %v384, %v384
  %v769 = vmul.f32 %v385, %v385
  %v770 = vmul.f32 %v386, %v386
  %v771 = vmul.f32 %v387, %v387
  %v772 = vmul.f32 %v388, %v388
  %v773 = vmul.f32 %v389, %v389
  %v774 = vmul.f32 %v390, %v390
  %v775 = vmul.f32 %v391, %v391
  %v776 = vmul.f32 %v392, %v392
  %v777 = vmul.f32 %v393, %v393
  %v778 = vmul.f32 %v394, %v394
  %v779 = vmul.f32 %v395, %v395
  %v780 = vmul.f32 %v396, %v396
  %v781 = vmul.f32 %v397, %v397
  %v782 = vmul.f32 %v398, %v398
  %v783 = vmul.f32 %v399, %v399
  %v784 = vmul.f32 %v400, %v400
  %v785 = vmul.f32 %v401, %v401
  %v786 = vmul.f32 %v402, %v402
  %v787 = vmul.f32 %v403, %v403
  %v788 = vmul.f32 %v404, %v404
  %v789 = vmul.f32 %v405, %v405
  %v790 = vmul.f32 %v406, %v406
  %v791 = vmul.f32 %v407, %v407
  %v792 = vmul.f32 %v408, %v408
  %v793 = vsub.f32 %v665, %v729
  %v794 = vsub.f32 %v666, %v730
  %v795 = vsub.f32 %v667, %v731
  %v796 = vsub.f32 %v668, %v732
  %v797 = vsub.f32 %v669, %v733
  %v798 = vsub.f32 %v670, %v734
  %v799 = vsub.f32 %v671, %v735
  %v800 = vsub.f32 %v672, %v736
  %v801 = vsub.f32 %v673, %v737
  %v802 = vsub.f32 %v674, %v738
  %v803 = vsub.f32 %v675, %v739
  %v804 = vsub.f32 %v676, %v740
  %v805 = vsub.f32 %v677, %v741
  %v806 = vsub.f32 %v678, %v742
  %v807 = vsub.f32 %v679, %v743
  %v808 = vsub.f32 %v680, %v744
  %v809 = vsub.f32 %v681, %v745
  %v810 = vsub.f32 %v682, %v746
  %v811 = vsub.f32 %v683, %v747
  %v812 = vsub.f32 %v684, %v748
  %v813 = vsub.f32 %v685, %v749
  %v814 = vsub.f32 %v686, %v750
  %v815 = vsub.f32 %v687, %v751
  %v816 = vsub.f32 %v688, %v752
  %v817 = vsub.f32 %v689, %v753
  %v818 = vsub.f32 %v690, %v754
  %v819 = vsub.f32 %v691, %v755
  %v820 = vsub.f32 %v692, %v756
  %v821 = vsub.f32 %v693, %v757
  %v822 = vsub.f32 %v694, %v758
  %v823 = vsub.f32 %v695, %v759
  %v824 = vsub.f32 %v696, %v760
  %v825 = vsub.f32 %v697, %v761
  %v826 = vsub.f32 %v698, %v762
  %v827 = vsub.f32 %v699, %v763
  %v828 = vsub.f32 %v700, %v764
  %v829 = vsub.f32 %v701, %v765
  %v830 = vsub.f32 %v702, %v766
  %v831 = vsub.f32 %v703, %v767
  %v832 = vsub.f32 %v704, %v768
  %v833 = vsub.f32 %v705, %v769
  %v834 = vsub.f32 %v706, %v770
  %v835 = vsub.f32 %v707, %v771
  %v836 = vsub.f32 %v708, %v772
  %v837 = vsub.f32 %v709, %v773
  %v838 = vsub.f32 %v710, %v774
  %v839 = vsub.f32 %v711, %v775
  %v840 = vsub.f32 %v712, %v776
  %v841 = vsub.f32 %v713, %v777
  %v842 = vsub.f32 %v714, %v778
  %v843 = vsub.f32 %v715, %v779
  %v844 = vsub.f32 %v716, %v780
  %v845 = vsub.f32 %v717, %v781
  %v846 = vsub.f32 %v718, %v782
  %v847 = vsub.f32 %v719, %v783
  %v848 = vsub.f32 %v720, %v784
  %v849 = vsub.f32 %v721, %v785
  %v850 = vsub.f32 %v722, %v786
  %v851 = vsub.f32 %v723, %v787
  %v852 = vsub.f32 %v724, %v788
  %v853 = vsub.f32 %v725, %v789
  %v854 = vsub.f32 %v726, %v790
  %v855 = vsub.f32 %v727, %v791
  %v856 = vsub.f32 %v728, %v792
  %v857 = vsub.f32 %v87, %v345
  %v858 = vsub.f32 %v88, %v346
  %v859 = vsub.f32 %v89, %v347
  %v860 = vsub.f32 %v90, %v348
  %v861 = vsub.f32 %v91, %v349
  %v862 = vsub.f32 %v92, %v350
  %v863 = vsub.f32 %v93, %v351
  %v864 = vsub.f32 %v94, %v352
  %v865 = vsub.f32 %v95, %v353
  %v866 = vsub.f32 %v96, %v354
  %v867 = vsub.f32 %v97, %v355
  %v868 = vsub.f32 %v98, %v356
  %v869 = vsub.f32 %v99, %v357
  %v870 = vsub.f32 %v100, %v358
  %v871 = vsub.f32 %v101, %v359
  %v872 = vsub.f32 %v102, %v360
  %v873 = vsub.f32 %v103, %v361
  %v874 = vsub.f32 %v104, %v362
  %v875 = vsub.f32 %v105, %v363
  %v876 = vsub.f32 %v106, %v364
  %v877 = vsub.f32 %v107, %v365
  %v878 = vsub.f32 %v108, %v366
  %v879 = vsub.f32 %v109, %v367
  %v880 = vsub.f32 %v110, %v368
  %v881 = vsub.f32 %v111, %v369
  %v882 = vsub.f32 %v112, %v370
  %v883 = vsub.f32 %v113, %v371
  %v884 = vsub.f32 %v114, %v372
  %v885 = vsub.f32 %v115, %v373
  %v886 = vsub.f32 %v116, %v374
  %v887 = vsub.f32 %v117, %v375
  %v888 = vsub.f32 %v118, %v376
  %v889 = vsub.f32 %v119, %v377
  %v890 = vsub.f32 %v120, %v378
  %v891 = vsub.f32 %v121, %v379
  %v892 = vsub.f32 %v122, %v380
  %v893 = vsub.f32 %v123, %v381
  %v894 = vsub.f32 %v124, %v382
  %v895 = vsub.f32 %v125, %v383
  %v896 = vsub.f32 %v126, %v384
  %v897 = vsub.f32 %v127, %v385
  %v898 = vsub.f32 %v128, %v386
  %v899 = vsub.f32 %v129, %v387
  %v900 = vsub.f32 %v130, %v388
  %v901 = vsub.f32 %v131, %v389
  %v902 = vsub.f32 %v132, %v390
  %v903 = vsub.f32 %v133, %v391
  %v904 = vsub.f32 %v134, %v392
  %v905 = vsub.f32 %v135, %v393
  %v906 = vsub.f32 %v136, %v394
  %v907 = vsub.f32 %v137, %v395
  %v908 = vsub.f32 %v138, %v396
  %v909 = vsub.f32 %v139, %v397
  %v910 = vsub.f32 %v140, %v398
  %v911 = vsub.f32 %v141, %v399
  %v912 = vsub.f32 %v142, %v400
  %v913 = vsub.f32 %v143, %v401
  %v914 = vsub.f32 %v144, %v402
  %v915 = vsub.f32 %v145, %v403
  %v916 = vsub.f32 %v146, %v404
  %v917 = vsub.f32 %v147, %v405
  %v918 = vsub.f32 %v148, %v406
  %v919 = vsub.f32 %v149, %v407
  %v920 = vsub.f32 %v150, %v408
  %v921 = vadd.f32 %v793, 1e-05
  %v922 = vadd.f32 %v794, 1e-05
  %v923 = vadd.f32 %v795, 1e-05
  %v924 = vadd.f32 %v796, 1e-05
  %v925 = vadd.f32 %v797, 1e-05
  %v926 = vadd.f32 %v798, 1e-05
  %v927 = vadd.f32 %v799, 1e-05
  %v928 = vadd.f32 %v800, 1e-05
  %v929 = vadd.f32 %v801, 1e-05
  %v930 = vadd.f32 %v802, 1e-05
  %v931 = vadd.f32 %v803, 1e-05
  %v932 = vadd.f32 %v804, 1e-05
  %v933 = vadd.f32 %v805, 1e-05
  %v934 = vadd.f32 %v806, 1e-05
  %v935 = vadd.f32 %v807, 1e-05
  %v936 = vadd.f32 %v808, 1e-05
  %v937 = vadd.f32 %v809, 1e-05
  %v938 = vadd.f32 %v810, 1e-05
  %v939 = vadd.f32 %v811, 1e-05
  %v940 = vadd.f32 %v812, 1e-05
  %v941 = vadd.f32 %v813, 1e-05
  %v942 = vadd.f32 %v814, 1e-05
  %v943 = vadd.f32 %v815, 1e-05
  %v944 = vadd.f32 %v816, 1e-05
  %v945 = vadd.f32 %v817, 1e-05
  %v946 = vadd.f32 %v818, 1e-05
  %v947 = vadd.f32 %v819, 1e-05
  %v948 = vadd.f32 %v820, 1e-05
  %v949 = vadd.f32 %v821, 1e-05
  %v950 = vadd.f32 %v822, 1e-05
  %v951 = vadd.f32 %v823, 1e-05
  %v952 = vadd.f32 %v824, 1e-05
  %v953 = vadd.f32 %v825, 1e-05
  %v954 = vadd.f32 %v826, 1e-05
  %v955 = vadd.f32 %v827, 1e-05
  %v956 = vadd.f32 %v828, 1e-05
  %v957 = vadd.f32 %v829, 1e-05
  %v958 = vadd.f32 %v830, 1e-05
  %v959 = vadd.f32 %v831, 1e-05
  %v960 = vadd.f32 %v832, 1e-05
  %v961 = vadd.f32 %v833, 1e-05
  %v962 = vadd.f32 %v834, 1e-05
  %v963 = vadd.f32 %v835, 1e-05
  %v964 = vadd.f32 %v836, 1e-05
  %v965 = vadd.f32 %v837, 1e-05
  %v966 = vadd.f32 %v838, 1e-05
  %v967 = vadd.f32 %v839, 1e-05
  %v968 = vadd.f32 %v840, 1e-05
  %v969 = vadd.f32 %v841, 1e-05
  %v970 = vadd.f32 %v842, 1e-05
  %v971 = vadd.f32 %v843, 1e-05
  %v972 = vadd.f32 %v844, 1e-05
  %v973 = vadd.f32 %v845, 1e-05
  %v974 = vadd.f32 %v846, 1e-05
  %v975 = vadd.f32 %v847, 1e-05
  %v976 = vadd.f32 %v848, 1e-05
  %v977 = vadd.f32 %v849, 1e-05
  %v978 = vadd.f32 %v850, 1e-05
  %v979 = vadd.f32 %v851, 1e-05
  %v980 = vadd.f32 %v852, 1e-05
  %v981 = vadd.f32 %v853, 1e-05
  %v982 = vadd.f32 %v854, 1e-05
  %v983 = vadd.f32 %v855, 1e-05
  %v984 = vadd.f32 %v856, 1e-05
  %v985 = vrsqrt.pop %v921
  %v986 = vrsqrt.pop %v922
  %v987 = vrsqrt.pop %v923
  %v988 = vrsqrt.pop %v924
  %v989 = vrsqrt.pop %v925
  %v990 = vrsqrt.pop %v926
  %v991 = vrsqrt.pop %v927
  %v992 = vrsqrt.pop %v928
  %v993 = vrsqrt.pop %v929
  %v994 = vrsqrt.pop %v930
  %v995 = vrsqrt.pop %v931
  %v996 = vrsqrt.pop %v932
  %v997 = vrsqrt.pop %v933
  %v998 = vrsqrt.pop %v934
  %v999 = vrsqrt.pop %v935
  %v1000 = vrsqrt.pop %v936
  %v1001 = vrsqrt.pop %v937
  %v1002 = vrsqrt.pop %v938
  %v1003 = vrsqrt.pop %v939
  %v1004 = vrsqrt.pop %v940
  %v1005 = vrsqrt.pop %v941
  %v1006 = vrsqrt.pop %v942
  %v1007 = vrsqrt.pop %v943
  %v1008 = vrsqrt.pop %v944
  %v1009 = vrsqrt.pop %v945
  %v1010 = vrsqrt.pop %v946
  %v1011 = vrsqrt.pop %v947
  %v1012 = vrsqrt.pop %v948
  %v1013 = vrsqrt.pop %v949
  %v1014 = vrsqrt.pop %v950
  %v1015 = vrsqrt.pop %v951
  %v1016 = vrsqrt.pop %v952
  %v1017 = vrsqrt.pop %v953
  %v1018 = vrsqrt.pop %v954
  %v1019 = vrsqrt.pop %v955
  %v1020 = vrsqrt.pop %v956
  %v1021 = vrsqrt.pop %v957
  %v1022 = vrsqrt.pop %v958
  %v1023 = vrsqrt.pop %v959
  %v1024 = vrsqrt.pop %v960
  %v1025 = vrsqrt.pop %v961
  %v1026 = vrsqrt.pop %v962
  %v1027 = vrsqrt.pop %v963
  %v1028 = vrsqrt.pop %v964
  %v1029 = vrsqrt.pop %v965
  %v1030 = vrsqrt.pop %v966
  %v1031 = vrsqrt.pop %v967
  %v1032 = vrsqrt.pop %v968
  %v1033 = vrsqrt.pop %v969
  %v1034 = vrsqrt.pop %v970
  %v1035 = vrsqrt.pop %v971
  %v1036 = vrsqrt.pop %v972
  %v1037 = vrsqrt.pop %v973
  %v1038 = vrsqrt.pop %v974
  %v1039 = vrsqrt.pop %v975
  %v1040 = vrsqrt.pop %v976
  %v1041 = vrsqrt.pop %v977
  %v1042 = vrsqrt.pop %v978
  %v1043 = vrsqrt.pop %v979
  %v1044 = vrsqrt.pop %v980
  %v1045 = vrsqrt.pop %v981
  %v1046 = vrsqrt.pop %v982
  %v1047 = vrsqrt.pop %v983
  %v1048 = vrsqrt.pop %v984
  %v1049 = vmul.f32 %v857, %v985
  %v1050 = vmul.f32 %v858, %v986
  %v1051 = vmul.f32 %v859, %v987
  %v1052 = vmul.f32 %v860, %v988
  %v1053 = vmul.f32 %v861, %v989
  %v1054 = vmul.f32 %v862, %v990
  %v1055 = vmul.f32 %v863, %v991
  %v1056 = vmul.f32 %v864, %v992
  %v1057 = vmul.f32 %v865, %v993
  %v1058 = vmul.f32 %v866, %v994
  %v1059 = vmul.f32 %v867, %v995
  %v1060 = vmul.f32 %v868, %v996
  %v1061 = vmul.f32 %v869, %v997
  %v1062 = vmul.f32 %v870, %v998
  %v1063 = vmul.f32 %v871, %v999
  %v1064 = vmul.f32 %v872, %v1000
  %v1065 = vmul.f32 %v873, %v1001
  %v1066 = vmul.f32 %v874, %v1002
  %v1067 = vmul.f32 %v875, %v1003
  %v1068 = vmul.f32 %v876, %v1004
  %v1069 = vmul.f32 %v877, %v1005
  %v1070 = vmul.f32 %v878, %v1006
  %v1071 = vmul.f32 %v879, %v1007
  %v1072 = vmul.f32 %v880, %v1008
  %v1073 = vmul.f32 %v881, %v1009
  %v1074 = vmul.f32 %v882, %v1010
  %v1075 = vmul.f32 %v883, %v1011
  %v1076 = vmul.f32 %v884, %v1012
  %v1077 = vmul.f32 %v885, %v1013
  %v1078 = vmul.f32 %v886, %v1014
  %v1079 = vmul.f32 %v887, %v1015
  %v1080 = vmul.f32 %v888, %v1016
  %v1081 = vmul.f32 %v889, %v1017
  %v1082 = vmul.f32 %v890, %v1018
  %v1083 = vmul.f32 %v891, %v1019
  %v1084 = vmul.f32 %v892, %v1020
  %v1085 = vmul.f32 %v893, %v1021
  %v1086 = vmul.f32 %v894, %v1022
  %v1087 = vmul.f32 %v895, %v1023
  %v1088 = vmul.f32 %v896, %v1024
  %v1089 = vmul.f32 %v897, %v1025
  %v1090 = vmul.f32 %v898, %v1026
  %v1091 = vmul.f32 %v899, %v1027
  %v1092 = vmul.f32 %v900, %v1028
  %v1093 = vmul.f32 %v901, %v1029
  %v1094 = vmul.f32 %v902, %v1030
  %v1095 = vmul.f32 %v903, %v1031
  %v1096 = vmul.f32 %v904, %v1032
  %v1097 = vmul.f32 %v905, %v1033
  %v1098 = vmul.f32 %v906, %v1034
  %v1099 = vmul.f32 %v907, %v1035
  %v1100 = vmul.f32 %v908, %v1036
  %v1101 = vmul.f32 %v909, %v1037
  %v1102 = vmul.f32 %v910, %v1038
  %v1103 = vmul.f32 %v911, %v1039
  %v1104 = vmul.f32 %v912, %v1040
  %v1105 = vmul.f32 %v913, %v1041
  %v1106 = vmul.f32 %v914, %v1042
  %v1107 = vmul.f32 %v915, %v1043
  %v1108 = vmul.f32 %v916, %v1044
  %v1109 = vmul.f32 %v917, %v1045
  %v1110 = vmul.f32 %v918, %v1046
  %v1111 = vmul.f32 %v919, %v1047
  %v1112 = vmul.f32 %v920, %v1048
  %v1113 = vld [vmem:[%s2] sm:$0x1]
  %v1115 = vlaneseq
  %v1116 = vshrl.u32 %v1115, 7
  %v1117 = vsub.s32 0, %v1116
  %v1118 = vrot.slane %v1113, %v1117
  %v1120 = vmul.f32 %v1049, %v1118
  %v1121 = vmul.f32 %v1050, %v1118
  %v1122 = vmul.f32 %v1051, %v1118
  %v1123 = vmul.f32 %v1052, %v1118
  %v1124 = vmul.f32 %v1053, %v1118
  %v1125 = vmul.f32 %v1054, %v1118
  %v1126 = vmul.f32 %v1055, %v1118
  %v1127 = vmul.f32 %v1056, %v1118
  %v1128 = vmul.f32 %v1057, %v1118
  %v1129 = vmul.f32 %v1058, %v1118
  %v1130 = vmul.f32 %v1059, %v1118
  %v1131 = vmul.f32 %v1060, %v1118
  %v1132 = vmul.f32 %v1061, %v1118
  %v1133 = vmul.f32 %v1062, %v1118
  %v1134 = vmul.f32 %v1063, %v1118
  %v1135 = vmul.f32 %v1064, %v1118
  %v1136 = vmul.f32 %v1065, %v1118
  %v1137 = vmul.f32 %v1066, %v1118
  %v1138 = vmul.f32 %v1067, %v1118
  %v1139 = vmul.f32 %v1068, %v1118
  %v1140 = vmul.f32 %v1069, %v1118
  %v1141 = vmul.f32 %v1070, %v1118
  %v1142 = vmul.f32 %v1071, %v1118
  %v1143 = vmul.f32 %v1072, %v1118
  %v1144 = vmul.f32 %v1073, %v1118
  %v1145 = vmul.f32 %v1074, %v1118
  %v1146 = vmul.f32 %v1075, %v1118
  %v1147 = vmul.f32 %v1076, %v1118
  %v1148 = vmul.f32 %v1077, %v1118
  %v1149 = vmul.f32 %v1078, %v1118
  %v1150 = vmul.f32 %v1079, %v1118
  %v1151 = vmul.f32 %v1080, %v1118
  %v1152 = vmul.f32 %v1081, %v1118
  %v1153 = vmul.f32 %v1082, %v1118
  %v1154 = vmul.f32 %v1083, %v1118
  %v1155 = vmul.f32 %v1084, %v1118
  %v1156 = vmul.f32 %v1085, %v1118
  %v1157 = vmul.f32 %v1086, %v1118
  %v1158 = vmul.f32 %v1087, %v1118
  %v1159 = vmul.f32 %v1088, %v1118
  %v1160 = vmul.f32 %v1089, %v1118
  %v1161 = vmul.f32 %v1090, %v1118
  %v1162 = vmul.f32 %v1091, %v1118
  %v1163 = vmul.f32 %v1092, %v1118
  %v1164 = vmul.f32 %v1093, %v1118
  %v1165 = vmul.f32 %v1094, %v1118
  %v1166 = vmul.f32 %v1095, %v1118
  %v1167 = vmul.f32 %v1096, %v1118
  %v1168 = vmul.f32 %v1097, %v1118
  %v1169 = vmul.f32 %v1098, %v1118
  %v1170 = vmul.f32 %v1099, %v1118
  %v1171 = vmul.f32 %v1100, %v1118
  %v1172 = vmul.f32 %v1101, %v1118
  %v1173 = vmul.f32 %v1102, %v1118
  %v1174 = vmul.f32 %v1103, %v1118
  %v1175 = vmul.f32 %v1104, %v1118
  %v1176 = vmul.f32 %v1105, %v1118
  %v1177 = vmul.f32 %v1106, %v1118
  %v1178 = vmul.f32 %v1107, %v1118
  %v1179 = vmul.f32 %v1108, %v1118
  %v1180 = vmul.f32 %v1109, %v1118
  %v1181 = vmul.f32 %v1110, %v1118
  %v1182 = vmul.f32 %v1111, %v1118
  %v1183 = vmul.f32 %v1112, %v1118
  %v1184 = vld [vmem:[%s3] sm:$0x1]
  %v1186 = vlaneseq
  %v1187 = vshrl.u32 %v1186, 7
  %v1188 = vsub.s32 0, %v1187
  %v1189 = vrot.slane %v1184, %v1188
  %v1191 = vadd.f32 %v1120, %v1189
  %v1192 = vadd.f32 %v1121, %v1189
  %v1193 = vadd.f32 %v1122, %v1189
  %v1194 = vadd.f32 %v1123, %v1189
  %v1195 = vadd.f32 %v1124, %v1189
  %v1196 = vadd.f32 %v1125, %v1189
  %v1197 = vadd.f32 %v1126, %v1189
  %v1198 = vadd.f32 %v1127, %v1189
  %v1199 = vadd.f32 %v1128, %v1189
  %v1200 = vadd.f32 %v1129, %v1189
  %v1201 = vadd.f32 %v1130, %v1189
  %v1202 = vadd.f32 %v1131, %v1189
  %v1203 = vadd.f32 %v1132, %v1189
  %v1204 = vadd.f32 %v1133, %v1189
  %v1205 = vadd.f32 %v1134, %v1189
  %v1206 = vadd.f32 %v1135, %v1189
  %v1207 = vadd.f32 %v1136, %v1189
  %v1208 = vadd.f32 %v1137, %v1189
  %v1209 = vadd.f32 %v1138, %v1189
  %v1210 = vadd.f32 %v1139, %v1189
  %v1211 = vadd.f32 %v1140, %v1189
  %v1212 = vadd.f32 %v1141, %v1189
  %v1213 = vadd.f32 %v1142, %v1189
  %v1214 = vadd.f32 %v1143, %v1189
  %v1215 = vadd.f32 %v1144, %v1189
  %v1216 = vadd.f32 %v1145, %v1189
  %v1217 = vadd.f32 %v1146, %v1189
  %v1218 = vadd.f32 %v1147, %v1189
  %v1219 = vadd.f32 %v1148, %v1189
  %v1220 = vadd.f32 %v1149, %v1189
  %v1221 = vadd.f32 %v1150, %v1189
  %v1222 = vadd.f32 %v1151, %v1189
  %v1223 = vadd.f32 %v1152, %v1189
  %v1224 = vadd.f32 %v1153, %v1189
  %v1225 = vadd.f32 %v1154, %v1189
  %v1226 = vadd.f32 %v1155, %v1189
  %v1227 = vadd.f32 %v1156, %v1189
  %v1228 = vadd.f32 %v1157, %v1189
  %v1229 = vadd.f32 %v1158, %v1189
  %v1230 = vadd.f32 %v1159, %v1189
  %v1231 = vadd.f32 %v1160, %v1189
  %v1232 = vadd.f32 %v1161, %v1189
  %v1233 = vadd.f32 %v1162, %v1189
  %v1234 = vadd.f32 %v1163, %v1189
  %v1235 = vadd.f32 %v1164, %v1189
  %v1236 = vadd.f32 %v1165, %v1189
  %v1237 = vadd.f32 %v1166, %v1189
  %v1238 = vadd.f32 %v1167, %v1189
  %v1239 = vadd.f32 %v1168, %v1189
  %v1240 = vadd.f32 %v1169, %v1189
  %v1241 = vadd.f32 %v1170, %v1189
  %v1242 = vadd.f32 %v1171, %v1189
  %v1243 = vadd.f32 %v1172, %v1189
  %v1244 = vadd.f32 %v1173, %v1189
  %v1245 = vadd.f32 %v1174, %v1189
  %v1246 = vadd.f32 %v1175, %v1189
  %v1247 = vadd.f32 %v1176, %v1189
  %v1248 = vadd.f32 %v1177, %v1189
  %v1249 = vadd.f32 %v1178, %v1189
  %v1250 = vadd.f32 %v1179, %v1189
  %v1251 = vadd.f32 %v1180, %v1189
  %v1252 = vadd.f32 %v1181, %v1189
  %v1253 = vadd.f32 %v1182, %v1189
  %v1254 = vadd.f32 %v1183, %v1189
  %v1255 = vadd.f32 %v23, %v1191
  %v1256 = vadd.f32 %v24, %v1192
  %v1257 = vadd.f32 %v25, %v1193
  %v1258 = vadd.f32 %v26, %v1194
  %v1259 = vadd.f32 %v27, %v1195
  %v1260 = vadd.f32 %v28, %v1196
  %v1261 = vadd.f32 %v29, %v1197
  %v1262 = vadd.f32 %v30, %v1198
  %v1263 = vadd.f32 %v31, %v1199
  %v1264 = vadd.f32 %v32, %v1200
  %v1265 = vadd.f32 %v33, %v1201
  %v1266 = vadd.f32 %v34, %v1202
  %v1267 = vadd.f32 %v35, %v1203
  %v1268 = vadd.f32 %v36, %v1204
  %v1269 = vadd.f32 %v37, %v1205
  %v1270 = vadd.f32 %v38, %v1206
  %v1271 = vadd.f32 %v39, %v1207
  %v1272 = vadd.f32 %v40, %v1208
  %v1273 = vadd.f32 %v41, %v1209
  %v1274 = vadd.f32 %v42, %v1210
  %v1275 = vadd.f32 %v43, %v1211
  %v1276 = vadd.f32 %v44, %v1212
  %v1277 = vadd.f32 %v45, %v1213
  %v1278 = vadd.f32 %v46, %v1214
  %v1279 = vadd.f32 %v47, %v1215
  %v1280 = vadd.f32 %v48, %v1216
  %v1281 = vadd.f32 %v49, %v1217
  %v1282 = vadd.f32 %v50, %v1218
  %v1283 = vadd.f32 %v51, %v1219
  %v1284 = vadd.f32 %v52, %v1220
  %v1285 = vadd.f32 %v53, %v1221
  %v1286 = vadd.f32 %v54, %v1222
  %v1287 = vadd.f32 %v55, %v1223
  %v1288 = vadd.f32 %v56, %v1224
  %v1289 = vadd.f32 %v57, %v1225
  %v1290 = vadd.f32 %v58, %v1226
  %v1291 = vadd.f32 %v59, %v1227
  %v1292 = vadd.f32 %v60, %v1228
  %v1293 = vadd.f32 %v61, %v1229
  %v1294 = vadd.f32 %v62, %v1230
  %v1295 = vadd.f32 %v63, %v1231
  %v1296 = vadd.f32 %v64, %v1232
  %v1297 = vadd.f32 %v65, %v1233
  %v1298 = vadd.f32 %v66, %v1234
  %v1299 = vadd.f32 %v67, %v1235
  %v1300 = vadd.f32 %v68, %v1236
  %v1301 = vadd.f32 %v69, %v1237
  %v1302 = vadd.f32 %v70, %v1238
  %v1303 = vadd.f32 %v71, %v1239
  %v1304 = vadd.f32 %v72, %v1240
  %v1305 = vadd.f32 %v73, %v1241
  %v1306 = vadd.f32 %v74, %v1242
  %v1307 = vadd.f32 %v75, %v1243
  %v1308 = vadd.f32 %v76, %v1244
  %v1309 = vadd.f32 %v77, %v1245
  %v1310 = vadd.f32 %v78, %v1246
  %v1311 = vadd.f32 %v79, %v1247
  %v1312 = vadd.f32 %v80, %v1248
  %v1313 = vadd.f32 %v81, %v1249
  %v1314 = vadd.f32 %v82, %v1250
  %v1315 = vadd.f32 %v83, %v1251
  %v1316 = vadd.f32 %v84, %v1252
  %v1317 = vadd.f32 %v85, %v1253
  %v1318 = vadd.f32 %v86, %v1254
  %v1319 = vld [vmem:[%s4] sm:$0xff]
  %v1320 = vld [vmem:[%s4 + $0x8] sm:$0xff]
  %v1321 = vld [vmem:[%s4 + $0x10] sm:$0xff]
  %v1322 = vld [vmem:[%s4 + $0x18] sm:$0xff]
  %v1323 = vld [vmem:[%s5] sm:$0x1]
  %v1325 = vlaneseq
  %v1326 = vshrl.u32 %v1325, 7
  %v1327 = vsub.s32 0, %v1326
  %v1328 = vrot.slane %v1323, %v1327
  %v1331 = vsel %vm151, %v1255, 0
  %v1334 = vsel %vm151, %v1256, 0
  %v1337 = vsel %vm151, %v1257, 0
  %v1340 = vsel %vm151, %v1258, 0
  %v1343 = vsel %vm151, %v1259, 0
  %v1346 = vsel %vm151, %v1260, 0
  %v1349 = vsel %vm151, %v1261, 0
  %v1352 = vsel %vm151, %v1262, 0
  %v1355 = vsel %vm151, %v1263, 0
  %v1358 = vsel %vm151, %v1264, 0
  %v1361 = vsel %vm151, %v1265, 0
  %v1364 = vsel %vm151, %v1266, 0
  %v1367 = vsel %vm151, %v1267, 0
  %v1370 = vsel %vm151, %v1268, 0
  %v1373 = vsel %vm151, %v1269, 0
  %v1376 = vsel %vm151, %v1270, 0
  %v1379 = vsel %vm151, %v1271, 0
  %v1382 = vsel %vm151, %v1272, 0
  %v1385 = vsel %vm151, %v1273, 0
  %v1388 = vsel %vm151, %v1274, 0
  %v1391 = vsel %vm151, %v1275, 0
  %v1394 = vsel %vm151, %v1276, 0
  %v1397 = vsel %vm151, %v1277, 0
  %v1400 = vsel %vm151, %v1278, 0
  %v1403 = vsel %vm151, %v1279, 0
  %v1406 = vsel %vm151, %v1280, 0
  %v1409 = vsel %vm151, %v1281, 0
  %v1412 = vsel %vm151, %v1282, 0
  %v1415 = vsel %vm151, %v1283, 0
  %v1418 = vsel %vm151, %v1284, 0
  %v1421 = vsel %vm151, %v1285, 0
  %v1424 = vsel %vm151, %v1286, 0
  %v1427 = vsel %vm151, %v1287, 0
  %v1430 = vsel %vm151, %v1288, 0
  %v1433 = vsel %vm151, %v1289, 0
  %v1436 = vsel %vm151, %v1290, 0
  %v1439 = vsel %vm151, %v1291, 0
  %v1442 = vsel %vm151, %v1292, 0
  %v1445 = vsel %vm151, %v1293, 0
  %v1448 = vsel %vm151, %v1294, 0
  %v1451 = vsel %vm151, %v1295, 0
  %v1454 = vsel %vm151, %v1296, 0
  %v1457 = vsel %vm151, %v1297, 0
  %v1460 = vsel %vm151, %v1298, 0
  %v1463 = vsel %vm151, %v1299, 0
  %v1466 = vsel %vm151, %v1300, 0
  %v1469 = vsel %vm151, %v1301, 0
  %v1472 = vsel %vm151, %v1302, 0
  %v1475 = vsel %vm151, %v1303, 0
  %v1478 = vsel %vm151, %v1304, 0
  %v1481 = vsel %vm151, %v1305, 0
  %v1484 = vsel %vm151, %v1306, 0
  %v1487 = vsel %vm151, %v1307, 0
  %v1490 = vsel %vm151, %v1308, 0
  %v1493 = vsel %vm151, %v1309, 0
  %v1496 = vsel %vm151, %v1310, 0
  %v1499 = vsel %vm151, %v1311, 0
  %v1502 = vsel %vm151, %v1312, 0
  %v1505 = vsel %vm151, %v1313, 0
  %v1508 = vsel %vm151, %v1314, 0
  %v1511 = vsel %vm151, %v1315, 0
  %v1514 = vsel %vm151, %v1316, 0
  %v1517 = vsel %vm151, %v1317, 0
  %v1520 = vsel %vm151, %v1318, 0
  %1522 = vmatprep.subr.mxu0 0.0
  %1523 = vmatpush1.msra.mxu0 0.0
  %1524 = vmatprep.subr.mxu0 0.0
  %1525 = vmatpush1.msra.mxu0 0.0
  %1526 = vmatprep.subr.mxu0 0.0
  %1527 = vmatpush1.msra.mxu0 0.0
  %1528 = vmatprep.subr.mxu0 0.0
  %1529 = vmatpush1.msra.mxu0 0.0
  %1530 = vmatprep.subr.mxu0 0.0
  %1531 = vmatpush1.msra.mxu0 0.0
  %1532 = vmatprep.subr.mxu0 0.0
  %1533 = vmatpush1.msra.mxu0 0.0
  %1534 = vmatprep.subr.mxu0 0.0
  %1535 = vmatpush1.msra.mxu0 0.0
  %1536 = vmatprep.subr.mxu0 0.0
  %1537 = vmatpush1.msra.mxu0 0.0
  %1538 = vmatprep.subr.mxu0 0.0
  %1539 = vmatpush1.msra.mxu0 0.0
  %1540 = vmatprep.subr.mxu0 0.0
  %1541 = vmatpush1.msra.mxu0 0.0
  %1542 = vmatprep.subr.mxu0 0.0
  %1543 = vmatpush1.msra.mxu0 0.0
  %1544 = vmatprep.subr.mxu0 0.0
  %1545 = vmatpush1.msra.mxu0 0.0
  %1546 = vmatprep.subr.mxu0 0.0
  %1547 = vmatpush1.msra.mxu0 %v1322
  %1548 = vmatprep.subr.mxu0 0.0
  %1549 = vmatpush1.msra.mxu0 %v1321
  %1550 = vmatprep.subr.mxu0 0.0
  %1551 = vmatpush1.msra.mxu0 %v1320
  %1552 = vmatprep.subr.mxu0 0.0
  %1553 = vmatpush1.msra.mxu0 %v1319
  %1554 = vmatprep.subr.mxu0 0.0
  %1555 = vmatpush2.msra.mxu0 0.0
  %1556 = vmatprep.subr.mxu0 0.0
  %1557 = vmatpush2.msra.mxu0 0.0
  %1558 = vmatprep.subr.mxu0 0.0
  %1559 = vmatpush2.msra.mxu0 0.0
  %1560 = vmatprep.subr.mxu0 0.0
  %1561 = vmatpush2.msra.mxu0 0.0
  %1562 = vmatprep.subr.mxu0 0.0
  %1563 = vmatpush2.msra.mxu0 0.0
  %1564 = vmatprep.subr.mxu0 0.0
  %1565 = vmatpush2.msra.mxu0 0.0
  %1566 = vmatprep.subr.mxu0 0.0
  %1567 = vmatpush2.msra.mxu0 0.0
  %1568 = vmatprep.subr.mxu0 0.0
  %1569 = vmatpush2.msra.mxu0 0.0
  %1570 = vmatprep.subr.mxu0 0.0
  %1571 = vmatpush2.msra.mxu0 0.0
  %1572 = vmatprep.subr.mxu0 0.0
  %1573 = vmatpush2.msra.mxu0 0.0
  %1574 = vmatprep.subr.mxu0 0.0
  %1575 = vmatpush2.msra.mxu0 0.0
  %1576 = vmatprep.subr.mxu0 0.0
  %1577 = vmatpush2.msra.mxu0 0.0
  %1578 = vmatprep.subr.mxu0 0.0
  %1579 = vmatpush2.msra.mxu0 0.0
  %1580 = vmatprep.subr.mxu0 0.0
  %1581 = vmatpush2.msra.mxu0 0.0
  %1582 = vmatprep.subr.mxu0 0.0
  %1583 = vmatpush2.msra.mxu0 0.0
  %1584 = vmatprep.subr.mxu0 0.0
  %1585 = vmatpush2.msra.mxu0 0.0
  %1586 = vmatprep.mubr.f32.mxu0 0.0
  %1587 = vmatmul.mubr.f32.gmra.mxu0 %v1331
  %v1588 = vpop.f32.mrf.mxu0
  %v1589 = vadd.f32 %v1328, %v1588
  %v1590 = vpop.f32.mrf.mxu0
  %1591 = vmatprep.mubr.f32.mxu0 0.0
  %1592 = vmatmul.mubr.f32.gmra.mxu0 %v1334
  %v1593 = vpop.f32.mrf.mxu0
  %v1594 = vadd.f32 %v1328, %v1593
  %v1595 = vpop.f32.mrf.mxu0
  %1596 = vmatprep.mubr.f32.mxu0 0.0
  %1597 = vmatmul.mubr.f32.gmra.mxu0 %v1337
  %v1598 = vpop.f32.mrf.mxu0
  %v1599 = vadd.f32 %v1328, %v1598
  %v1600 = vpop.f32.mrf.mxu0
  %1601 = vmatprep.mubr.f32.mxu0 0.0
  %1602 = vmatmul.mubr.f32.gmra.mxu0 %v1340
  %v1603 = vpop.f32.mrf.mxu0
  %v1604 = vadd.f32 %v1328, %v1603
  %v1605 = vpop.f32.mrf.mxu0
  %1606 = vmatprep.mubr.f32.mxu0 0.0
  %1607 = vmatmul.mubr.f32.gmra.mxu0 %v1343
  %v1608 = vpop.f32.mrf.mxu0
  %v1609 = vadd.f32 %v1328, %v1608
  %v1610 = vpop.f32.mrf.mxu0
  %1611 = vmatprep.mubr.f32.mxu0 0.0
  %1612 = vmatmul.mubr.f32.gmra.mxu0 %v1346
  %v1613 = vpop.f32.mrf.mxu0
  %v1614 = vadd.f32 %v1328, %v1613
  %v1615 = vpop.f32.mrf.mxu0
  %1616 = vmatprep.mubr.f32.mxu0 0.0
  %1617 = vmatmul.mubr.f32.gmra.mxu0 %v1349
  %v1618 = vpop.f32.mrf.mxu0
  %v1619 = vadd.f32 %v1328, %v1618
  %v1620 = vpop.f32.mrf.mxu0
  %1621 = vmatprep.mubr.f32.mxu0 0.0
  %1622 = vmatmul.mubr.f32.gmra.mxu0 %v1352
  %v1623 = vpop.f32.mrf.mxu0
  %v1624 = vadd.f32 %v1328, %v1623
  %v1625 = vpop.f32.mrf.mxu0
  %1626 = vmatprep.mubr.f32.mxu0 0.0
  %1627 = vmatmul.mubr.f32.gmra.mxu0 %v1355
  %v1628 = vpop.f32.mrf.mxu0
  %v1629 = vadd.f32 %v1328, %v1628
  %v1630 = vpop.f32.mrf.mxu0
  %1631 = vmatprep.mubr.f32.mxu0 0.0
  %1632 = vmatmul.mubr.f32.gmra.mxu0 %v1358
  %v1633 = vpop.f32.mrf.mxu0
  %v1634 = vadd.f32 %v1328, %v1633
  %v1635 = vpop.f32.mrf.mxu0
  %1636 = vmatprep.mubr.f32.mxu0 0.0
  %1637 = vmatmul.mubr.f32.gmra.mxu0 %v1361
  %v1638 = vpop.f32.mrf.mxu0
  %v1639 = vadd.f32 %v1328, %v1638
  %v1640 = vpop.f32.mrf.mxu0
  %1641 = vmatprep.mubr.f32.mxu0 0.0
  %1642 = vmatmul.mubr.f32.gmra.mxu0 %v1364
  %v1643 = vpop.f32.mrf.mxu0
  %v1644 = vadd.f32 %v1328, %v1643
  %v1645 = vpop.f32.mrf.mxu0
  %1646 = vmatprep.mubr.f32.mxu0 0.0
  %1647 = vmatmul.mubr.f32.gmra.mxu0 %v1367
  %v1648 = vpop.f32.mrf.mxu0
  %v1649 = vadd.f32 %v1328, %v1648
  %v1650 = vpop.f32.mrf.mxu0
  %1651 = vmatprep.mubr.f32.mxu0 0.0
  %1652 = vmatmul.mubr.f32.gmra.mxu0 %v1370
  %v1653 = vpop.f32.mrf.mxu0
  %v1654 = vadd.f32 %v1328, %v1653
  %v1655 = vpop.f32.mrf.mxu0
  %1656 = vmatprep.mubr.f32.mxu0 0.0
  %1657 = vmatmul.mubr.f32.gmra.mxu0 %v1373
  %v1658 = vpop.f32.mrf.mxu0
  %v1659 = vadd.f32 %v1328, %v1658
  %v1660 = vpop.f32.mrf.mxu0
  %1661 = vmatprep.mubr.f32.mxu0 0.0
  %1662 = vmatmul.mubr.f32.gmra.mxu0 %v1376
  %v1663 = vpop.f32.mrf.mxu0
  %v1664 = vadd.f32 %v1328, %v1663
  %v1665 = vpop.f32.mrf.mxu0
  %1666 = vmatprep.mubr.f32.mxu0 0.0
  %1667 = vmatmul.mubr.f32.gmra.mxu0 %v1379
  %v1668 = vpop.f32.mrf.mxu0
  %v1669 = vadd.f32 %v1328, %v1668
  %v1670 = vpop.f32.mrf.mxu0
  %1671 = vmatprep.mubr.f32.mxu0 0.0
  %1672 = vmatmul.mubr.f32.gmra.mxu0 %v1382
  %v1673 = vpop.f32.mrf.mxu0
  %v1674 = vadd.f32 %v1328, %v1673
  %v1675 = vpop.f32.mrf.mxu0
  %1676 = vmatprep.mubr.f32.mxu0 0.0
  %1677 = vmatmul.mubr.f32.gmra.mxu0 %v1385
  %v1678 = vpop.f32.mrf.mxu0
  %v1679 = vadd.f32 %v1328, %v1678
  %v1680 = vpop.f32.mrf.mxu0
  %1681 = vmatprep.mubr.f32.mxu0 0.0
  %1682 = vmatmul.mubr.f32.gmra.mxu0 %v1388
  %v1683 = vpop.f32.mrf.mxu0
  %v1684 = vadd.f32 %v1328, %v1683
  %v1685 = vpop.f32.mrf.mxu0
  %1686 = vmatprep.mubr.f32.mxu0 0.0
  %1687 = vmatmul.mubr.f32.gmra.mxu0 %v1391
  %v1688 = vpop.f32.mrf.mxu0
  %v1689 = vadd.f32 %v1328, %v1688
  %v1690 = vpop.f32.mrf.mxu0
  %1691 = vmatprep.mubr.f32.mxu0 0.0
  %1692 = vmatmul.mubr.f32.gmra.mxu0 %v1394
  %v1693 = vpop.f32.mrf.mxu0
  %v1694 = vadd.f32 %v1328, %v1693
  %v1695 = vpop.f32.mrf.mxu0
  %1696 = vmatprep.mubr.f32.mxu0 0.0
  %1697 = vmatmul.mubr.f32.gmra.mxu0 %v1397
  %v1698 = vpop.f32.mrf.mxu0
  %v1699 = vadd.f32 %v1328, %v1698
  %v1700 = vpop.f32.mrf.mxu0
  %1701 = vmatprep.mubr.f32.mxu0 0.0
  %1702 = vmatmul.mubr.f32.gmra.mxu0 %v1400
  %v1703 = vpop.f32.mrf.mxu0
  %v1704 = vadd.f32 %v1328, %v1703
  %v1705 = vpop.f32.mrf.mxu0
  %1706 = vmatprep.mubr.f32.mxu0 0.0
  %1707 = vmatmul.mubr.f32.gmra.mxu0 %v1403
  %v1708 = vpop.f32.mrf.mxu0
  %v1709 = vadd.f32 %v1328, %v1708
  %v1710 = vpop.f32.mrf.mxu0
  %1711 = vmatprep.mubr.f32.mxu0 0.0
  %1712 = vmatmul.mubr.f32.gmra.mxu0 %v1406
  %v1713 = vpop.f32.mrf.mxu0
  %v1714 = vadd.f32 %v1328, %v1713
  %v1715 = vpop.f32.mrf.mxu0
  %1716 = vmatprep.mubr.f32.mxu0 0.0
  %1717 = vmatmul.mubr.f32.gmra.mxu0 %v1409
  %v1718 = vpop.f32.mrf.mxu0
  %v1719 = vadd.f32 %v1328, %v1718
  %v1720 = vpop.f32.mrf.mxu0
  %1721 = vmatprep.mubr.f32.mxu0 0.0
  %1722 = vmatmul.mubr.f32.gmra.mxu0 %v1412
  %v1723 = vpop.f32.mrf.mxu0
  %v1724 = vadd.f32 %v1328, %v1723
  %v1725 = vpop.f32.mrf.mxu0
  %1726 = vmatprep.mubr.f32.mxu0 0.0
  %1727 = vmatmul.mubr.f32.gmra.mxu0 %v1415
  %v1728 = vpop.f32.mrf.mxu0
  %v1729 = vadd.f32 %v1328, %v1728
  %v1730 = vpop.f32.mrf.mxu0
  %1731 = vmatprep.mubr.f32.mxu0 0.0
  %1732 = vmatmul.mubr.f32.gmra.mxu0 %v1418
  %v1733 = vpop.f32.mrf.mxu0
  %v1734 = vadd.f32 %v1328, %v1733
  %v1735 = vpop.f32.mrf.mxu0
  %1736 = vmatprep.mubr.f32.mxu0 0.0
  %1737 = vmatmul.mubr.f32.gmra.mxu0 %v1421
  %v1738 = vpop.f32.mrf.mxu0
  %v1739 = vadd.f32 %v1328, %v1738
  %v1740 = vpop.f32.mrf.mxu0
  %1741 = vmatprep.mubr.f32.mxu0 0.0
  %1742 = vmatmul.mubr.f32.gmra.mxu0 %v1424
  %v1743 = vpop.f32.mrf.mxu0
  %v1744 = vadd.f32 %v1328, %v1743
  %v1745 = vpop.f32.mrf.mxu0
  %1746 = vmatprep.mubr.f32.mxu0 0.0
  %1747 = vmatmul.mubr.f32.gmra.mxu0 %v1427
  %v1748 = vpop.f32.mrf.mxu0
  %v1749 = vadd.f32 %v1328, %v1748
  %v1750 = vpop.f32.mrf.mxu0
  %1751 = vmatprep.mubr.f32.mxu0 0.0
  %1752 = vmatmul.mubr.f32.gmra.mxu0 %v1430
  %v1753 = vpop.f32.mrf.mxu0
  %v1754 = vadd.f32 %v1328, %v1753
  %v1755 = vpop.f32.mrf.mxu0
  %1756 = vmatprep.mubr.f32.mxu0 0.0
  %1757 = vmatmul.mubr.f32.gmra.mxu0 %v1433
  %v1758 = vpop.f32.mrf.mxu0
  %v1759 = vadd.f32 %v1328, %v1758
  %v1760 = vpop.f32.mrf.mxu0
  %1761 = vmatprep.mubr.f32.mxu0 0.0
  %1762 = vmatmul.mubr.f32.gmra.mxu0 %v1436
  %v1763 = vpop.f32.mrf.mxu0
  %v1764 = vadd.f32 %v1328, %v1763
  %v1765 = vpop.f32.mrf.mxu0
  %1766 = vmatprep.mubr.f32.mxu0 0.0
  %1767 = vmatmul.mubr.f32.gmra.mxu0 %v1439
  %v1768 = vpop.f32.mrf.mxu0
  %v1769 = vadd.f32 %v1328, %v1768
  %v1770 = vpop.f32.mrf.mxu0
  %1771 = vmatprep.mubr.f32.mxu0 0.0
  %1772 = vmatmul.mubr.f32.gmra.mxu0 %v1442
  %v1773 = vpop.f32.mrf.mxu0
  %v1774 = vadd.f32 %v1328, %v1773
  %v1775 = vpop.f32.mrf.mxu0
  %1776 = vmatprep.mubr.f32.mxu0 0.0
  %1777 = vmatmul.mubr.f32.gmra.mxu0 %v1445
  %v1778 = vpop.f32.mrf.mxu0
  %v1779 = vadd.f32 %v1328, %v1778
  %v1780 = vpop.f32.mrf.mxu0
  %1781 = vmatprep.mubr.f32.mxu0 0.0
  %1782 = vmatmul.mubr.f32.gmra.mxu0 %v1448
  %v1783 = vpop.f32.mrf.mxu0
  %v1784 = vadd.f32 %v1328, %v1783
  %v1785 = vpop.f32.mrf.mxu0
  %1786 = vmatprep.mubr.f32.mxu0 0.0
  %1787 = vmatmul.mubr.f32.gmra.mxu0 %v1451
  %v1788 = vpop.f32.mrf.mxu0
  %v1789 = vadd.f32 %v1328, %v1788
  %v1790 = vpop.f32.mrf.mxu0
  %1791 = vmatprep.mubr.f32.mxu0 0.0
  %1792 = vmatmul.mubr.f32.gmra.mxu0 %v1454
  %v1793 = vpop.f32.mrf.mxu0
  %v1794 = vadd.f32 %v1328, %v1793
  %v1795 = vpop.f32.mrf.mxu0
  %1796 = vmatprep.mubr.f32.mxu0 0.0
  %1797 = vmatmul.mubr.f32.gmra.mxu0 %v1457
  %v1798 = vpop.f32.mrf.mxu0
  %v1799 = vadd.f32 %v1328, %v1798
  %v1800 = vpop.f32.mrf.mxu0
  %1801 = vmatprep.mubr.f32.mxu0 0.0
  %1802 = vmatmul.mubr.f32.gmra.mxu0 %v1460
  %v1803 = vpop.f32.mrf.mxu0
  %v1804 = vadd.f32 %v1328, %v1803
  %v1805 = vpop.f32.mrf.mxu0
  %1806 = vmatprep.mubr.f32.mxu0 0.0
  %1807 = vmatmul.mubr.f32.gmra.mxu0 %v1463
  %v1808 = vpop.f32.mrf.mxu0
  %v1809 = vadd.f32 %v1328, %v1808
  %v1810 = vpop.f32.mrf.mxu0
  %1811 = vmatprep.mubr.f32.mxu0 0.0
  %1812 = vmatmul.mubr.f32.gmra.mxu0 %v1466
  %v1813 = vpop.f32.mrf.mxu0
  %v1814 = vadd.f32 %v1328, %v1813
  %v1815 = vpop.f32.mrf.mxu0
  %1816 = vmatprep.mubr.f32.mxu0 0.0
  %1817 = vmatmul.mubr.f32.gmra.mxu0 %v1469
  %v1818 = vpop.f32.mrf.mxu0
  %v1819 = vadd.f32 %v1328, %v1818
  %v1820 = vpop.f32.mrf.mxu0
  %1821 = vmatprep.mubr.f32.mxu0 0.0
  %1822 = vmatmul.mubr.f32.gmra.mxu0 %v1472
  %v1823 = vpop.f32.mrf.mxu0
  %v1824 = vadd.f32 %v1328, %v1823
  %v1825 = vpop.f32.mrf.mxu0
  %1826 = vmatprep.mubr.f32.mxu0 0.0
  %1827 = vmatmul.mubr.f32.gmra.mxu0 %v1475
  %v1828 = vpop.f32.mrf.mxu0
  %v1829 = vadd.f32 %v1328, %v1828
  %v1830 = vpop.f32.mrf.mxu0
  %1831 = vmatprep.mubr.f32.mxu0 0.0
  %1832 = vmatmul.mubr.f32.gmra.mxu0 %v1478
  %v1833 = vpop.f32.mrf.mxu0
  %v1834 = vadd.f32 %v1328, %v1833
  %v1835 = vpop.f32.mrf.mxu0
  %1836 = vmatprep.mubr.f32.mxu0 0.0
  %1837 = vmatmul.mubr.f32.gmra.mxu0 %v1481
  %v1838 = vpop.f32.mrf.mxu0
  %v1839 = vadd.f32 %v1328, %v1838
  %v1840 = vpop.f32.mrf.mxu0
  %1841 = vmatprep.mubr.f32.mxu0 0.0
  %1842 = vmatmul.mubr.f32.gmra.mxu0 %v1484
  %v1843 = vpop.f32.mrf.mxu0
  %v1844 = vadd.f32 %v1328, %v1843
  %v1845 = vpop.f32.mrf.mxu0
  %1846 = vmatprep.mubr.f32.mxu0 0.0
  %1847 = vmatmul.mubr.f32.gmra.mxu0 %v1487
  %v1848 = vpop.f32.mrf.mxu0
  %v1849 = vadd.f32 %v1328, %v1848
  %v1850 = vpop.f32.mrf.mxu0
  %1851 = vmatprep.mubr.f32.mxu0 0.0
  %1852 = vmatmul.mubr.f32.gmra.mxu0 %v1490
  %v1853 = vpop.f32.mrf.mxu0
  %v1854 = vadd.f32 %v1328, %v1853
  %v1855 = vpop.f32.mrf.mxu0
  %1856 = vmatprep.mubr.f32.mxu0 0.0
  %1857 = vmatmul.mubr.f32.gmra.mxu0 %v1493
  %v1858 = vpop.f32.mrf.mxu0
  %v1859 = vadd.f32 %v1328, %v1858
  %v1860 = vpop.f32.mrf.mxu0
  %1861 = vmatprep.mubr.f32.mxu0 0.0
  %1862 = vmatmul.mubr.f32.gmra.mxu0 %v1496
  %v1863 = vpop.f32.mrf.mxu0
  %v1864 = vadd.f32 %v1328, %v1863
  %v1865 = vpop.f32.mrf.mxu0
  %1866 = vmatprep.mubr.f32.mxu0 0.0
  %1867 = vmatmul.mubr.f32.gmra.mxu0 %v1499
  %v1868 = vpop.f32.mrf.mxu0
  %v1869 = vadd.f32 %v1328, %v1868
  %v1870 = vpop.f32.mrf.mxu0
  %1871 = vmatprep.mubr.f32.mxu0 0.0
  %1872 = vmatmul.mubr.f32.gmra.mxu0 %v1502
  %v1873 = vpop.f32.mrf.mxu0
  %v1874 = vadd.f32 %v1328, %v1873
  %v1875 = vpop.f32.mrf.mxu0
  %1876 = vmatprep.mubr.f32.mxu0 0.0
  %1877 = vmatmul.mubr.f32.gmra.mxu0 %v1505
  %v1878 = vpop.f32.mrf.mxu0
  %v1879 = vadd.f32 %v1328, %v1878
  %v1880 = vpop.f32.mrf.mxu0
  %1881 = vmatprep.mubr.f32.mxu0 0.0
  %1882 = vmatmul.mubr.f32.gmra.mxu0 %v1508
  %v1883 = vpop.f32.mrf.mxu0
  %v1884 = vadd.f32 %v1328, %v1883
  %v1885 = vpop.f32.mrf.mxu0
  %1886 = vmatprep.mubr.f32.mxu0 0.0
  %1887 = vmatmul.mubr.f32.gmra.mxu0 %v1511
  %v1888 = vpop.f32.mrf.mxu0
  %v1889 = vadd.f32 %v1328, %v1888
  %v1890 = vpop.f32.mrf.mxu0
  %1891 = vmatprep.mubr.f32.mxu0 0.0
  %1892 = vmatmul.mubr.f32.gmra.mxu0 %v1514
  %v1893 = vpop.f32.mrf.mxu0
  %v1894 = vadd.f32 %v1328, %v1893
  %v1895 = vpop.f32.mrf.mxu0
  %1896 = vmatprep.mubr.f32.mxu0 0.0
  %1897 = vmatmul.mubr.f32.gmra.mxu0 %v1517
  %v1898 = vpop.f32.mrf.mxu0
  %v1899 = vadd.f32 %v1328, %v1898
  %v1900 = vpop.f32.mrf.mxu0
  %1901 = vmatprep.mubr.f32.mxu0 0.0
  %1902 = vmatmul.mubr.f32.gmra.mxu0 %v1520
  %v1903 = vpop.f32.mrf.mxu0
  %v1904 = vadd.f32 %v1328, %v1903
  %v1905 = vpop.f32.mrf.mxu0
  %1906 = vdwg.mxu0
  %1907 = vst.msk [vmem:[%s6] sm:$0xff] %vm151, %v1589
  %1908 = vst.msk [vmem:[%s6 + $0x8] sm:$0xff] %vm151, %v1594
  %1909 = vst.msk [vmem:[%s6 + $0x10] sm:$0xff] %vm151, %v1599
  %1910 = vst.msk [vmem:[%s6 + $0x18] sm:$0xff] %vm151, %v1604
  %1911 = vst.msk [vmem:[%s6 + $0x20] sm:$0xff] %vm151, %v1609
  %1912 = vst.msk [vmem:[%s6 + $0x28] sm:$0xff] %vm151, %v1614
  %1913 = vst.msk [vmem:[%s6 + $0x30] sm:$0xff] %vm151, %v1619
  %1914 = vst.msk [vmem:[%s6 + $0x38] sm:$0xff] %vm151, %v1624
  %1915 = vst.msk [vmem:[%s6 + $0x40] sm:$0xff] %vm151, %v1629
  %1916 = vst.msk [vmem:[%s6 + $0x48] sm:$0xff] %vm151, %v1634
  %1917 = vst.msk [vmem:[%s6 + $0x50] sm:$0xff] %vm151, %v1639
  %1918 = vst.msk [vmem:[%s6 + $0x58] sm:$0xff] %vm151, %v1644
  %1919 = vst.msk [vmem:[%s6 + $0x60] sm:$0xff] %vm151, %v1649
  %1920 = vst.msk [vmem:[%s6 + $0x68] sm:$0xff] %vm151, %v1654
  %1921 = vst.msk [vmem:[%s6 + $0x70] sm:$0xff] %vm151, %v1659
  %1922 = vst.msk [vmem:[%s6 + $0x78] sm:$0xff] %vm151, %v1664
  %1923 = vst.msk [vmem:[%s6 + $0x80] sm:$0xff] %vm151, %v1669
  %1924 = vst.msk [vmem:[%s6 + $0x88] sm:$0xff] %vm151, %v1674
  %1925 = vst.msk [vmem:[%s6 + $0x90] sm:$0xff] %vm151, %v1679
  %1926 = vst.msk [vmem:[%s6 + $0x98] sm:$0xff] %vm151, %v1684
  %1927 = vst.msk [vmem:[%s6 + $0xa0] sm:$0xff] %vm151, %v1689
  %1928 = vst.msk [vmem:[%s6 + $0xa8] sm:$0xff] %vm151, %v1694
  %1929 = vst.msk [vmem:[%s6 + $0xb0] sm:$0xff] %vm151, %v1699
  %1930 = vst.msk [vmem:[%s6 + $0xb8] sm:$0xff] %vm151, %v1704
  %1931 = vst.msk [vmem:[%s6 + $0xc0] sm:$0xff] %vm151, %v1709
  %1932 = vst.msk [vmem:[%s6 + $0xc8] sm:$0xff] %vm151, %v1714
  %1933 = vst.msk [vmem:[%s6 + $0xd0] sm:$0xff] %vm151, %v1719
  %1934 = vst.msk [vmem:[%s6 + $0xd8] sm:$0xff] %vm151, %v1724
  %1935 = vst.msk [vmem:[%s6 + $0xe0] sm:$0xff] %vm151, %v1729
  %1936 = vst.msk [vmem:[%s6 + $0xe8] sm:$0xff] %vm151, %v1734
  %1937 = vst.msk [vmem:[%s6 + $0xf0] sm:$0xff] %vm151, %v1739
  %1938 = vst.msk [vmem:[%s6 + $0xf8] sm:$0xff] %vm151, %v1744
  %1939 = vst.msk [vmem:[%s6 + $0x100] sm:$0xff] %vm151, %v1749
  %1940 = vst.msk [vmem:[%s6 + $0x108] sm:$0xff] %vm151, %v1754
  %1941 = vst.msk [vmem:[%s6 + $0x110] sm:$0xff] %vm151, %v1759
  %1942 = vst.msk [vmem:[%s6 + $0x118] sm:$0xff] %vm151, %v1764
  %1943 = vst.msk [vmem:[%s6 + $0x120] sm:$0xff] %vm151, %v1769
  %1944 = vst.msk [vmem:[%s6 + $0x128] sm:$0xff] %vm151, %v1774
  %1945 = vst.msk [vmem:[%s6 + $0x130] sm:$0xff] %vm151, %v1779
  %1946 = vst.msk [vmem:[%s6 + $0x138] sm:$0xff] %vm151, %v1784
  %1947 = vst.msk [vmem:[%s6 + $0x140] sm:$0xff] %vm151, %v1789
  %1948 = vst.msk [vmem:[%s6 + $0x148] sm:$0xff] %vm151, %v1794
  %1949 = vst.msk [vmem:[%s6 + $0x150] sm:$0xff] %vm151, %v1799
  %1950 = vst.msk [vmem:[%s6 + $0x158] sm:$0xff] %vm151, %v1804
  %1951 = vst.msk [vmem:[%s6 + $0x160] sm:$0xff] %vm151, %v1809
  %1952 = vst.msk [vmem:[%s6 + $0x168] sm:$0xff] %vm151, %v1814
  %1953 = vst.msk [vmem:[%s6 + $0x170] sm:$0xff] %vm151, %v1819
  %1954 = vst.msk [vmem:[%s6 + $0x178] sm:$0xff] %vm151, %v1824
  %1955 = vst.msk [vmem:[%s6 + $0x180] sm:$0xff] %vm151, %v1829
  %1956 = vst.msk [vmem:[%s6 + $0x188] sm:$0xff] %vm151, %v1834
  %1957 = vst.msk [vmem:[%s6 + $0x190] sm:$0xff] %vm151, %v1839
  %1958 = vst.msk [vmem:[%s6 + $0x198] sm:$0xff] %vm151, %v1844
  %1959 = vst.msk [vmem:[%s6 + $0x1a0] sm:$0xff] %vm151, %v1849
  %1960 = vst.msk [vmem:[%s6 + $0x1a8] sm:$0xff] %vm151, %v1854
  %1961 = vst.msk [vmem:[%s6 + $0x1b0] sm:$0xff] %vm151, %v1859
  %1962 = vst.msk [vmem:[%s6 + $0x1b8] sm:$0xff] %vm151, %v1864
  %1963 = vst.msk [vmem:[%s6 + $0x1c0] sm:$0xff] %vm151, %v1869
  %1964 = vst.msk [vmem:[%s6 + $0x1c8] sm:$0xff] %vm151, %v1874
  %1965 = vst.msk [vmem:[%s6 + $0x1d0] sm:$0xff] %vm151, %v1879
  %1966 = vst.msk [vmem:[%s6 + $0x1d8] sm:$0xff] %vm151, %v1884
  %1967 = vst.msk [vmem:[%s6 + $0x1e0] sm:$0xff] %vm151, %v1889
  %1968 = vst.msk [vmem:[%s6 + $0x1e8] sm:$0xff] %vm151, %v1894
  %1969 = vst.msk [vmem:[%s6 + $0x1f0] sm:$0xff] %vm151, %v1899
  %1970 = vst.msk [vmem:[%s6 + $0x1f8] sm:$0xff] %vm151, %v1904
  // Predicated region
  $region26: #{_lambda_.3} parent=0 // pred_check
    _
  $region27: #{_lambda_.3} parent=0 // pred_check_branch
    %1972 = sbr.rel (0) target = $region29
  $region28: #{_lambda_.3} parent=0 // pred_region
    _
  $region29: #{_lambda_.3} parent=0 // pred_fallthru
    _
  // Predicated region
  $region30: #{_lambda_.3} parent=0 // pred_check
    _
  $region31: #{_lambda_.3} parent=0 // pred_check_branch
    %1974 = sbr.rel (0) target = $region33
  $region32: #{_lambda_.3} parent=0 // pred_region
    _
  $region33: #{_lambda_.3} parent=0 // pred_fallthru
    _

</llo_original>
